<compile_context>
chip_gen: v6e
topology: v6e:2x2x1
jax: 0.10.0
libtpu: 0.0.40
codegen_flags: <defaults>
</compile_context>

<pallas_src>
import numpy as np
import jax
import jax.numpy as jnp
from jax.experimental import pallas as pl
from jax.experimental.pallas import tpu as pltpu

# ----------------------------- configuration ---------------------------------
B = 2                 # batch
V = 8                 # num_channels / num_variates
L = 16                # input_len (lookback)
P = 8                 # output_len (pred length)
D = 32                # d_model
NUM_LAYERS = 2
H = 4                 # num_heads
DIM_HEAD = D // H     # 8
NTOK = 1              # num_tokens_per_variate
NUM_MEM = 4           # lucidrains default num_mem_tokens
N_REAL = NUM_MEM + V * NTOK     # real tokens per batch = 12
NP_TOK = 16                     # padded tokens per batch (8-sublane aligned)
BN = B * NP_TOK                 # total (padded) tokens = 32
FF_INNER = int(D * 4 * 2 / 3)   # GEGLU logical inner dim = 85
FFP = 128                       # lane-aligned padded GEGLU inner dim
EPS = 1e-5
NEG_INF = -1e30

HD = H * DIM_HEAD               # 32

# ---- packed "misc" buffer row layout (width = D = 32 lanes) ----
M_BIAS = 0      # 32 rows : block-diag attention bias (pad keys masked)
M_WIN = 32      # 16 rows : mlp_in weight (L, D)
M_MEM = 48      # 8  rows : mem tokens (4 real + 4 zero pad)
M_WPRED = 56    # 32 rows : pred-head weight (D, P) in lanes 0:P
M_GAM = 88      # 16 rows : RevIN gamma, tiled to B*V rows, bcast over lanes
M_BET = 104     # 16 rows : RevIN beta, tiled
M_RSCALE = 120  # 16 rows : 1 / clamped_gamma, tiled
M_RSHIFT = 136  # 16 rows : -beta / clamped_gamma, tiled
M_BIN = 152     # 1  row  : mlp_in bias
M_LNG = 153     # 1  row  : mlp_in LN gamma
M_LNB = 154     # 1  row  : mlp_in LN beta
M_BPRED = 155   # 1  row  : pred-head bias (lanes 0:P)
MROWS = 160

# ---- packed per-layer buffer row layout (width = 2*FFP = 256 lanes) ----
# rows 0:32    cols 0:128   : w_qkvg  (q*scale | k | v | gate-expanded)
# rows 0:32    cols 128:160 : w_o
# rows 32:64   cols 0:256   : GEGLU w1 (padded 85->128 per half)
# rows 64:192  cols 0:32    : GEGLU w2 (padded rows)
# row  192                  : GEGLU b1 (padded)
# rows 193..197 cols 0:32   : ln1_g, ln1_b, ln2_g, ln2_b, ff_b2
LROWS = 200


# ----------------------------- in-kernel helpers ------------------------------
def _layernorm(x, g, b):
    mu = jnp.mean(x, axis=-1, keepdims=True)
    xc = x - mu
    var = jnp.mean(xc * xc, axis=-1, keepdims=True)
    return xc * jax.lax.rsqrt(var + EPS) * g + b


def _sigmoid(x):
    return 1.0 / (1.0 + jnp.exp(-x))


def _erf(x):
    # Abramowitz & Stegun 7.1.26 rational approximation (|err| < 1.5e-7).
    a1, a2, a3, a4, a5 = (0.254829592, -0.284496736, 1.421413741,
                          -1.453152027, 1.061405429)
    pcoef = 0.3275911
    s = jnp.where(x >= 0.0, 1.0, -1.0)
    z = jnp.abs(x)
    t = 1.0 / (1.0 + pcoef * z)
    poly = ((((a5 * t + a4) * t + a3) * t + a2) * t + a1) * t
    return s * (1.0 - poly * jnp.exp(-z * z))


def _gelu_exact(x):
    # matches torch.nn.functional.gelu (erf form) to ~1e-7
    return 0.5 * x * (1.0 + _erf(x * 0.7071067811865476))


# ----------------------------- fused forward kernel ---------------------------
def _itransformer_kernel(x_ref, misc_ref, lay_ref, y_ref):
    x = x_ref[...]                                        # (B*V, L)

    # ---- RevIN forward (per-variate stats over the lookback window) ----
    mean = jnp.mean(x, axis=-1, keepdims=True)            # (B*V, 1)
    xc = x - mean
    var = jnp.mean(xc * xc, axis=-1, keepdims=True)       # population var
    xn = xc * jax.lax.rsqrt(jnp.maximum(var, EPS))        # (B*V, L)

    # RevIN affine — gamma/beta pre-tiled to B*V rows and broadcast over lanes.
    xa = xn * misc_ref[M_GAM:M_GAM + B * V, 0:L] + misc_ref[M_BET:M_BET + B * V, 0:L]

    # ---- mlp_in (Linear + LayerNorm), all B*V rows in one matmul ----
    h = jnp.dot(xa, misc_ref[M_WIN:M_WIN + L, :],
                preferred_element_type=jnp.float32) + misc_ref[M_BIN:M_BIN + 1, :]
    h = _layernorm(h, misc_ref[M_LNG:M_LNG + 1, :], misc_ref[M_LNB:M_LNB + 1, :])

    # ---- token assembly (aligned 8-row blocks):
    #   per-batch block of 16 rows = [variate 0:8 | mem 8:12 | zero pad 12:16]
    mem8 = misc_ref[M_MEM:M_MEM + 8, :]                    # 4 mem + 4 zero rows
    tok = jnp.concatenate([h[0:V, :], mem8, h[V:2 * V, :], mem8], axis=0)  # (BN, D)

    # Precomputed block-diagonal bias: same-batch keys only, pad keys masked out.
    attn_bias = misc_ref[M_BIAS:M_BIAS + BN, :]            # (BN, BN) f32

    for l in range(NUM_LAYERS):
        base = l * LROWS

        # ---- attention: merged qkv + expanded per-head gate projection ----
        w_qkvg = lay_ref[base:base + D, 0:4 * HD]          # (D, 128)
        w_o = lay_ref[base:base + D, 4 * HD:4 * HD + D]    # (HD, D) = (32, 32)
        qkvg = jnp.dot(tok, w_qkvg, preferred_element_type=jnp.float32)  # (BN, 128)
        gates = _sigmoid(qkvg[:, 3 * HD:4 * HD])           # (BN, 32) head gates, dh-wide

        outs = []
        for hh in range(H):
            q = qkvg[:, hh * DIM_HEAD:(hh + 1) * DIM_HEAD]          # scale folded in
            k = qkvg[:, HD + hh * DIM_HEAD:HD + (hh + 1) * DIM_HEAD]
            v = qkvg[:, 2 * HD + hh * DIM_HEAD:2 * HD + (hh + 1) * DIM_HEAD]
            s = jax.lax.dot_general(q, k, (((1,), (1,)), ((), ())),
                                    preferred_element_type=jnp.float32) + attn_bias
            m = jnp.max(s, axis=-1, keepdims=True)
            p = jnp.exp(s - m)
            denom = jnp.sum(p, axis=-1, keepdims=True)
            p = p * pl.reciprocal(denom, approx=True)
            outs.append(jnp.dot(p, v, preferred_element_type=jnp.float32))  # (BN, dh)

        o_all = jnp.concatenate(outs, axis=-1) * gates     # (BN, 32), one aligned mul
        attn_out = jnp.dot(o_all, w_o, preferred_element_type=jnp.float32)  # (BN, D)

        tok = _layernorm(tok + attn_out,
                         lay_ref[base + 193:base + 194, 0:D],
                         lay_ref[base + 194:base + 195, 0:D])        # post-norm

        # ---- GEGLU feedforward (inner dim zero-padded 85 -> 128, exact) ----
        ffh = jnp.dot(tok, lay_ref[base + 32:base + 64, :],
                      preferred_element_type=jnp.float32) \
            + lay_ref[base + 192:base + 193, :]                       # (BN, 2*FFP)
        a = ffh[:, :FFP]
        g = ffh[:, FFP:]
        inner = a * _gelu_exact(g)                                    # (BN, FFP)
        ff_out = jnp.dot(inner, lay_ref[base + 64:base + 192, 0:D],
                         preferred_element_type=jnp.float32) \
               + lay_ref[base + 197:base + 198, 0:D]                  # (BN, D)

        tok = _layernorm(tok + ff_out,
                         lay_ref[base + 195:base + 196, 0:D],
                         lay_ref[base + 196:base + 197, 0:D])         # post-norm

    # ---- drop mem/pad tokens (aligned 8-row slices), RevIN reverse, pred head ----
    # NOTE: forward clamps var before rsqrt but reverse uses raw sqrt(var); this
    # asymmetry matches the reference lucidrains RevIN exactly.
    hv = jnp.concatenate([tok[0:V, :], tok[NP_TOK:NP_TOK + V, :]], axis=0)  # (B*V, D)
    hv = hv * misc_ref[M_RSCALE:M_RSCALE + B * V, :] \
            + misc_ref[M_RSHIFT:M_RSHIFT + B * V, :]
    hv = hv * jnp.sqrt(var) + mean
    pred = jnp.dot(hv, misc_ref[M_WPRED:M_WPRED + D, 0:P],
                   preferred_element_type=jnp.float32) \
         + misc_ref[M_BPRED:M_BPRED + 1, 0:P]
    y_ref[...] = pred                                                 # (B*V, P)


# ----------------------------- parameter init & packing ------------------------
def init_params(key):
    keys = iter(jax.random.split(key, 32))

    def uniform(shape, bound):
        return np.asarray(jax.random.uniform(next(keys), shape, jnp.float32,
                                             -bound, bound))

    def linear_init(fan_in, fan_out, bias=True):
        bound = 1.0 / float(np.sqrt(fan_in))
        w = uniform((fan_in, fan_out), bound)
        b = uniform((fan_out,), bound) if bias else None
        return w, b

    # ---- raw parameters (torch nn.Linear-style init) ----
    gamma = np.ones((V, 1), np.float32)          # RevIN affine
    beta = np.zeros((V, 1), np.float32)
    w_in, b_in = linear_init(L, D * NTOK)
    mem = np.asarray(jax.random.normal(next(keys), (NUM_MEM, D), jnp.float32))
    w_pred, b_pred = linear_init(D * NTOK, P)

    # ---- misc packed buffer (MROWS x D) ----
    misc = np.zeros((MROWS, D), np.float32)
    r = np.arange(BN)[:, None]
    c = np.arange(BN)[None, :]
    valid = ((r // NP_TOK) == (c // NP_TOK)) & ((c % NP_TOK) < N_REAL)
    misc[M_BIAS:M_BIAS + BN, :BN] = np.where(valid, 0.0, NEG_INF).astype(np.float32)
    misc[M_WIN:M_WIN + L, :] = w_in
    misc[M_MEM:M_MEM + NUM_MEM, :] = mem              # rows 4..7 stay zero (pad tokens)
    misc[M_WPRED:M_WPRED + D, :P] = w_pred
    misc[M_GAM:M_GAM + B * V, :] = np.tile(gamma, (B, 1))      # bcast over lanes
    misc[M_BET:M_BET + B * V, :] = np.tile(beta, (B, 1))
    clamped = np.sign(gamma) * np.maximum(np.abs(gamma), EPS)  # (gamma==0 -> inf, as in ref)
    inv_cg = np.tile(1.0 / clamped, (B, 1))
    misc[M_RSCALE:M_RSCALE + B * V, :] = inv_cg
    misc[M_RSHIFT:M_RSHIFT + B * V, :] = -np.tile(beta, (B, 1)) * inv_cg
    misc[M_BIN, :] = b_in
    misc[M_LNG, :] = 1.0       # mlp_in LayerNorm gamma
    misc[M_LNB, :] = 0.0       # mlp_in LayerNorm beta
    misc[M_BPRED, :P] = b_pred

    # ---- per-layer packed buffer (NUM_LAYERS*LROWS x 2*FFP) ----
    layers = np.zeros((NUM_LAYERS * LROWS, 2 * FFP), np.float32)
    scale = DIM_HEAD ** -0.5
    for l in range(NUM_LAYERS):
        base = l * LROWS
        w_qkv, _ = linear_init(D, 3 * HD, bias=False)
        w_g, _ = linear_init(D, H, bias=False)
        w_o, _ = linear_init(HD, D, bias=False)
        # fold softmax scale into q columns; expand gate cols to dh lanes per head
        layers[base:base + D, 0:HD] = w_qkv[:, 0:HD] * scale
        layers[base:base + D, HD:3 * HD] = w_qkv[:, HD:3 * HD]
        layers[base:base + D, 3 * HD:4 * HD] = np.repeat(w_g, DIM_HEAD, axis=1)
        layers[base:base + D, 4 * HD:4 * HD + D] = w_o

        w1, b1 = linear_init(D, 2 * FF_INNER)        # (D, 170), (170,)
        w2, b2 = linear_init(FF_INNER, D)            # (85, D),  (D,)
        # zero-pad GEGLU inner dim 85 -> 128 (exact: padded cols/rows/bias are zero)
        layers[base + 32:base + 64, :FF_INNER] = w1[:, :FF_INNER]
        layers[base + 32:base + 64, FFP:FFP + FF_INNER] = w1[:, FF_INNER:]
        layers[base + 64:base + 64 + FF_INNER, 0:D] = w2
        layers[base + 192, :FF_INNER] = b1[:FF_INNER]
        layers[base + 192, FFP:FFP + FF_INNER] = b1[FF_INNER:]
        layers[base + 193, 0:D] = 1.0   # ln1 gamma
        layers[base + 194, 0:D] = 0.0   # ln1 beta
        layers[base + 195, 0:D] = 1.0   # ln2 gamma
        layers[base + 196, 0:D] = 0.0   # ln2 beta
        layers[base + 197, 0:D] = b2

    return {"misc": jnp.asarray(misc), "layers": jnp.asarray(layers)}


# ----------------------------- forward pass ----------------------------------
def itransformer_forward(params, x2d):
    # Single grid-less pallas_call: 3 input DMAs (x, misc, layers), everything
    # resident in VMEM (<0.5 MB).
    return pl.pallas_call(
        _itransformer_kernel,
        out_shape=jax.ShapeDtypeStruct((B * V, P), jnp.float32),
    )(x2d, params["misc"], params["layers"])


def model_forward(params, x, y):
    # x: (B, V, L)   y: (B, V, P)
    # Model does x.transpose(-1,-2) -> (B, L, V); iTransformer rearranges
    # 'b n v -> b v n' -> (B, V, L); the two cancel, so work directly on (B, V, L).
    # The same cancellation on the output side keeps y_hat as (B, V, P).
    Bx, Vx, Lx = x.shape
    x2d = x.astype(jnp.float32).reshape(Bx * Vx, Lx)
    y_hat = itransformer_forward(params, x2d).reshape(Bx, Vx, P)

    yf = y.astype(jnp.float32)
    predloss = jnp.mean(jnp.abs(y_hat - yf), axis=-1)     # (B, V)
    recloss = jnp.zeros((Bx, Vx), jnp.float32)            # l1(0, 0).mean(-1)
    normloss = jnp.zeros_like(predloss)
    return {"y_hat": y_hat, "predloss": predloss, "recloss": recloss,
            "normloss": normloss}


# ----------------------------- driver -----------------------------------------
if __name__ == "__main__":
    root = jax.random.PRNGKey(0)
    kx, ky, kp = jax.random.split(root, 3)
    x = jax.random.normal(kx, (B, V, L), jnp.float32)   # (batch, channels, input_len)
    y = jax.random.normal(ky, (B, V, P), jnp.float32)   # (batch, channels, output_len)
    params = init_params(kp)

    out = jax.jit(model_forward)(params, x, y)
    out = jax.block_until_ready(out)

    assert out["y_hat"].shape == (B, V, P)
    assert out["predloss"].shape == (B, V)
    assert out["recloss"].shape == (B, V)
    assert out["normloss"].shape == (B, V)
    assert bool(jnp.all(jnp.isfinite(out["y_hat"])))
    print("KERNEL_OK")
</pallas_src>

<mosaic_0001>
module attributes {stable_mosaic.version = 11 : i64} {
  func.func @_itransformer_kernel(%arg0: memref<16x16xf32, #tpu.memory_space<vmem>>, %arg1: memref<160x32xf32, #tpu.memory_space<vmem>>, %arg2: memref<400x256xf32, #tpu.memory_space<vmem>>, %arg3: memref<16x8xf32, #tpu.memory_space<vmem>>) attributes {dimension_semantics = [], scalar_prefetch = 0 : i64, scratch_operands = 0 : i64, tpu.core_type = #tpu.core_type<tc>} {
    %c0 = arith.constant 0 : index
    %c0_0 = arith.constant 0 : index
    %0 = vector.load %arg0[%c0, %c0_0] : memref<16x16xf32, #tpu.memory_space<vmem>>, vector<16x16xf32>
    %cst = arith.constant dense<0.000000e+00> : vector<16xf32>
    %1 = vector.multi_reduction <add>, %0, %cst [1] : vector<16x16xf32> to vector<16xf32>
    %2 = vector.shape_cast %1 : vector<16xf32> to vector<16x1xf32>
    %cst_1 = arith.constant 1.600000e+01 : f32
    %3 = vector.broadcast %cst_1 : f32 to vector<16x1xf32>
    %4 = arith.divf %2, %3 : vector<16x1xf32>
    %5 = vector.broadcast %4 : vector<16x1xf32> to vector<16x16xf32>
    %6 = arith.subf %0, %5 : vector<16x16xf32>
    %7 = arith.mulf %6, %6 : vector<16x16xf32>
    %cst_2 = arith.constant dense<0.000000e+00> : vector<16xf32>
    %8 = vector.multi_reduction <add>, %7, %cst_2 [1] : vector<16x16xf32> to vector<16xf32>
    %9 = vector.shape_cast %8 : vector<16xf32> to vector<16x1xf32>
    %cst_3 = arith.constant 1.600000e+01 : f32
    %10 = vector.broadcast %cst_3 : f32 to vector<16x1xf32>
    %11 = arith.divf %9, %10 : vector<16x1xf32>
    %cst_4 = arith.constant 9.99999974E-6 : f32
    %12 = vector.broadcast %cst_4 : f32 to vector<16x1xf32>
    %13 = arith.maximumf %11, %12 : vector<16x1xf32>
    %14 = math.rsqrt %13 : vector<16x1xf32>
    %15 = vector.broadcast %14 : vector<16x1xf32> to vector<16x16xf32>
    %16 = arith.mulf %6, %15 : vector<16x16xf32>
    %c88 = arith.constant 88 : index
    %c0_5 = arith.constant 0 : index
    %17 = vector.load %arg1[%c88, %c0_5] : memref<160x32xf32, #tpu.memory_space<vmem>>, vector<16x16xf32>
    %18 = arith.mulf %16, %17 : vector<16x16xf32>
    %c104 = arith.constant 104 : index
    %c0_6 = arith.constant 0 : index
    %19 = vector.load %arg1[%c104, %c0_6] : memref<160x32xf32, #tpu.memory_space<vmem>>, vector<16x16xf32>
    %20 = arith.addf %18, %19 : vector<16x16xf32>
    %c32 = arith.constant 32 : index
    %c0_7 = arith.constant 0 : index
    %21 = vector.load %arg1[%c32, %c0_7] : memref<160x32xf32, #tpu.memory_space<vmem>>, vector<16x32xf32>
    %cst_8 = arith.constant dense<0.000000e+00> : vector<16x32xf32>
    %22 = tpu.matmul %20, %21, %cst_8 {dimension_numbers = #tpu.dot_dimension_numbers<[1], [0], [0], [1], [0, 0, 1, 1], [], []>} : vector<16x16xf32>, vector<16x32xf32>, vector<16x32xf32> -> vector<16x32xf32>
    %c152 = arith.constant 152 : index
    %c0_9 = arith.constant 0 : index
    %23 = vector.load %arg1[%c152, %c0_9] : memref<160x32xf32, #tpu.memory_space<vmem>>, vector<1x32xf32>
    %24 = vector.broadcast %23 : vector<1x32xf32> to vector<16x32xf32>
    %25 = arith.addf %22, %24 : vector<16x32xf32>
    %c153 = arith.constant 153 : index
    %c0_10 = arith.constant 0 : index
    %26 = vector.load %arg1[%c153, %c0_10] : memref<160x32xf32, #tpu.memory_space<vmem>>, vector<1x32xf32>
    %c154 = arith.constant 154 : index
    %c0_11 = arith.constant 0 : index
    %27 = vector.load %arg1[%c154, %c0_11] : memref<160x32xf32, #tpu.memory_space<vmem>>, vector<1x32xf32>
    %cst_12 = arith.constant dense<0.000000e+00> : vector<16xf32>
    %28 = vector.multi_reduction <add>, %25, %cst_12 [1] : vector<16x32xf32> to vector<16xf32>
    %29 = vector.shape_cast %28 : vector<16xf32> to vector<16x1xf32>
    %cst_13 = arith.constant 3.200000e+01 : f32
    %30 = vector.broadcast %cst_13 : f32 to vector<16x1xf32>
    %31 = arith.divf %29, %30 : vector<16x1xf32>
    %32 = vector.broadcast %31 : vector<16x1xf32> to vector<16x32xf32>
    %33 = arith.subf %25, %32 : vector<16x32xf32>
    %34 = arith.mulf %33, %33 : vector<16x32xf32>
    %cst_14 = arith.constant dense<0.000000e+00> : vector<16xf32>
    %35 = vector.multi_reduction <add>, %34, %cst_14 [1] : vector<16x32xf32> to vector<16xf32>
    %36 = vector.shape_cast %35 : vector<16xf32> to vector<16x1xf32>
    %cst_15 = arith.constant 3.200000e+01 : f32
    %37 = vector.broadcast %cst_15 : f32 to vector<16x1xf32>
    %38 = arith.divf %36, %37 : vector<16x1xf32>
    %cst_16 = arith.constant 9.99999974E-6 : f32
    %39 = vector.broadcast %cst_16 : f32 to vector<16x1xf32>
    %40 = arith.addf %38, %39 : vector<16x1xf32>
    %41 = math.rsqrt %40 : vector<16x1xf32>
    %42 = vector.broadcast %41 : vector<16x1xf32> to vector<16x32xf32>
    %43 = arith.mulf %33, %42 : vector<16x32xf32>
    %44 = vector.broadcast %26 : vector<1x32xf32> to vector<16x32xf32>
    %45 = arith.mulf %43, %44 : vector<16x32xf32>
    %46 = vector.broadcast %27 : vector<1x32xf32> to vector<16x32xf32>
    %47 = arith.addf %45, %46 : vector<16x32xf32>
    %c48 = arith.constant 48 : index
    %c0_17 = arith.constant 0 : index
    %48 = vector.load %arg1[%c48, %c0_17] : memref<160x32xf32, #tpu.memory_space<vmem>>, vector<8x32xf32>
    %49 = vector.extract_strided_slice %47 {offsets = [0, 0], sizes = [8, 32], strides = [1, 1]} : vector<16x32xf32> to vector<8x32xf32>
    %50 = vector.extract_strided_slice %47 {offsets = [8, 0], sizes = [8, 32], strides = [1, 1]} : vector<16x32xf32> to vector<8x32xf32>
    %51 = tpu.concatenate %49, %48, %50, %48 in 0 : vector<8x32xf32>, vector<8x32xf32>, vector<8x32xf32>, vector<8x32xf32> -> vector<32x32xf32>
    %c0_18 = arith.constant 0 : index
    %c0_19 = arith.constant 0 : index
    %52 = vector.load %arg1[%c0_18, %c0_19] : memref<160x32xf32, #tpu.memory_space<vmem>>, vector<32x32xf32>
    %c0_20 = arith.constant 0 : index
    %c0_21 = arith.constant 0 : index
    %53 = vector.load %arg2[%c0_20, %c0_21] : memref<400x256xf32, #tpu.memory_space<vmem>>, vector<32x128xf32>
    %c0_22 = arith.constant 0 : index
    %c128 = arith.constant 128 : index
    %54 = vector.load %arg2[%c0_22, %c128] : memref<400x256xf32, #tpu.memory_space<vmem>>, vector<32x32xf32>
    %cst_23 = arith.constant dense<0.000000e+00> : vector<32x128xf32>
    %55 = tpu.matmul %51, %53, %cst_23 {dimension_numbers = #tpu.dot_dimension_numbers<[1], [0], [0], [1], [0, 0, 1, 1], [], []>} : vector<32x32xf32>, vector<32x128xf32>, vector<32x128xf32> -> vector<32x128xf32>
    %56 = vector.extract_strided_slice %55 {offsets = [0, 96], sizes = [32, 32], strides = [1, 1]} : vector<32x128xf32> to vector<32x32xf32>
    %cst_24 = arith.constant 0.000000e+00 : f32
    %57 = vector.broadcast %cst_24 : f32 to vector<32x32xf32>
    %58 = arith.subf %57, %56 : vector<32x32xf32>
    %59 = math.exp %58 : vector<32x32xf32>
    %cst_25 = arith.constant 1.000000e+00 : f32
    %60 = vector.broadcast %cst_25 : f32 to vector<32x32xf32>
    %61 = arith.addf %60, %59 : vector<32x32xf32>
    %cst_26 = arith.constant 1.000000e+00 : f32
    %62 = vector.broadcast %cst_26 : f32 to vector<32x32xf32>
    %63 = arith.divf %62, %61 : vector<32x32xf32>
    %64 = vector.extract_strided_slice %55 {offsets = [0, 0], sizes = [32, 8], strides = [1, 1]} : vector<32x128xf32> to vector<32x8xf32>
    %65 = vector.extract_strided_slice %55 {offsets = [0, 32], sizes = [32, 8], strides = [1, 1]} : vector<32x128xf32> to vector<32x8xf32>
    %66 = vector.extract_strided_slice %55 {offsets = [0, 64], sizes = [32, 8], strides = [1, 1]} : vector<32x128xf32> to vector<32x8xf32>
    %cst_27 = arith.constant dense<0.000000e+00> : vector<32x32xf32>
    %67 = tpu.matmul %64, %65, %cst_27 {dimension_numbers = #tpu.dot_dimension_numbers<[1], [1], [0], [0], [0, 0, 1, 0], [], []>} : vector<32x8xf32>, vector<32x8xf32>, vector<32x32xf32> -> vector<32x32xf32>
    %68 = arith.addf %67, %52 : vector<32x32xf32>
    %cst_28 = arith.constant dense<0xFF800000> : vector<32xf32>
    %69 = vector.multi_reduction <maximumf>, %68, %cst_28 [1] : vector<32x32xf32> to vector<32xf32>
    %70 = vector.shape_cast %69 : vector<32xf32> to vector<32x1xf32>
    %71 = vector.broadcast %70 : vector<32x1xf32> to vector<32x32xf32>
    %72 = arith.subf %68, %71 : vector<32x32xf32>
    %73 = math.exp %72 : vector<32x32xf32>
    %cst_29 = arith.constant dense<0.000000e+00> : vector<32xf32>
    %74 = vector.multi_reduction <add>, %73, %cst_29 [1] : vector<32x32xf32> to vector<32xf32>
    %75 = vector.shape_cast %74 : vector<32xf32> to vector<32x1xf32>
    %76 = tpu.reciprocal %75 {approx = true} : vector<32x1xf32> -> vector<32x1xf32>
    %77 = vector.broadcast %76 : vector<32x1xf32> to vector<32x32xf32>
    %78 = arith.mulf %73, %77 : vector<32x32xf32>
    %cst_30 = arith.constant dense<0.000000e+00> : vector<32x8xf32>
    %79 = tpu.matmul %78, %66, %cst_30 {dimension_numbers = #tpu.dot_dimension_numbers<[1], [0], [0], [1], [0, 0, 1, 1], [], []>} : vector<32x32xf32>, vector<32x8xf32>, vector<32x8xf32> -> vector<32x8xf32>
    %80 = vector.extract_strided_slice %55 {offsets = [0, 8], sizes = [32, 8], strides = [1, 1]} : vector<32x128xf32> to vector<32x8xf32>
    %81 = vector.extract_strided_slice %55 {offsets = [0, 40], sizes = [32, 8], strides = [1, 1]} : vector<32x128xf32> to vector<32x8xf32>
    %82 = vector.extract_strided_slice %55 {offsets = [0, 72], sizes = [32, 8], strides = [1, 1]} : vector<32x128xf32> to vector<32x8xf32>
    %cst_31 = arith.constant dense<0.000000e+00> : vector<32x32xf32>
    %83 = tpu.matmul %80, %81, %cst_31 {dimension_numbers = #tpu.dot_dimension_numbers<[1], [1], [0], [0], [0, 0, 1, 0], [], []>} : vector<32x8xf32>, vector<32x8xf32>, vector<32x32xf32> -> vector<32x32xf32>
    %84 = arith.addf %83, %52 : vector<32x32xf32>
    %cst_32 = arith.constant dense<0xFF800000> : vector<32xf32>
    %85 = vector.multi_reduction <maximumf>, %84, %cst_32 [1] : vector<32x32xf32> to vector<32xf32>
    %86 = vector.shape_cast %85 : vector<32xf32> to vector<32x1xf32>
    %87 = vector.broadcast %86 : vector<32x1xf32> to vector<32x32xf32>
    %88 = arith.subf %84, %87 : vector<32x32xf32>
    %89 = math.exp %88 : vector<32x32xf32>
    %cst_33 = arith.constant dense<0.000000e+00> : vector<32xf32>
    %90 = vector.multi_reduction <add>, %89, %cst_33 [1] : vector<32x32xf32> to vector<32xf32>
    %91 = vector.shape_cast %90 : vector<32xf32> to vector<32x1xf32>
    %92 = tpu.reciprocal %91 {approx = true} : vector<32x1xf32> -> vector<32x1xf32>
    %93 = vector.broadcast %92 : vector<32x1xf32> to vector<32x32xf32>
    %94 = arith.mulf %89, %93 : vector<32x32xf32>
    %cst_34 = arith.constant dense<0.000000e+00> : vector<32x8xf32>
    %95 = tpu.matmul %94, %82, %cst_34 {dimension_numbers = #tpu.dot_dimension_numbers<[1], [0], [0], [1], [0, 0, 1, 1], [], []>} : vector<32x32xf32>, vector<32x8xf32>, vector<32x8xf32> -> vector<32x8xf32>
    %96 = vector.extract_strided_slice %55 {offsets = [0, 16], sizes = [32, 8], strides = [1, 1]} : vector<32x128xf32> to vector<32x8xf32>
    %97 = vector.extract_strided_slice %55 {offsets = [0, 48], sizes = [32, 8], strides = [1, 1]} : vector<32x128xf32> to vector<32x8xf32>
    %98 = vector.extract_strided_slice %55 {offsets = [0, 80], sizes = [32, 8], strides = [1, 1]} : vector<32x128xf32> to vector<32x8xf32>
    %cst_35 = arith.constant dense<0.000000e+00> : vector<32x32xf32>
    %99 = tpu.matmul %96, %97, %cst_35 {dimension_numbers = #tpu.dot_dimension_numbers<[1], [1], [0], [0], [0, 0, 1, 0], [], []>} : vector<32x8xf32>, vector<32x8xf32>, vector<32x32xf32> -> vector<32x32xf32>
    %100 = arith.addf %99, %52 : vector<32x32xf32>
    %cst_36 = arith.constant dense<0xFF800000> : vector<32xf32>
    %101 = vector.multi_reduction <maximumf>, %100, %cst_36 [1] : vector<32x32xf32> to vector<32xf32>
    %102 = vector.shape_cast %101 : vector<32xf32> to vector<32x1xf32>
    %103 = vector.broadcast %102 : vector<32x1xf32> to vector<32x32xf32>
    %104 = arith.subf %100, %103 : vector<32x32xf32>
    %105 = math.exp %104 : vector<32x32xf32>
    %cst_37 = arith.constant dense<0.000000e+00> : vector<32xf32>
    %106 = vector.multi_reduction <add>, %105, %cst_37 [1] : vector<32x32xf32> to vector<32xf32>
    %107 = vector.shape_cast %106 : vector<32xf32> to vector<32x1xf32>
    %108 = tpu.reciprocal %107 {approx = true} : vector<32x1xf32> -> vector<32x1xf32>
    %109 = vector.broadcast %108 : vector<32x1xf32> to vector<32x32xf32>
    %110 = arith.mulf %105, %109 : vector<32x32xf32>
    %cst_38 = arith.constant dense<0.000000e+00> : vector<32x8xf32>
    %111 = tpu.matmul %110, %98, %cst_38 {dimension_numbers = #tpu.dot_dimension_numbers<[1], [0], [0], [1], [0, 0, 1, 1], [], []>} : vector<32x32xf32>, vector<32x8xf32>, vector<32x8xf32> -> vector<32x8xf32>
    %112 = vector.extract_strided_slice %55 {offsets = [0, 24], sizes = [32, 8], strides = [1, 1]} : vector<32x128xf32> to vector<32x8xf32>
    %113 = vector.extract_strided_slice %55 {offsets = [0, 56], sizes = [32, 8], strides = [1, 1]} : vector<32x128xf32> to vector<32x8xf32>
    %114 = vector.extract_strided_slice %55 {offsets = [0, 88], sizes = [32, 8], strides = [1, 1]} : vector<32x128xf32> to vector<32x8xf32>
    %cst_39 = arith.constant dense<0.000000e+00> : vector<32x32xf32>
    %115 = tpu.matmul %112, %113, %cst_39 {dimension_numbers = #tpu.dot_dimension_numbers<[1], [1], [0], [0], [0, 0, 1, 0], [], []>} : vector<32x8xf32>, vector<32x8xf32>, vector<32x32xf32> -> vector<32x32xf32>
    %116 = arith.addf %115, %52 : vector<32x32xf32>
    %cst_40 = arith.constant dense<0xFF800000> : vector<32xf32>
    %117 = vector.multi_reduction <maximumf>, %116, %cst_40 [1] : vector<32x32xf32> to vector<32xf32>
    %118 = vector.shape_cast %117 : vector<32xf32> to vector<32x1xf32>
    %119 = vector.broadcast %118 : vector<32x1xf32> to vector<32x32xf32>
    %120 = arith.subf %116, %119 : vector<32x32xf32>
    %121 = math.exp %120 : vector<32x32xf32>
    %cst_41 = arith.constant dense<0.000000e+00> : vector<32xf32>
    %122 = vector.multi_reduction <add>, %121, %cst_41 [1] : vector<32x32xf32> to vector<32xf32>
    %123 = vector.shape_cast %122 : vector<32xf32> to vector<32x1xf32>
    %124 = tpu.reciprocal %123 {approx = true} : vector<32x1xf32> -> vector<32x1xf32>
    %125 = vector.broadcast %124 : vector<32x1xf32> to vector<32x32xf32>
    %126 = arith.mulf %121, %125 : vector<32x32xf32>
    %cst_42 = arith.constant dense<0.000000e+00> : vector<32x8xf32>
    %127 = tpu.matmul %126, %114, %cst_42 {dimension_numbers = #tpu.dot_dimension_numbers<[1], [0], [0], [1], [0, 0, 1, 1], [], []>} : vector<32x32xf32>, vector<32x8xf32>, vector<32x8xf32> -> vector<32x8xf32>
    %128 = tpu.concatenate %79, %95, %111, %127 in 1 : vector<32x8xf32>, vector<32x8xf32>, vector<32x8xf32>, vector<32x8xf32> -> vector<32x32xf32>
    %129 = arith.mulf %128, %63 : vector<32x32xf32>
    %cst_43 = arith.constant dense<0.000000e+00> : vector<32x32xf32>
    %130 = tpu.matmul %129, %54, %cst_43 {dimension_numbers = #tpu.dot_dimension_numbers<[1], [0], [0], [1], [0, 0, 1, 1], [], []>} : vector<32x32xf32>, vector<32x32xf32>, vector<32x32xf32> -> vector<32x32xf32>
    %131 = arith.addf %51, %130 : vector<32x32xf32>
    %c193 = arith.constant 193 : index
    %c0_44 = arith.constant 0 : index
    %132 = vector.load %arg2[%c193, %c0_44] : memref<400x256xf32, #tpu.memory_space<vmem>>, vector<1x32xf32>
    %c194 = arith.constant 194 : index
    %c0_45 = arith.constant 0 : index
    %133 = vector.load %arg2[%c194, %c0_45] : memref<400x256xf32, #tpu.memory_space<vmem>>, vector<1x32xf32>
    %cst_46 = arith.constant dense<0.000000e+00> : vector<32xf32>
    %134 = vector.multi_reduction <add>, %131, %cst_46 [1] : vector<32x32xf32> to vector<32xf32>
    %135 = vector.shape_cast %134 : vector<32xf32> to vector<32x1xf32>
    %cst_47 = arith.constant 3.200000e+01 : f32
    %136 = vector.broadcast %cst_47 : f32 to vector<32x1xf32>
    %137 = arith.divf %135, %136 : vector<32x1xf32>
    %138 = vector.broadcast %137 : vector<32x1xf32> to vector<32x32xf32>
    %139 = arith.subf %131, %138 : vector<32x32xf32>
    %140 = arith.mulf %139, %139 : vector<32x32xf32>
    %cst_48 = arith.constant dense<0.000000e+00> : vector<32xf32>
    %141 = vector.multi_reduction <add>, %140, %cst_48 [1] : vector<32x32xf32> to vector<32xf32>
    %142 = vector.shape_cast %141 : vector<32xf32> to vector<32x1xf32>
    %cst_49 = arith.constant 3.200000e+01 : f32
    %143 = vector.broadcast %cst_49 : f32 to vector<32x1xf32>
    %144 = arith.divf %142, %143 : vector<32x1xf32>
    %cst_50 = arith.constant 9.99999974E-6 : f32
    %145 = vector.broadcast %cst_50 : f32 to vector<32x1xf32>
    %146 = arith.addf %144, %145 : vector<32x1xf32>
    %147 = math.rsqrt %146 : vector<32x1xf32>
    %148 = vector.broadcast %147 : vector<32x1xf32> to vector<32x32xf32>
    %149 = arith.mulf %139, %148 : vector<32x32xf32>
    %150 = vector.broadcast %132 : vector<1x32xf32> to vector<32x32xf32>
    %151 = arith.mulf %149, %150 : vector<32x32xf32>
    %152 = vector.broadcast %133 : vector<1x32xf32> to vector<32x32xf32>
    %153 = arith.addf %151, %152 : vector<32x32xf32>
    %c32_51 = arith.constant 32 : index
    %c0_52 = arith.constant 0 : index
    %154 = vector.load %arg2[%c32_51, %c0_52] : memref<400x256xf32, #tpu.memory_space<vmem>>, vector<32x256xf32>
    %cst_53 = arith.constant dense<0.000000e+00> : vector<32x256xf32>
    %155 = tpu.matmul %153, %154, %cst_53 {dimension_numbers = #tpu.dot_dimension_numbers<[1], [0], [0], [1], [0, 0, 1, 1], [], []>} : vector<32x32xf32>, vector<32x256xf32>, vector<32x256xf32> -> vector<32x256xf32>
    %c192 = arith.constant 192 : index
    %c0_54 = arith.constant 0 : index
    %156 = vector.load %arg2[%c192, %c0_54] : memref<400x256xf32, #tpu.memory_space<vmem>>, vector<1x256xf32>
    %157 = vector.broadcast %156 : vector<1x256xf32> to vector<32x256xf32>
    %158 = arith.addf %155, %157 : vector<32x256xf32>
    %159 = vector.extract_strided_slice %158 {offsets = [0, 0], sizes = [32, 128], strides = [1, 1]} : vector<32x256xf32> to vector<32x128xf32>
    %160 = vector.extract_strided_slice %158 {offsets = [0, 128], sizes = [32, 128], strides = [1, 1]} : vector<32x256xf32> to vector<32x128xf32>
    %cst_55 = arith.constant 5.000000e-01 : f32
    %161 = vector.broadcast %cst_55 : f32 to vector<32x128xf32>
    %162 = arith.mulf %161, %160 : vector<32x128xf32>
    %cst_56 = arith.constant 0.707106769 : f32
    %163 = vector.broadcast %cst_56 : f32 to vector<32x128xf32>
    %164 = arith.mulf %160, %163 : vector<32x128xf32>
    %cst_57 = arith.constant 0.000000e+00 : f32
    %165 = vector.broadcast %cst_57 : f32 to vector<32x128xf32>
    %166 = arith.cmpf oge, %164, %165 : vector<32x128xf32>
    %cst_58 = arith.constant 1.000000e+00 : f32
    %cst_59 = arith.constant -1.000000e+00 : f32
    %167 = vector.broadcast %cst_58 : f32 to vector<32x128xf32>
    %168 = vector.broadcast %cst_59 : f32 to vector<32x128xf32>
    %169 = arith.select %166, %167, %168 : vector<32x128xi1>, vector<32x128xf32>
    %170 = math.absf %164 : vector<32x128xf32>
    %cst_60 = arith.constant 0.327591091 : f32
    %171 = vector.broadcast %cst_60 : f32 to vector<32x128xf32>
    %172 = arith.mulf %171, %170 : vector<32x128xf32>
    %cst_61 = arith.constant 1.000000e+00 : f32
    %173 = vector.broadcast %cst_61 : f32 to vector<32x128xf32>
    %174 = arith.addf %173, %172 : vector<32x128xf32>
    %cst_62 = arith.constant 1.000000e+00 : f32
    %175 = vector.broadcast %cst_62 : f32 to vector<32x128xf32>
    %176 = arith.divf %175, %174 : vector<32x128xf32>
    %cst_63 = arith.constant 1.06140542 : f32
    %177 = vector.broadcast %cst_63 : f32 to vector<32x128xf32>
    %178 = arith.mulf %177, %176 : vector<32x128xf32>
    %cst_64 = arith.constant -1.45315206 : f32
    %179 = vector.broadcast %cst_64 : f32 to vector<32x128xf32>
    %180 = arith.addf %178, %179 : vector<32x128xf32>
    %181 = arith.mulf %180, %176 : vector<32x128xf32>
    %cst_65 = arith.constant 1.42141378 : f32
    %182 = vector.broadcast %cst_65 : f32 to vector<32x128xf32>
    %183 = arith.addf %181, %182 : vector<32x128xf32>
    %184 = arith.mulf %183, %176 : vector<32x128xf32>
    %cst_66 = arith.constant -0.284496725 : f32
    %185 = vector.broadcast %cst_66 : f32 to vector<32x128xf32>
    %186 = arith.addf %184, %185 : vector<32x128xf32>
    %187 = arith.mulf %186, %176 : vector<32x128xf32>
    %cst_67 = arith.constant 0.254829586 : f32
    %188 = vector.broadcast %cst_67 : f32 to vector<32x128xf32>
    %189 = arith.addf %187, %188 : vector<32x128xf32>
    %190 = arith.mulf %189, %176 : vector<32x128xf32>
    %cst_68 = arith.constant 0.000000e+00 : f32
    %191 = vector.broadcast %cst_68 : f32 to vector<32x128xf32>
    %192 = arith.subf %191, %170 : vector<32x128xf32>
    %193 = arith.mulf %192, %170 : vector<32x128xf32>
    %194 = math.exp %193 : vector<32x128xf32>
    %195 = arith.mulf %190, %194 : vector<32x128xf32>
    %cst_69 = arith.constant 1.000000e+00 : f32
    %196 = vector.broadcast %cst_69 : f32 to vector<32x128xf32>
    %197 = arith.subf %196, %195 : vector<32x128xf32>
    %198 = arith.mulf %169, %197 : vector<32x128xf32>
    %cst_70 = arith.constant 1.000000e+00 : f32
    %199 = vector.broadcast %cst_70 : f32 to vector<32x128xf32>
    %200 = arith.addf %199, %198 : vector<32x128xf32>
    %201 = arith.mulf %162, %200 : vector<32x128xf32>
    %202 = arith.mulf %159, %201 : vector<32x128xf32>
    %c64 = arith.constant 64 : index
    %c0_71 = arith.constant 0 : index
    %203 = vector.load %arg2[%c64, %c0_71] : memref<400x256xf32, #tpu.memory_space<vmem>>, vector<128x32xf32>
    %cst_72 = arith.constant dense<0.000000e+00> : vector<32x32xf32>
    %204 = tpu.matmul %202, %203, %cst_72 {dimension_numbers = #tpu.dot_dimension_numbers<[1], [0], [0], [1], [0, 0, 1, 1], [], []>} : vector<32x128xf32>, vector<128x32xf32>, vector<32x32xf32> -> vector<32x32xf32>
    %c197 = arith.constant 197 : index
    %c0_73 = arith.constant 0 : index
    %205 = vector.load %arg2[%c197, %c0_73] : memref<400x256xf32, #tpu.memory_space<vmem>>, vector<1x32xf32>
    %206 = vector.broadcast %205 : vector<1x32xf32> to vector<32x32xf32>
    %207 = arith.addf %204, %206 : vector<32x32xf32>
    %208 = arith.addf %153, %207 : vector<32x32xf32>
    %c195 = arith.constant 195 : index
    %c0_74 = arith.constant 0 : index
    %209 = vector.load %arg2[%c195, %c0_74] : memref<400x256xf32, #tpu.memory_space<vmem>>, vector<1x32xf32>
    %c196 = arith.constant 196 : index
    %c0_75 = arith.constant 0 : index
    %210 = vector.load %arg2[%c196, %c0_75] : memref<400x256xf32, #tpu.memory_space<vmem>>, vector<1x32xf32>
    %cst_76 = arith.constant dense<0.000000e+00> : vector<32xf32>
    %211 = vector.multi_reduction <add>, %208, %cst_76 [1] : vector<32x32xf32> to vector<32xf32>
    %212 = vector.shape_cast %211 : vector<32xf32> to vector<32x1xf32>
    %cst_77 = arith.constant 3.200000e+01 : f32
    %213 = vector.broadcast %cst_77 : f32 to vector<32x1xf32>
    %214 = arith.divf %212, %213 : vector<32x1xf32>
    %215 = vector.broadcast %214 : vector<32x1xf32> to vector<32x32xf32>
    %216 = arith.subf %208, %215 : vector<32x32xf32>
    %217 = arith.mulf %216, %216 : vector<32x32xf32>
    %cst_78 = arith.constant dense<0.000000e+00> : vector<32xf32>
    %218 = vector.multi_reduction <add>, %217, %cst_78 [1] : vector<32x32xf32> to vector<32xf32>
    %219 = vector.shape_cast %218 : vector<32xf32> to vector<32x1xf32>
    %cst_79 = arith.constant 3.200000e+01 : f32
    %220 = vector.broadcast %cst_79 : f32 to vector<32x1xf32>
    %221 = arith.divf %219, %220 : vector<32x1xf32>
    %cst_80 = arith.constant 9.99999974E-6 : f32
    %222 = vector.broadcast %cst_80 : f32 to vector<32x1xf32>
    %223 = arith.addf %221, %222 : vector<32x1xf32>
    %224 = math.rsqrt %223 : vector<32x1xf32>
    %225 = vector.broadcast %224 : vector<32x1xf32> to vector<32x32xf32>
    %226 = arith.mulf %216, %225 : vector<32x32xf32>
    %227 = vector.broadcast %209 : vector<1x32xf32> to vector<32x32xf32>
    %228 = arith.mulf %226, %227 : vector<32x32xf32>
    %229 = vector.broadcast %210 : vector<1x32xf32> to vector<32x32xf32>
    %230 = arith.addf %228, %229 : vector<32x32xf32>
    %c200 = arith.constant 200 : index
    %c0_81 = arith.constant 0 : index
    %231 = vector.load %arg2[%c200, %c0_81] : memref<400x256xf32, #tpu.memory_space<vmem>>, vector<32x128xf32>
    %c200_82 = arith.constant 200 : index
    %c128_83 = arith.constant 128 : index
    %232 = vector.load %arg2[%c200_82, %c128_83] : memref<400x256xf32, #tpu.memory_space<vmem>>, vector<32x32xf32>
    %cst_84 = arith.constant dense<0.000000e+00> : vector<32x128xf32>
    %233 = tpu.matmul %230, %231, %cst_84 {dimension_numbers = #tpu.dot_dimension_numbers<[1], [0], [0], [1], [0, 0, 1, 1], [], []>} : vector<32x32xf32>, vector<32x128xf32>, vector<32x128xf32> -> vector<32x128xf32>
    %234 = vector.extract_strided_slice %233 {offsets = [0, 96], sizes = [32, 32], strides = [1, 1]} : vector<32x128xf32> to vector<32x32xf32>
    %cst_85 = arith.constant 0.000000e+00 : f32
    %235 = vector.broadcast %cst_85 : f32 to vector<32x32xf32>
    %236 = arith.subf %235, %234 : vector<32x32xf32>
    %237 = math.exp %236 : vector<32x32xf32>
    %cst_86 = arith.constant 1.000000e+00 : f32
    %238 = vector.broadcast %cst_86 : f32 to vector<32x32xf32>
    %239 = arith.addf %238, %237 : vector<32x32xf32>
    %cst_87 = arith.constant 1.000000e+00 : f32
    %240 = vector.broadcast %cst_87 : f32 to vector<32x32xf32>
    %241 = arith.divf %240, %239 : vector<32x32xf32>
    %242 = vector.extract_strided_slice %233 {offsets = [0, 0], sizes = [32, 8], strides = [1, 1]} : vector<32x128xf32> to vector<32x8xf32>
    %243 = vector.extract_strided_slice %233 {offsets = [0, 32], sizes = [32, 8], strides = [1, 1]} : vector<32x128xf32> to vector<32x8xf32>
    %244 = vector.extract_strided_slice %233 {offsets = [0, 64], sizes = [32, 8], strides = [1, 1]} : vector<32x128xf32> to vector<32x8xf32>
    %cst_88 = arith.constant dense<0.000000e+00> : vector<32x32xf32>
    %245 = tpu.matmul %242, %243, %cst_88 {dimension_numbers = #tpu.dot_dimension_numbers<[1], [1], [0], [0], [0, 0, 1, 0], [], []>} : vector<32x8xf32>, vector<32x8xf32>, vector<32x32xf32> -> vector<32x32xf32>
    %246 = arith.addf %245, %52 : vector<32x32xf32>
    %cst_89 = arith.constant dense<0xFF800000> : vector<32xf32>
    %247 = vector.multi_reduction <maximumf>, %246, %cst_89 [1] : vector<32x32xf32> to vector<32xf32>
    %248 = vector.shape_cast %247 : vector<32xf32> to vector<32x1xf32>
    %249 = vector.broadcast %248 : vector<32x1xf32> to vector<32x32xf32>
    %250 = arith.subf %246, %249 : vector<32x32xf32>
    %251 = math.exp %250 : vector<32x32xf32>
    %cst_90 = arith.constant dense<0.000000e+00> : vector<32xf32>
    %252 = vector.multi_reduction <add>, %251, %cst_90 [1] : vector<32x32xf32> to vector<32xf32>
    %253 = vector.shape_cast %252 : vector<32xf32> to vector<32x1xf32>
    %254 = tpu.reciprocal %253 {approx = true} : vector<32x1xf32> -> vector<32x1xf32>
    %255 = vector.broadcast %254 : vector<32x1xf32> to vector<32x32xf32>
    %256 = arith.mulf %251, %255 : vector<32x32xf32>
    %cst_91 = arith.constant dense<0.000000e+00> : vector<32x8xf32>
    %257 = tpu.matmul %256, %244, %cst_91 {dimension_numbers = #tpu.dot_dimension_numbers<[1], [0], [0], [1], [0, 0, 1, 1], [], []>} : vector<32x32xf32>, vector<32x8xf32>, vector<32x8xf32> -> vector<32x8xf32>
    %258 = vector.extract_strided_slice %233 {offsets = [0, 8], sizes = [32, 8], strides = [1, 1]} : vector<32x128xf32> to vector<32x8xf32>
    %259 = vector.extract_strided_slice %233 {offsets = [0, 40], sizes = [32, 8], strides = [1, 1]} : vector<32x128xf32> to vector<32x8xf32>
    %260 = vector.extract_strided_slice %233 {offsets = [0, 72], sizes = [32, 8], strides = [1, 1]} : vector<32x128xf32> to vector<32x8xf32>
    %cst_92 = arith.constant dense<0.000000e+00> : vector<32x32xf32>
    %261 = tpu.matmul %258, %259, %cst_92 {dimension_numbers = #tpu.dot_dimension_numbers<[1], [1], [0], [0], [0, 0, 1, 0], [], []>} : vector<32x8xf32>, vector<32x8xf32>, vector<32x32xf32> -> vector<32x32xf32>
    %262 = arith.addf %261, %52 : vector<32x32xf32>
    %cst_93 = arith.constant dense<0xFF800000> : vector<32xf32>
    %263 = vector.multi_reduction <maximumf>, %262, %cst_93 [1] : vector<32x32xf32> to vector<32xf32>
    %264 = vector.shape_cast %263 : vector<32xf32> to vector<32x1xf32>
    %265 = vector.broadcast %264 : vector<32x1xf32> to vector<32x32xf32>
    %266 = arith.subf %262, %265 : vector<32x32xf32>
    %267 = math.exp %266 : vector<32x32xf32>
    %cst_94 = arith.constant dense<0.000000e+00> : vector<32xf32>
    %268 = vector.multi_reduction <add>, %267, %cst_94 [1] : vector<32x32xf32> to vector<32xf32>
    %269 = vector.shape_cast %268 : vector<32xf32> to vector<32x1xf32>
    %270 = tpu.reciprocal %269 {approx = true} : vector<32x1xf32> -> vector<32x1xf32>
    %271 = vector.broadcast %270 : vector<32x1xf32> to vector<32x32xf32>
    %272 = arith.mulf %267, %271 : vector<32x32xf32>
    %cst_95 = arith.constant dense<0.000000e+00> : vector<32x8xf32>
    %273 = tpu.matmul %272, %260, %cst_95 {dimension_numbers = #tpu.dot_dimension_numbers<[1], [0], [0], [1], [0, 0, 1, 1], [], []>} : vector<32x32xf32>, vector<32x8xf32>, vector<32x8xf32> -> vector<32x8xf32>
    %274 = vector.extract_strided_slice %233 {offsets = [0, 16], sizes = [32, 8], strides = [1, 1]} : vector<32x128xf32> to vector<32x8xf32>
    %275 = vector.extract_strided_slice %233 {offsets = [0, 48], sizes = [32, 8], strides = [1, 1]} : vector<32x128xf32> to vector<32x8xf32>
    %276 = vector.extract_strided_slice %233 {offsets = [0, 80], sizes = [32, 8], strides = [1, 1]} : vector<32x128xf32> to vector<32x8xf32>
    %cst_96 = arith.constant dense<0.000000e+00> : vector<32x32xf32>
    %277 = tpu.matmul %274, %275, %cst_96 {dimension_numbers = #tpu.dot_dimension_numbers<[1], [1], [0], [0], [0, 0, 1, 0], [], []>} : vector<32x8xf32>, vector<32x8xf32>, vector<32x32xf32> -> vector<32x32xf32>
    %278 = arith.addf %277, %52 : vector<32x32xf32>
    %cst_97 = arith.constant dense<0xFF800000> : vector<32xf32>
    %279 = vector.multi_reduction <maximumf>, %278, %cst_97 [1] : vector<32x32xf32> to vector<32xf32>
    %280 = vector.shape_cast %279 : vector<32xf32> to vector<32x1xf32>
    %281 = vector.broadcast %280 : vector<32x1xf32> to vector<32x32xf32>
    %282 = arith.subf %278, %281 : vector<32x32xf32>
    %283 = math.exp %282 : vector<32x32xf32>
    %cst_98 = arith.constant dense<0.000000e+00> : vector<32xf32>
    %284 = vector.multi_reduction <add>, %283, %cst_98 [1] : vector<32x32xf32> to vector<32xf32>
    %285 = vector.shape_cast %284 : vector<32xf32> to vector<32x1xf32>
    %286 = tpu.reciprocal %285 {approx = true} : vector<32x1xf32> -> vector<32x1xf32>
    %287 = vector.broadcast %286 : vector<32x1xf32> to vector<32x32xf32>
    %288 = arith.mulf %283, %287 : vector<32x32xf32>
    %cst_99 = arith.constant dense<0.000000e+00> : vector<32x8xf32>
    %289 = tpu.matmul %288, %276, %cst_99 {dimension_numbers = #tpu.dot_dimension_numbers<[1], [0], [0], [1], [0, 0, 1, 1], [], []>} : vector<32x32xf32>, vector<32x8xf32>, vector<32x8xf32> -> vector<32x8xf32>
    %290 = vector.extract_strided_slice %233 {offsets = [0, 24], sizes = [32, 8], strides = [1, 1]} : vector<32x128xf32> to vector<32x8xf32>
    %291 = vector.extract_strided_slice %233 {offsets = [0, 56], sizes = [32, 8], strides = [1, 1]} : vector<32x128xf32> to vector<32x8xf32>
    %292 = vector.extract_strided_slice %233 {offsets = [0, 88], sizes = [32, 8], strides = [1, 1]} : vector<32x128xf32> to vector<32x8xf32>
    %cst_100 = arith.constant dense<0.000000e+00> : vector<32x32xf32>
    %293 = tpu.matmul %290, %291, %cst_100 {dimension_numbers = #tpu.dot_dimension_numbers<[1], [1], [0], [0], [0, 0, 1, 0], [], []>} : vector<32x8xf32>, vector<32x8xf32>, vector<32x32xf32> -> vector<32x32xf32>
    %294 = arith.addf %293, %52 : vector<32x32xf32>
    %cst_101 = arith.constant dense<0xFF800000> : vector<32xf32>
    %295 = vector.multi_reduction <maximumf>, %294, %cst_101 [1] : vector<32x32xf32> to vector<32xf32>
    %296 = vector.shape_cast %295 : vector<32xf32> to vector<32x1xf32>
    %297 = vector.broadcast %296 : vector<32x1xf32> to vector<32x32xf32>
    %298 = arith.subf %294, %297 : vector<32x32xf32>
    %299 = math.exp %298 : vector<32x32xf32>
    %cst_102 = arith.constant dense<0.000000e+00> : vector<32xf32>
    %300 = vector.multi_reduction <add>, %299, %cst_102 [1] : vector<32x32xf32> to vector<32xf32>
    %301 = vector.shape_cast %300 : vector<32xf32> to vector<32x1xf32>
    %302 = tpu.reciprocal %301 {approx = true} : vector<32x1xf32> -> vector<32x1xf32>
    %303 = vector.broadcast %302 : vector<32x1xf32> to vector<32x32xf32>
    %304 = arith.mulf %299, %303 : vector<32x32xf32>
    %cst_103 = arith.constant dense<0.000000e+00> : vector<32x8xf32>
    %305 = tpu.matmul %304, %292, %cst_103 {dimension_numbers = #tpu.dot_dimension_numbers<[1], [0], [0], [1], [0, 0, 1, 1], [], []>} : vector<32x32xf32>, vector<32x8xf32>, vector<32x8xf32> -> vector<32x8xf32>
    %306 = tpu.concatenate %257, %273, %289, %305 in 1 : vector<32x8xf32>, vector<32x8xf32>, vector<32x8xf32>, vector<32x8xf32> -> vector<32x32xf32>
    %307 = arith.mulf %306, %241 : vector<32x32xf32>
    %cst_104 = arith.constant dense<0.000000e+00> : vector<32x32xf32>
    %308 = tpu.matmul %307, %232, %cst_104 {dimension_numbers = #tpu.dot_dimension_numbers<[1], [0], [0], [1], [0, 0, 1, 1], [], []>} : vector<32x32xf32>, vector<32x32xf32>, vector<32x32xf32> -> vector<32x32xf32>
    %309 = arith.addf %230, %308 : vector<32x32xf32>
    %c393 = arith.constant 393 : index
    %c0_105 = arith.constant 0 : index
    %310 = vector.load %arg2[%c393, %c0_105] : memref<400x256xf32, #tpu.memory_space<vmem>>, vector<1x32xf32>
    %c394 = arith.constant 394 : index
    %c0_106 = arith.constant 0 : index
    %311 = vector.load %arg2[%c394, %c0_106] : memref<400x256xf32, #tpu.memory_space<vmem>>, vector<1x32xf32>
    %cst_107 = arith.constant dense<0.000000e+00> : vector<32xf32>
    %312 = vector.multi_reduction <add>, %309, %cst_107 [1] : vector<32x32xf32> to vector<32xf32>
    %313 = vector.shape_cast %312 : vector<32xf32> to vector<32x1xf32>
    %cst_108 = arith.constant 3.200000e+01 : f32
    %314 = vector.broadcast %cst_108 : f32 to vector<32x1xf32>
    %315 = arith.divf %313, %314 : vector<32x1xf32>
    %316 = vector.broadcast %315 : vector<32x1xf32> to vector<32x32xf32>
    %317 = arith.subf %309, %316 : vector<32x32xf32>
    %318 = arith.mulf %317, %317 : vector<32x32xf32>
    %cst_109 = arith.constant dense<0.000000e+00> : vector<32xf32>
    %319 = vector.multi_reduction <add>, %318, %cst_109 [1] : vector<32x32xf32> to vector<32xf32>
    %320 = vector.shape_cast %319 : vector<32xf32> to vector<32x1xf32>
    %cst_110 = arith.constant 3.200000e+01 : f32
    %321 = vector.broadcast %cst_110 : f32 to vector<32x1xf32>
    %322 = arith.divf %320, %321 : vector<32x1xf32>
    %cst_111 = arith.constant 9.99999974E-6 : f32
    %323 = vector.broadcast %cst_111 : f32 to vector<32x1xf32>
    %324 = arith.addf %322, %323 : vector<32x1xf32>
    %325 = math.rsqrt %324 : vector<32x1xf32>
    %326 = vector.broadcast %325 : vector<32x1xf32> to vector<32x32xf32>
    %327 = arith.mulf %317, %326 : vector<32x32xf32>
    %328 = vector.broadcast %310 : vector<1x32xf32> to vector<32x32xf32>
    %329 = arith.mulf %327, %328 : vector<32x32xf32>
    %330 = vector.broadcast %311 : vector<1x32xf32> to vector<32x32xf32>
    %331 = arith.addf %329, %330 : vector<32x32xf32>
    %c232 = arith.constant 232 : index
    %c0_112 = arith.constant 0 : index
    %332 = vector.load %arg2[%c232, %c0_112] : memref<400x256xf32, #tpu.memory_space<vmem>>, vector<32x256xf32>
    %cst_113 = arith.constant dense<0.000000e+00> : vector<32x256xf32>
    %333 = tpu.matmul %331, %332, %cst_113 {dimension_numbers = #tpu.dot_dimension_numbers<[1], [0], [0], [1], [0, 0, 1, 1], [], []>} : vector<32x32xf32>, vector<32x256xf32>, vector<32x256xf32> -> vector<32x256xf32>
    %c392 = arith.constant 392 : index
    %c0_114 = arith.constant 0 : index
    %334 = vector.load %arg2[%c392, %c0_114] : memref<400x256xf32, #tpu.memory_space<vmem>>, vector<1x256xf32>
    %335 = vector.broadcast %334 : vector<1x256xf32> to vector<32x256xf32>
    %336 = arith.addf %333, %335 : vector<32x256xf32>
    %337 = vector.extract_strided_slice %336 {offsets = [0, 0], sizes = [32, 128], strides = [1, 1]} : vector<32x256xf32> to vector<32x128xf32>
    %338 = vector.extract_strided_slice %336 {offsets = [0, 128], sizes = [32, 128], strides = [1, 1]} : vector<32x256xf32> to vector<32x128xf32>
    %cst_115 = arith.constant 5.000000e-01 : f32
    %339 = vector.broadcast %cst_115 : f32 to vector<32x128xf32>
    %340 = arith.mulf %339, %338 : vector<32x128xf32>
    %cst_116 = arith.constant 0.707106769 : f32
    %341 = vector.broadcast %cst_116 : f32 to vector<32x128xf32>
    %342 = arith.mulf %338, %341 : vector<32x128xf32>
    %cst_117 = arith.constant 0.000000e+00 : f32
    %343 = vector.broadcast %cst_117 : f32 to vector<32x128xf32>
    %344 = arith.cmpf oge, %342, %343 : vector<32x128xf32>
    %cst_118 = arith.constant 1.000000e+00 : f32
    %cst_119 = arith.constant -1.000000e+00 : f32
    %345 = vector.broadcast %cst_118 : f32 to vector<32x128xf32>
    %346 = vector.broadcast %cst_119 : f32 to vector<32x128xf32>
    %347 = arith.select %344, %345, %346 : vector<32x128xi1>, vector<32x128xf32>
    %348 = math.absf %342 : vector<32x128xf32>
    %cst_120 = arith.constant 0.327591091 : f32
    %349 = vector.broadcast %cst_120 : f32 to vector<32x128xf32>
    %350 = arith.mulf %349, %348 : vector<32x128xf32>
    %cst_121 = arith.constant 1.000000e+00 : f32
    %351 = vector.broadcast %cst_121 : f32 to vector<32x128xf32>
    %352 = arith.addf %351, %350 : vector<32x128xf32>
    %cst_122 = arith.constant 1.000000e+00 : f32
    %353 = vector.broadcast %cst_122 : f32 to vector<32x128xf32>
    %354 = arith.divf %353, %352 : vector<32x128xf32>
    %cst_123 = arith.constant 1.06140542 : f32
    %355 = vector.broadcast %cst_123 : f32 to vector<32x128xf32>
    %356 = arith.mulf %355, %354 : vector<32x128xf32>
    %cst_124 = arith.constant -1.45315206 : f32
    %357 = vector.broadcast %cst_124 : f32 to vector<32x128xf32>
    %358 = arith.addf %356, %357 : vector<32x128xf32>
    %359 = arith.mulf %358, %354 : vector<32x128xf32>
    %cst_125 = arith.constant 1.42141378 : f32
    %360 = vector.broadcast %cst_125 : f32 to vector<32x128xf32>
    %361 = arith.addf %359, %360 : vector<32x128xf32>
    %362 = arith.mulf %361, %354 : vector<32x128xf32>
    %cst_126 = arith.constant -0.284496725 : f32
    %363 = vector.broadcast %cst_126 : f32 to vector<32x128xf32>
    %364 = arith.addf %362, %363 : vector<32x128xf32>
    %365 = arith.mulf %364, %354 : vector<32x128xf32>
    %cst_127 = arith.constant 0.254829586 : f32
    %366 = vector.broadcast %cst_127 : f32 to vector<32x128xf32>
    %367 = arith.addf %365, %366 : vector<32x128xf32>
    %368 = arith.mulf %367, %354 : vector<32x128xf32>
    %cst_128 = arith.constant 0.000000e+00 : f32
    %369 = vector.broadcast %cst_128 : f32 to vector<32x128xf32>
    %370 = arith.subf %369, %348 : vector<32x128xf32>
    %371 = arith.mulf %370, %348 : vector<32x128xf32>
    %372 = math.exp %371 : vector<32x128xf32>
    %373 = arith.mulf %368, %372 : vector<32x128xf32>
    %cst_129 = arith.constant 1.000000e+00 : f32
    %374 = vector.broadcast %cst_129 : f32 to vector<32x128xf32>
    %375 = arith.subf %374, %373 : vector<32x128xf32>
    %376 = arith.mulf %347, %375 : vector<32x128xf32>
    %cst_130 = arith.constant 1.000000e+00 : f32
    %377 = vector.broadcast %cst_130 : f32 to vector<32x128xf32>
    %378 = arith.addf %377, %376 : vector<32x128xf32>
    %379 = arith.mulf %340, %378 : vector<32x128xf32>
    %380 = arith.mulf %337, %379 : vector<32x128xf32>
    %c264 = arith.constant 264 : index
    %c0_131 = arith.constant 0 : index
    %381 = vector.load %arg2[%c264, %c0_131] : memref<400x256xf32, #tpu.memory_space<vmem>>, vector<128x32xf32>
    %cst_132 = arith.constant dense<0.000000e+00> : vector<32x32xf32>
    %382 = tpu.matmul %380, %381, %cst_132 {dimension_numbers = #tpu.dot_dimension_numbers<[1], [0], [0], [1], [0, 0, 1, 1], [], []>} : vector<32x128xf32>, vector<128x32xf32>, vector<32x32xf32> -> vector<32x32xf32>
    %c397 = arith.constant 397 : index
    %c0_133 = arith.constant 0 : index
    %383 = vector.load %arg2[%c397, %c0_133] : memref<400x256xf32, #tpu.memory_space<vmem>>, vector<1x32xf32>
    %384 = vector.broadcast %383 : vector<1x32xf32> to vector<32x32xf32>
    %385 = arith.addf %382, %384 : vector<32x32xf32>
    %386 = arith.addf %331, %385 : vector<32x32xf32>
    %c395 = arith.constant 395 : index
    %c0_134 = arith.constant 0 : index
    %387 = vector.load %arg2[%c395, %c0_134] : memref<400x256xf32, #tpu.memory_space<vmem>>, vector<1x32xf32>
    %c396 = arith.constant 396 : index
    %c0_135 = arith.constant 0 : index
    %388 = vector.load %arg2[%c396, %c0_135] : memref<400x256xf32, #tpu.memory_space<vmem>>, vector<1x32xf32>
    %cst_136 = arith.constant dense<0.000000e+00> : vector<32xf32>
    %389 = vector.multi_reduction <add>, %386, %cst_136 [1] : vector<32x32xf32> to vector<32xf32>
    %390 = vector.shape_cast %389 : vector<32xf32> to vector<32x1xf32>
    %cst_137 = arith.constant 3.200000e+01 : f32
    %391 = vector.broadcast %cst_137 : f32 to vector<32x1xf32>
    %392 = arith.divf %390, %391 : vector<32x1xf32>
    %393 = vector.broadcast %392 : vector<32x1xf32> to vector<32x32xf32>
    %394 = arith.subf %386, %393 : vector<32x32xf32>
    %395 = arith.mulf %394, %394 : vector<32x32xf32>
    %cst_138 = arith.constant dense<0.000000e+00> : vector<32xf32>
    %396 = vector.multi_reduction <add>, %395, %cst_138 [1] : vector<32x32xf32> to vector<32xf32>
    %397 = vector.shape_cast %396 : vector<32xf32> to vector<32x1xf32>
    %cst_139 = arith.constant 3.200000e+01 : f32
    %398 = vector.broadcast %cst_139 : f32 to vector<32x1xf32>
    %399 = arith.divf %397, %398 : vector<32x1xf32>
    %cst_140 = arith.constant 9.99999974E-6 : f32
    %400 = vector.broadcast %cst_140 : f32 to vector<32x1xf32>
    %401 = arith.addf %399, %400 : vector<32x1xf32>
    %402 = math.rsqrt %401 : vector<32x1xf32>
    %403 = vector.broadcast %402 : vector<32x1xf32> to vector<32x32xf32>
    %404 = arith.mulf %394, %403 : vector<32x32xf32>
    %405 = vector.broadcast %387 : vector<1x32xf32> to vector<32x32xf32>
    %406 = arith.mulf %404, %405 : vector<32x32xf32>
    %407 = vector.broadcast %388 : vector<1x32xf32> to vector<32x32xf32>
    %408 = arith.addf %406, %407 : vector<32x32xf32>
    %409 = vector.extract_strided_slice %408 {offsets = [0, 0], sizes = [8, 32], strides = [1, 1]} : vector<32x32xf32> to vector<8x32xf32>
    %410 = vector.extract_strided_slice %408 {offsets = [16, 0], sizes = [8, 32], strides = [1, 1]} : vector<32x32xf32> to vector<8x32xf32>
    %411 = tpu.concatenate %409, %410 in 0 : vector<8x32xf32>, vector<8x32xf32> -> vector<16x32xf32>
    %c120 = arith.constant 120 : index
    %c0_141 = arith.constant 0 : index
    %412 = vector.load %arg1[%c120, %c0_141] : memref<160x32xf32, #tpu.memory_space<vmem>>, vector<16x32xf32>
    %413 = arith.mulf %411, %412 : vector<16x32xf32>
    %c136 = arith.constant 136 : index
    %c0_142 = arith.constant 0 : index
    %414 = vector.load %arg1[%c136, %c0_142] : memref<160x32xf32, #tpu.memory_space<vmem>>, vector<16x32xf32>
    %415 = arith.addf %413, %414 : vector<16x32xf32>
    %416 = math.sqrt %11 : vector<16x1xf32>
    %417 = vector.broadcast %416 : vector<16x1xf32> to vector<16x32xf32>
    %418 = arith.mulf %415, %417 : vector<16x32xf32>
    %419 = vector.broadcast %4 : vector<16x1xf32> to vector<16x32xf32>
    %420 = arith.addf %418, %419 : vector<16x32xf32>
    %c56 = arith.constant 56 : index
    %c0_143 = arith.constant 0 : index
    %421 = vector.load %arg1[%c56, %c0_143] : memref<160x32xf32, #tpu.memory_space<vmem>>, vector<32x8xf32>
    %cst_144 = arith.constant dense<0.000000e+00> : vector<16x8xf32>
    %422 = tpu.matmul %420, %421, %cst_144 {dimension_numbers = #tpu.dot_dimension_numbers<[1], [0], [0], [1], [0, 0, 1, 1], [], []>} : vector<16x32xf32>, vector<32x8xf32>, vector<16x8xf32> -> vector<16x8xf32>
    %c155 = arith.constant 155 : index
    %c0_145 = arith.constant 0 : index
    %423 = vector.load %arg1[%c155, %c0_145] : memref<160x32xf32, #tpu.memory_space<vmem>>, vector<1x8xf32>
    %424 = vector.broadcast %423 : vector<1x8xf32> to vector<16x8xf32>
    %425 = arith.addf %422, %424 : vector<16x8xf32>
    %c0_146 = arith.constant 0 : index
    %c0_147 = arith.constant 0 : index
    %426 = vector.load %arg3[%c0_146, %c0_147] : memref<16x8xf32, #tpu.memory_space<vmem>>, vector<16x8xf32>
    tpu.vector_store %arg3[%c0_146, %c0_147], %425 {strides = array<i32>} : memref<16x8xf32, #tpu.memory_space<vmem>>, vector<16x8xf32>,
    return
  }
}

</mosaic_0001>

<llo_original>
// kernel: model_forward.1
$region0: #{model_forward.1}
  #allocation0 [shape = 'u32[]', space=smem, size = 0x4, offset = 0x4, fixed_abs, tag = 'smem constant byte address 0x4 - core index']
  #allocation1 [shape = 'u32[144,128]{1,0:T(1,128)}', space=vmem, size = 0x12000, scoped, tag = 'internal scratch']
  %s0 = inlined_call_operand.vmem [shape: f32[16,16], index: 0, kind: input, shape index: {}]
  %s1 = inlined_call_operand.vmem [shape: f32[160,32], index: 1, kind: input, shape index: {}]
  %s2 = inlined_call_operand.hbm [shape: f32[400,256], index: 2, kind: input, shape index: {}]
  %s3 = inlined_call_operand.vmem [shape: f32[16,8], index: 3, kind: output, shape index: {}]
  %s4 = sld [smem:[#allocation0]]
  $region26: #{model_forward.1} parent=0
    _
  %s6 = ssub.s32 1, %s4
  %s7 = scalar_select 0, %s6, %s4
  $region1: #{model_forward.1} parent=0
    #allocation2 [shape = 'u8[409600]{0}', space=vmem, size = 0x64000, scoped, tag = 'input window, operand 2, single buffered']
    #allocation3 [shape = 's32[1]{0}', space=sflag, size = 0x4, scoped, tag = 'scoped memory for model_forward.1']
    %8 = vsyncpa [#allocation3], 0
    // Predicated region
    $region2: #{model_forward.1} parent=1 // pred_check
      _
    $region3: #{model_forward.1} parent=1 // pred_check_branch
      %10 = sbr.rel (0) target = $region5
    $region4: #{model_forward.1} parent=1 // pred_region
      _
    $region5: #{model_forward.1} parent=1 // pred_fallthru
      _
    // Predicated region
    $region6: #{model_forward.1} parent=1 // pred_check
      _
    $region7: #{model_forward.1} parent=1 // pred_check_branch
      %12 = sbr.rel (0) target = $region9
    $region8: #{model_forward.1} parent=1 // pred_region
      _
    $region9: #{model_forward.1} parent=1 // pred_fallthru
      _
    // Predicated region
    $region10: #{model_forward.1} parent=1 // pred_check
      _
    $region11: #{model_forward.1} parent=1 // pred_check_branch
      %14 = sbr.rel (0) target = $region13
    $region12: #{model_forward.1} parent=1 // pred_region
      %s16 = ssub.s32 12800, 12800
      %17 = vsyncadd [#allocation3], %s16
      %s18 = sshll.u32 [#allocation2], 4
      %s19 = int_to_ptr.vmem [resolvable:$true] %s18
      %24 = dma.hbm_to_vmem [thread:$0]  %s2, 12800, %s19, [#allocation3], 256, 256, 16
    $region13: #{model_forward.1} parent=1 // pred_fallthru
      _
    // Predicated region
    $region14: #{model_forward.1} parent=1 // pred_check
      _
    $region15: #{model_forward.1} parent=1 // pred_check_branch
      %26 = sbr.rel (0) target = $region17
    $region16: #{model_forward.1} parent=1 // pred_region
      %27 = dma.done [#allocation3], 12800
    $region17: #{model_forward.1} parent=1 // pred_fallthru
      _
    %v28 = vld [vmem:[%s0] sm:$0xff]
    %v29 = vld [vmem:[%s0 + $0x8] sm:$0xff]
    %vm30 = vcmask 130048
    %v31 = vsel %vm30, %v28, 0.0
    %32 = vadd.xlane.f32.xlu0 %v31
    %v33 = vpop.xlane.xlu0 %32
    %v34 = vsel %vm30, %v29, 0.0
    %35 = vadd.xlane.f32.xlu0 %v34
    %v36 = vpop.xlane.xlu0 %35
    %v37 = vrcp.pop 16.0
    %v38 = vmul.f32 %v33, %v37
    %v39 = vmul.f32 %v36, %v37
    %v40 = vsub.f32 %v28, %v38
    %v41 = vsub.f32 %v29, %v39
    %v42 = vmul.f32 %v40, %v40
    %v43 = vmul.f32 %v41, %v41
    %v44 = vsel %vm30, %v42, 0.0
    %45 = vadd.xlane.f32.xlu0 %v44
    %v46 = vpop.xlane.xlu0 %45
    %v47 = vsel %vm30, %v43, 0.0
    %48 = vadd.xlane.f32.xlu0 %v47
    %v49 = vpop.xlane.xlu0 %48
    %v50 = vmul.f32 %v46, %v37
    %v51 = vmul.f32 %v49, %v37
    %v52 = vmax.f32 %v50, 1e-05
    %v53 = vmax.f32 %v51, 1e-05
    %v54 = vrsqrt.pop %v52
    %v55 = vrsqrt.pop %v53
    %v56 = vmul.f32 %v40, %v54
    %v57 = vmul.f32 %v41, %v55
    %v58 = vld [vmem:[%s1 + $0x58] sm:$0xff]
    %v59 = vld [vmem:[%s1 + $0x60] sm:$0xff]
    %v60 = vmul.f32 %v56, %v58
    %v61 = vmul.f32 %v57, %v59
    %v62 = vld [vmem:[%s1 + $0x68] sm:$0xff]
    %v63 = vld [vmem:[%s1 + $0x70] sm:$0xff]
    %v64 = vadd.f32 %v60, %v62
    %v65 = vadd.f32 %v61, %v63
    %v66 = vld [vmem:[%s1 + $0x20] sm:$0xff]
    %v67 = vld [vmem:[%s1 + $0x28] sm:$0xff]
    %v68 = vld [vmem:[%s1 + $0x98] sm:$0x1]
    %v69 = vlaneseq
    %v70 = vshrl.u32 %v69, 7
    %v71 = vsub.s32 0, %v70
    %v72 = vrot.slane %v68, %v71
    %v74 = vsel %vm30, %v64, 0
    %v77 = vsel %vm30, %v65, 0
    %79 = vmatprep.subr.mxu0 0.0
    %80 = vmatpush1.msra.mxu0 0.0
    %81 = vmatprep.subr.mxu0 0.0
    %82 = vmatpush1.msra.mxu0 0.0
    %83 = vmatprep.subr.mxu0 0.0
    %84 = vmatpush1.msra.mxu0 0.0
    %85 = vmatprep.subr.mxu0 0.0
    %86 = vmatpush1.msra.mxu0 0.0
    %87 = vmatprep.subr.mxu0 0.0
    %88 = vmatpush1.msra.mxu0 0.0
    %89 = vmatprep.subr.mxu0 0.0
    %90 = vmatpush1.msra.mxu0 0.0
    %91 = vmatprep.subr.mxu0 0.0
    %92 = vmatpush1.msra.mxu0 0.0
    %93 = vmatprep.subr.mxu0 0.0
    %94 = vmatpush1.msra.mxu0 0.0
    %95 = vmatprep.subr.mxu0 0.0
    %96 = vmatpush1.msra.mxu0 0.0
    %97 = vmatprep.subr.mxu0 0.0
    %98 = vmatpush1.msra.mxu0 0.0
    %99 = vmatprep.subr.mxu0 0.0
    %100 = vmatpush1.msra.mxu0 0.0
    %101 = vmatprep.subr.mxu0 0.0
    %102 = vmatpush1.msra.mxu0 0.0
    %103 = vmatprep.subr.mxu0 0.0
    %104 = vmatpush1.msra.mxu0 0.0
    %105 = vmatprep.subr.mxu0 0.0
    %106 = vmatpush1.msra.mxu0 0.0
    %107 = vmatprep.subr.mxu0 0.0
    %108 = vmatpush1.msra.mxu0 %v67
    %109 = vmatprep.subr.mxu0 0.0
    %110 = vmatpush1.msra.mxu0 %v66
    %111 = vmatprep.subr.mxu0 0.0
    %112 = vmatpush2.msra.mxu0 0.0
    %113 = vmatprep.subr.mxu0 0.0
    %114 = vmatpush2.msra.mxu0 0.0
    %115 = vmatprep.subr.mxu0 0.0
    %116 = vmatpush2.msra.mxu0 0.0
    %117 = vmatprep.subr.mxu0 0.0
    %118 = vmatpush2.msra.mxu0 0.0
    %119 = vmatprep.subr.mxu0 0.0
    %120 = vmatpush2.msra.mxu0 0.0
    %121 = vmatprep.subr.mxu0 0.0
    %122 = vmatpush2.msra.mxu0 0.0
    %123 = vmatprep.subr.mxu0 0.0
    %124 = vmatpush2.msra.mxu0 0.0
    %125 = vmatprep.subr.mxu0 0.0
    %126 = vmatpush2.msra.mxu0 0.0
    %127 = vmatprep.subr.mxu0 0.0
    %128 = vmatpush2.msra.mxu0 0.0
    %129 = vmatprep.subr.mxu0 0.0
    %130 = vmatpush2.msra.mxu0 0.0
    %131 = vmatprep.subr.mxu0 0.0
    %132 = vmatpush2.msra.mxu0 0.0
    %133 = vmatprep.subr.mxu0 0.0
    %134 = vmatpush2.msra.mxu0 0.0
    %135 = vmatprep.subr.mxu0 0.0
    %136 = vmatpush2.msra.mxu0 0.0
    %137 = vmatprep.subr.mxu0 0.0
    %138 = vmatpush2.msra.mxu0 0.0
    %139 = vmatprep.subr.mxu0 0.0
    %140 = vmatpush2.msra.mxu0 0.0
    %141 = vmatprep.subr.mxu0 0.0
    %142 = vmatpush2.msra.mxu0 0.0
    %143 = vmatprep.mubr.f32.mxu0 0.0
    %144 = vmatmul.mubr.f32.gmra.mxu0 %v74
    %v145 = vpop.f32.mrf.mxu0
    %v146 = vadd.f32 %v72, %v145
    %v147 = vpop.f32.mrf.mxu0
    %148 = vmatprep.mubr.f32.mxu0 0.0
    %149 = vmatmul.mubr.f32.gmra.mxu0 %v77
    %v150 = vpop.f32.mrf.mxu0
    %v151 = vadd.f32 %v72, %v150
    %v152 = vpop.f32.mrf.mxu0
    %153 = vdwg.mxu0
    %v154 = vld [vmem:[%s1 + $0x99] sm:$0x1]
    %v155 = vld [vmem:[%s1 + $0x9a] sm:$0x1]
    %vm156 = vcmask 261120
    %v157 = vsel %vm156, %v146, 0.0
    %158 = vadd.xlane.f32.xlu0 %v157
    %v159 = vpop.xlane.xlu0 %158
    %v160 = vsel %vm156, %v151, 0.0
    %161 = vadd.xlane.f32.xlu0 %v160
    %v162 = vpop.xlane.xlu0 %161
    %v163 = vrcp.pop 32.0
    %v164 = vmul.f32 %v159, %v163
    %v165 = vmul.f32 %v162, %v163
    %v166 = vsub.f32 %v146, %v164
    %v167 = vsub.f32 %v151, %v165
    %v168 = vmul.f32 %v166, %v166
    %v169 = vmul.f32 %v167, %v167
    %v170 = vsel %vm156, %v168, 0.0
    %171 = vadd.xlane.f32.xlu0 %v170
    %v172 = vpop.xlane.xlu0 %171
    %v173 = vsel %vm156, %v169, 0.0
    %174 = vadd.xlane.f32.xlu0 %v173
    %v175 = vpop.xlane.xlu0 %174
    %v176 = vmul.f32 %v172, %v163
    %v177 = vmul.f32 %v175, %v163
    %v178 = vadd.f32 %v176, 1e-05
    %v179 = vadd.f32 %v177, 1e-05
    %v180 = vrsqrt.pop %v178
    %v181 = vrsqrt.pop %v179
    %v182 = vmul.f32 %v166, %v180
    %v183 = vmul.f32 %v167, %v181
    %v184 = vlaneseq
    %v185 = vshrl.u32 %v184, 7
    %v186 = vsub.s32 0, %v185
    %v187 = vrot.slane %v154, %v186
    %v188 = vmul.f32 %v182, %v187
    %v189 = vmul.f32 %v183, %v187
    %v190 = vlaneseq
    %v191 = vshrl.u32 %v190, 7
    %v192 = vsub.s32 0, %v191
    %v193 = vrot.slane %v155, %v192
    %v194 = vadd.f32 %v188, %v193
    %v195 = vadd.f32 %v189, %v193
    %v196 = vld [vmem:[%s1 + $0x30] sm:$0xff]
    %v197 = vld [vmem:[%s1] sm:$0xff]
    %v198 = vld [vmem:[%s1 + $0x8] sm:$0xff]
    %v199 = vld [vmem:[%s1 + $0x10] sm:$0xff]
    %v200 = vld [vmem:[%s1 + $0x18] sm:$0xff]
    %v201 = vld [vmem:[#allocation2] sm:$0xff]
    %v202 = vld [vmem:[#allocation2 + $0x10] sm:$0xff]
    %v203 = vld [vmem:[#allocation2 + $0x20] sm:$0xff]
    %v204 = vld [vmem:[#allocation2 + $0x30] sm:$0xff]
    %v205 = vld [vmem:[#allocation2 + $0x8] sm:$0xff]
    %v206 = vld [vmem:[#allocation2 + $0x18] sm:$0xff]
    %v207 = vld [vmem:[#allocation2 + $0x28] sm:$0xff]
    %v208 = vld [vmem:[#allocation2 + $0x38] sm:$0xff]
    %v210 = vsel %vm156, %v194, 0
    %v213 = vsel %vm156, %v196, 0
    %v216 = vsel %vm156, %v195, 0
    %218 = vmatprep.subr.mxu0 0.0
    %219 = vmatpush1.msra.mxu0 0.0
    %220 = vmatprep.subr.mxu0 0.0
    %221 = vmatpush1.msra.mxu0 0.0
    %222 = vmatprep.subr.mxu0 0.0
    %223 = vmatpush1.msra.mxu0 0.0
    %224 = vmatprep.subr.mxu0 0.0
    %225 = vmatpush1.msra.mxu0 0.0
    %226 = vmatprep.subr.mxu0 0.0
    %227 = vmatpush1.msra.mxu0 0.0
    %228 = vmatprep.subr.mxu0 0.0
    %229 = vmatpush1.msra.mxu0 0.0
    %230 = vmatprep.subr.mxu0 0.0
    %231 = vmatpush1.msra.mxu0 0.0
    %232 = vmatprep.subr.mxu0 0.0
    %233 = vmatpush1.msra.mxu0 0.0
    %234 = vmatprep.subr.mxu0 0.0
    %235 = vmatpush1.msra.mxu0 0.0
    %236 = vmatprep.subr.mxu0 0.0
    %237 = vmatpush1.msra.mxu0 0.0
    %238 = vmatprep.subr.mxu0 0.0
    %239 = vmatpush1.msra.mxu0 0.0
    %240 = vmatprep.subr.mxu0 0.0
    %241 = vmatpush1.msra.mxu0 0.0
    %242 = vmatprep.subr.mxu0 0.0
    %243 = vmatpush1.msra.mxu0 %v204
    %244 = vmatprep.subr.mxu0 0.0
    %245 = vmatpush1.msra.mxu0 %v203
    %246 = vmatprep.subr.mxu0 0.0
    %247 = vmatpush1.msra.mxu0 %v202
    %248 = vmatprep.subr.mxu0 0.0
    %249 = vmatpush1.msra.mxu0 %v201
    %250 = vmatprep.subr.mxu0 0.0
    %251 = vmatpush2.msra.mxu0 0.0
    %252 = vmatprep.subr.mxu0 0.0
    %253 = vmatpush2.msra.mxu0 0.0
    %254 = vmatprep.subr.mxu0 0.0
    %255 = vmatpush2.msra.mxu0 0.0
    %256 = vmatprep.subr.mxu0 0.0
    %257 = vmatpush2.msra.mxu0 0.0
    %258 = vmatprep.subr.mxu0 0.0
    %259 = vmatpush2.msra.mxu0 0.0
    %260 = vmatprep.subr.mxu0 0.0
    %261 = vmatpush2.msra.mxu0 0.0
    %262 = vmatprep.subr.mxu0 0.0
    %263 = vmatpush2.msra.mxu0 0.0
    %264 = vmatprep.subr.mxu0 0.0
    %265 = vmatpush2.msra.mxu0 0.0
    %266 = vmatprep.subr.mxu0 0.0
    %267 = vmatpush2.msra.mxu0 0.0
    %268 = vmatprep.subr.mxu0 0.0
    %269 = vmatpush2.msra.mxu0 0.0
    %270 = vmatprep.subr.mxu0 0.0
    %271 = vmatpush2.msra.mxu0 0.0
    %272 = vmatprep.subr.mxu0 0.0
    %273 = vmatpush2.msra.mxu0 0.0
    %274 = vmatprep.subr.mxu0 0.0
    %275 = vmatpush2.msra.mxu0 0.0
    %276 = vmatprep.subr.mxu0 0.0
    %277 = vmatpush2.msra.mxu0 0.0
    %278 = vmatprep.subr.mxu0 0.0
    %279 = vmatpush2.msra.mxu0 0.0
    %280 = vmatprep.subr.mxu0 0.0
    %281 = vmatpush2.msra.mxu0 0.0
    %282 = vmatprep.mubr.f32.mxu0 0.0
    %283 = vmatmul.mubr.f32.gmra.mxu0 %v210
    %v284 = vpop.f32.mrf.mxu0
    %v285 = vadd.f32 0.0, %v284
    %v286 = vpop.f32.mrf.mxu0
    %287 = vmatprep.mubr.f32.mxu0 0.0
    %288 = vmatmul.mubr.f32.gmra.mxu0 %v213
    %v289 = vpop.f32.mrf.mxu0
    %v290 = vadd.f32 0.0, %v289
    %v291 = vpop.f32.mrf.mxu0
    %292 = vmatprep.mubr.f32.mxu0 0.0
    %293 = vmatmul.mubr.f32.gmra.mxu0 %v216
    %v294 = vpop.f32.mrf.mxu0
    %v295 = vadd.f32 0.0, %v294
    %v296 = vpop.f32.mrf.mxu0
    %297 = vmatprep.mubr.f32.mxu0 0.0
    %298 = vmatmul.mubr.f32.gmra.mxu0 %v213
    %v299 = vpop.f32.mrf.mxu0
    %v300 = vadd.f32 0.0, %v299
    %v301 = vpop.f32.mrf.mxu0
    %302 = vdwg.mxu0
    %v303 = vsub.f32 0.0, %v285
    %v304 = vsub.f32 0.0, %v290
    %v305 = vsub.f32 0.0, %v295
    %v306 = vsub.f32 0.0, %v300
    %v307 = vmul.f32 %v303, 1.442695
    %v308 = vpow.pop %v307
    %v309 = vmul.f32 %v304, 1.442695
    %v310 = vpow.pop %v309
    %v311 = vmul.f32 %v305, 1.442695
    %v312 = vpow.pop %v311
    %v313 = vmul.f32 %v306, 1.442695
    %v314 = vpow.pop %v313
    %v315 = vadd.f32 %v308, 1.0
    %v316 = vadd.f32 %v310, 1.0
    %v317 = vadd.f32 %v312, 1.0
    %v318 = vadd.f32 %v314, 1.0
    %v319 = vrcp.pop %v315
    %v320 = vmul.f32 1.0, %v319
    %v321 = vrcp.pop %v316
    %v322 = vmul.f32 1.0, %v321
    %v323 = vrcp.pop %v317
    %v324 = vmul.f32 1.0, %v323
    %v325 = vrcp.pop %v318
    %v326 = vmul.f32 1.0, %v325
    %331 = vrot.lane.b32.xlu0 %v285, 96
    %v332 = vpop.permute.xlu0 %331
    %333 = vrot.lane.b32.xlu0 %v290, 96
    %v334 = vpop.permute.xlu0 %333
    %335 = vrot.lane.b32.xlu0 %v295, 96
    %v336 = vpop.permute.xlu0 %335
    %337 = vrot.lane.b32.xlu0 %v300, 96
    %v338 = vpop.permute.xlu0 %337
    %vm339 = vcmask 64512
    %v340 = vsel %vm339, %v285, 0
    %v342 = vsel %vm339, %v290, 0
    %v344 = vsel %vm339, %v295, 0
    %v346 = vsel %vm339, %v300, 0
    %v348 = vsel %vm339, %v332, 0
    %v350 = vsel %vm339, %v334, 0
    %v352 = vsel %vm339, %v336, 0
    %v354 = vsel %vm339, %v338, 0
    %356 = vmatprep.subr.mxu0 0.0
    %357 = vmatpush1.xpose.msra.mxu0 0.0
    %358 = vmatprep.subr.mxu0 0.0
    %359 = vmatpush1.xpose.msra.mxu0 0.0
    %360 = vmatprep.subr.mxu0 0.0
    %361 = vmatpush1.xpose.msra.mxu0 0.0
    %362 = vmatprep.subr.mxu0 0.0
    %363 = vmatpush1.xpose.msra.mxu0 0.0
    %364 = vmatprep.subr.mxu0 0.0
    %365 = vmatpush1.xpose.msra.mxu0 0.0
    %366 = vmatprep.subr.mxu0 0.0
    %367 = vmatpush1.xpose.msra.mxu0 0.0
    %368 = vmatprep.subr.mxu0 0.0
    %369 = vmatpush1.xpose.msra.mxu0 0.0
    %370 = vmatprep.subr.mxu0 0.0
    %371 = vmatpush1.xpose.msra.mxu0 0.0
    %372 = vmatprep.subr.mxu0 0.0
    %373 = vmatpush1.xpose.msra.mxu0 0.0
    %374 = vmatprep.subr.mxu0 0.0
    %375 = vmatpush1.xpose.msra.mxu0 0.0
    %376 = vmatprep.subr.mxu0 0.0
    %377 = vmatpush1.xpose.msra.mxu0 0.0
    %378 = vmatprep.subr.mxu0 0.0
    %379 = vmatpush1.xpose.msra.mxu0 0.0
    %380 = vmatprep.subr.mxu0 0.0
    %381 = vmatpush1.xpose.msra.mxu0 %v354
    %382 = vmatprep.subr.mxu0 0.0
    %383 = vmatpush1.xpose.msra.mxu0 %v352
    %384 = vmatprep.subr.mxu0 0.0
    %385 = vmatpush1.xpose.msra.mxu0 %v350
    %386 = vmatprep.subr.mxu0 0.0
    %387 = vmatpush1.xpose.msra.mxu0 %v348
    %388 = vmatprep.subr.mxu0 0.0
    %389 = vmatpush2.xpose.msra.mxu0 0.0
    %390 = vmatprep.subr.mxu0 0.0
    %391 = vmatpush2.xpose.msra.mxu0 0.0
    %392 = vmatprep.subr.mxu0 0.0
    %393 = vmatpush2.xpose.msra.mxu0 0.0
    %394 = vmatprep.subr.mxu0 0.0
    %395 = vmatpush2.xpose.msra.mxu0 0.0
    %396 = vmatprep.subr.mxu0 0.0
    %397 = vmatpush2.xpose.msra.mxu0 0.0
    %398 = vmatprep.subr.mxu0 0.0
    %399 = vmatpush2.xpose.msra.mxu0 0.0
    %400 = vmatprep.subr.mxu0 0.0
    %401 = vmatpush2.xpose.msra.mxu0 0.0
    %402 = vmatprep.subr.mxu0 0.0
    %403 = vmatpush2.xpose.msra.mxu0 0.0
    %404 = vmatprep.subr.mxu0 0.0
    %405 = vmatpush2.xpose.msra.mxu0 0.0
    %406 = vmatprep.subr.mxu0 0.0
    %407 = vmatpush2.xpose.msra.mxu0 0.0
    %408 = vmatprep.subr.mxu0 0.0
    %409 = vmatpush2.xpose.msra.mxu0 0.0
    %410 = vmatprep.subr.mxu0 0.0
    %411 = vmatpush2.xpose.msra.mxu0 0.0
    %412 = vmatprep.subr.mxu0 0.0
    %413 = vmatpush2.xpose.msra.mxu0 0.0
    %414 = vmatprep.subr.mxu0 0.0
    %415 = vmatpush2.xpose.msra.mxu0 0.0
    %416 = vmatprep.subr.mxu0 0.0
    %417 = vmatpush2.xpose.msra.mxu0 0.0
    %418 = vmatprep.subr.mxu0 0.0
    %419 = vmatpush2.xpose.msra.mxu0 0.0
    %420 = vmatprep.mubr.f32.mxu0 0.0
    %421 = vmatmul.mubr.f32.gmra.mxu0 %v340
    %v422 = vpop.f32.mrf.mxu0
    %v423 = vadd.f32 %v197, %v422
    %v424 = vpop.f32.mrf.mxu0
    %425 = vmatprep.mubr.f32.mxu0 0.0
    %426 = vmatmul.mubr.f32.gmra.mxu0 %v342
    %v427 = vpop.f32.mrf.mxu0
    %v428 = vadd.f32 %v198, %v427
    %v429 = vpop.f32.mrf.mxu0
    %430 = vmatprep.mubr.f32.mxu0 0.0
    %431 = vmatmul.mubr.f32.gmra.mxu0 %v344
    %v432 = vpop.f32.mrf.mxu0
    %v433 = vadd.f32 %v199, %v432
    %v434 = vpop.f32.mrf.mxu0
    %435 = vmatprep.mubr.f32.mxu0 0.0
    %436 = vmatmul.mubr.f32.gmra.mxu0 %v346
    %v437 = vpop.f32.mrf.mxu0
    %v438 = vadd.f32 %v200, %v437
    %v439 = vpop.f32.mrf.mxu0
    %440 = vdwg.mxu0
    %v441 = vsel %vm156, %v423, -inf
    %442 = vmax.xlane.f32.xlu0 %v441
    %v443 = vpop.xlane.xlu0 %442
    %v444 = vsel %vm156, %v428, -inf
    %445 = vmax.xlane.f32.xlu0 %v444
    %v446 = vpop.xlane.xlu0 %445
    %v447 = vsel %vm156, %v433, -inf
    %448 = vmax.xlane.f32.xlu0 %v447
    %v449 = vpop.xlane.xlu0 %448
    %v450 = vsel %vm156, %v438, -inf
    %451 = vmax.xlane.f32.xlu0 %v450
    %v452 = vpop.xlane.xlu0 %451
    %v453 = vsub.f32 %v423, %v443
    %v454 = vsub.f32 %v428, %v446
    %v455 = vsub.f32 %v433, %v449
    %v456 = vsub.f32 %v438, %v452
    %v457 = vmul.f32 %v453, 1.442695
    %v458 = vpow.pop %v457
    %v459 = vmul.f32 %v454, 1.442695
    %v460 = vpow.pop %v459
    %v461 = vmul.f32 %v455, 1.442695
    %v462 = vpow.pop %v461
    %v463 = vmul.f32 %v456, 1.442695
    %v464 = vpow.pop %v463
    %v465 = vsel %vm156, %v458, 0.0
    %466 = vadd.xlane.f32.xlu0 %v465
    %v467 = vpop.xlane.xlu0 %466
    %v468 = vsel %vm156, %v460, 0.0
    %469 = vadd.xlane.f32.xlu0 %v468
    %v470 = vpop.xlane.xlu0 %469
    %v471 = vsel %vm156, %v462, 0.0
    %472 = vadd.xlane.f32.xlu0 %v471
    %v473 = vpop.xlane.xlu0 %472
    %v474 = vsel %vm156, %v464, 0.0
    %475 = vadd.xlane.f32.xlu0 %v474
    %v476 = vpop.xlane.xlu0 %475
    %v477 = vrcp.pop %v467
    %v478 = vrcp.pop %v470
    %v479 = vrcp.pop %v473
    %v480 = vrcp.pop %v476
    %v481 = vmul.f32 %v458, %v477
    %v482 = vmul.f32 %v460, %v478
    %v483 = vmul.f32 %v462, %v479
    %v484 = vmul.f32 %v464, %v480
    %485 = vrot.lane.b32.xlu0 %v285, 64
    %v486 = vpop.permute.xlu0 %485
    %487 = vrot.lane.b32.xlu0 %v290, 64
    %v488 = vpop.permute.xlu0 %487
    %489 = vrot.lane.b32.xlu0 %v295, 64
    %v490 = vpop.permute.xlu0 %489
    %491 = vrot.lane.b32.xlu0 %v300, 64
    %v492 = vpop.permute.xlu0 %491
    %v498 = vsel %vm156, %v481, 0
    %v501 = vsel %vm156, %v482, 0
    %v504 = vsel %vm156, %v483, 0
    %v507 = vsel %vm156, %v484, 0
    %509 = vmatprep.subr.mxu0 0.0
    %510 = vmatpush1.msra.mxu0 0.0
    %511 = vmatprep.subr.mxu0 0.0
    %512 = vmatpush1.msra.mxu0 0.0
    %513 = vmatprep.subr.mxu0 0.0
    %514 = vmatpush1.msra.mxu0 0.0
    %515 = vmatprep.subr.mxu0 0.0
    %516 = vmatpush1.msra.mxu0 0.0
    %517 = vmatprep.subr.mxu0 0.0
    %518 = vmatpush1.msra.mxu0 0.0
    %519 = vmatprep.subr.mxu0 0.0
    %520 = vmatpush1.msra.mxu0 0.0
    %521 = vmatprep.subr.mxu0 0.0
    %522 = vmatpush1.msra.mxu0 0.0
    %523 = vmatprep.subr.mxu0 0.0
    %524 = vmatpush1.msra.mxu0 0.0
    %525 = vmatprep.subr.mxu0 0.0
    %526 = vmatpush1.msra.mxu0 0.0
    %527 = vmatprep.subr.mxu0 0.0
    %528 = vmatpush1.msra.mxu0 0.0
    %529 = vmatprep.subr.mxu0 0.0
    %530 = vmatpush1.msra.mxu0 0.0
    %531 = vmatprep.subr.mxu0 0.0
    %532 = vmatpush1.msra.mxu0 0.0
    %533 = vmatprep.subr.mxu0 0.0
    %534 = vmatpush1.msra.mxu0 %v492
    %535 = vmatprep.subr.mxu0 0.0
    %536 = vmatpush1.msra.mxu0 %v490
    %537 = vmatprep.subr.mxu0 0.0
    %538 = vmatpush1.msra.mxu0 %v488
    %539 = vmatprep.subr.mxu0 0.0
    %540 = vmatpush1.msra.mxu0 %v486
    %541 = vmatprep.subr.mxu0 0.0
    %542 = vmatpush2.msra.mxu0 0.0
    %543 = vmatprep.subr.mxu0 0.0
    %544 = vmatpush2.msra.mxu0 0.0
    %545 = vmatprep.subr.mxu0 0.0
    %546 = vmatpush2.msra.mxu0 0.0
    %547 = vmatprep.subr.mxu0 0.0
    %548 = vmatpush2.msra.mxu0 0.0
    %549 = vmatprep.subr.mxu0 0.0
    %550 = vmatpush2.msra.mxu0 0.0
    %551 = vmatprep.subr.mxu0 0.0
    %552 = vmatpush2.msra.mxu0 0.0
    %553 = vmatprep.subr.mxu0 0.0
    %554 = vmatpush2.msra.mxu0 0.0
    %555 = vmatprep.subr.mxu0 0.0
    %556 = vmatpush2.msra.mxu0 0.0
    %557 = vmatprep.subr.mxu0 0.0
    %558 = vmatpush2.msra.mxu0 0.0
    %559 = vmatprep.subr.mxu0 0.0
    %560 = vmatpush2.msra.mxu0 0.0
    %561 = vmatprep.subr.mxu0 0.0
    %562 = vmatpush2.msra.mxu0 0.0
    %563 = vmatprep.subr.mxu0 0.0
    %564 = vmatpush2.msra.mxu0 0.0
    %565 = vmatprep.subr.mxu0 0.0
    %566 = vmatpush2.msra.mxu0 0.0
    %567 = vmatprep.subr.mxu0 0.0
    %568 = vmatpush2.msra.mxu0 0.0
    %569 = vmatprep.subr.mxu0 0.0
    %570 = vmatpush2.msra.mxu0 0.0
    %571 = vmatprep.subr.mxu0 0.0
    %572 = vmatpush2.msra.mxu0 0.0
    %573 = vmatprep.mubr.f32.mxu0 0.0
    %574 = vmatmul.mubr.f32.gmra.mxu0 %v498
    %v575 = vpop.f32.mrf.mxu0
    %v576 = vadd.f32 0.0, %v575
    %v577 = vpop.f32.mrf.mxu0
    %578 = vmatprep.mubr.f32.mxu0 0.0
    %579 = vmatmul.mubr.f32.gmra.mxu0 %v501
    %v580 = vpop.f32.mrf.mxu0
    %v581 = vadd.f32 0.0, %v580
    %v582 = vpop.f32.mrf.mxu0
    %583 = vmatprep.mubr.f32.mxu0 0.0
    %584 = vmatmul.mubr.f32.gmra.mxu0 %v504
    %v585 = vpop.f32.mrf.mxu0
    %v586 = vadd.f32 0.0, %v585
    %v587 = vpop.f32.mrf.mxu0
    %588 = vmatprep.mubr.f32.mxu0 0.0
    %589 = vmatmul.mubr.f32.gmra.mxu0 %v507
    %v590 = vpop.f32.mrf.mxu0
    %v591 = vadd.f32 0.0, %v590
    %v592 = vpop.f32.mrf.mxu0
    %593 = vdwg.mxu0
    %594 = vrot.lane.b32.xlu0 %v285, 120
    %v595 = vpop.permute.xlu0 %594
    %596 = vrot.lane.b32.xlu0 %v290, 120
    %v597 = vpop.permute.xlu0 %596
    %598 = vrot.lane.b32.xlu0 %v295, 120
    %v599 = vpop.permute.xlu0 %598
    %600 = vrot.lane.b32.xlu0 %v300, 120
    %v601 = vpop.permute.xlu0 %600
    %602 = vrot.lane.b32.xlu0 %v285, 88
    %v603 = vpop.permute.xlu0 %602
    %604 = vrot.lane.b32.xlu0 %v290, 88
    %v605 = vpop.permute.xlu0 %604
    %606 = vrot.lane.b32.xlu0 %v295, 88
    %v607 = vpop.permute.xlu0 %606
    %608 = vrot.lane.b32.xlu0 %v300, 88
    %v609 = vpop.permute.xlu0 %608
    %v610 = vsel %vm339, %v595, 0
    %v612 = vsel %vm339, %v597, 0
    %v614 = vsel %vm339, %v599, 0
    %v616 = vsel %vm339, %v601, 0
    %v618 = vsel %vm339, %v603, 0
    %v620 = vsel %vm339, %v605, 0
    %v622 = vsel %vm339, %v607, 0
    %v624 = vsel %vm339, %v609, 0
    %626 = vmatprep.subr.mxu0 0.0
    %627 = vmatpush1.xpose.msra.mxu0 0.0
    %628 = vmatprep.subr.mxu0 0.0
    %629 = vmatpush1.xpose.msra.mxu0 0.0
    %630 = vmatprep.subr.mxu0 0.0
    %631 = vmatpush1.xpose.msra.mxu0 0.0
    %632 = vmatprep.subr.mxu0 0.0
    %633 = vmatpush1.xpose.msra.mxu0 0.0
    %634 = vmatprep.subr.mxu0 0.0
    %635 = vmatpush1.xpose.msra.mxu0 0.0
    %636 = vmatprep.subr.mxu0 0.0
    %637 = vmatpush1.xpose.msra.mxu0 0.0
    %638 = vmatprep.subr.mxu0 0.0
    %639 = vmatpush1.xpose.msra.mxu0 0.0
    %640 = vmatprep.subr.mxu0 0.0
    %641 = vmatpush1.xpose.msra.mxu0 0.0
    %642 = vmatprep.subr.mxu0 0.0
    %643 = vmatpush1.xpose.msra.mxu0 0.0
    %644 = vmatprep.subr.mxu0 0.0
    %645 = vmatpush1.xpose.msra.mxu0 0.0
    %646 = vmatprep.subr.mxu0 0.0
    %647 = vmatpush1.xpose.msra.mxu0 0.0
    %648 = vmatprep.subr.mxu0 0.0
    %649 = vmatpush1.xpose.msra.mxu0 0.0
    %650 = vmatprep.subr.mxu0 0.0
    %651 = vmatpush1.xpose.msra.mxu0 %v624
    %652 = vmatprep.subr.mxu0 0.0
    %653 = vmatpush1.xpose.msra.mxu0 %v622
    %654 = vmatprep.subr.mxu0 0.0
    %655 = vmatpush1.xpose.msra.mxu0 %v620
    %656 = vmatprep.subr.mxu0 0.0
    %657 = vmatpush1.xpose.msra.mxu0 %v618
    %658 = vmatprep.subr.mxu0 0.0
    %659 = vmatpush2.xpose.msra.mxu0 0.0
    %660 = vmatprep.subr.mxu0 0.0
    %661 = vmatpush2.xpose.msra.mxu0 0.0
    %662 = vmatprep.subr.mxu0 0.0
    %663 = vmatpush2.xpose.msra.mxu0 0.0
    %664 = vmatprep.subr.mxu0 0.0
    %665 = vmatpush2.xpose.msra.mxu0 0.0
    %666 = vmatprep.subr.mxu0 0.0
    %667 = vmatpush2.xpose.msra.mxu0 0.0
    %668 = vmatprep.subr.mxu0 0.0
    %669 = vmatpush2.xpose.msra.mxu0 0.0
    %670 = vmatprep.subr.mxu0 0.0
    %671 = vmatpush2.xpose.msra.mxu0 0.0
    %672 = vmatprep.subr.mxu0 0.0
    %673 = vmatpush2.xpose.msra.mxu0 0.0
    %674 = vmatprep.subr.mxu0 0.0
    %675 = vmatpush2.xpose.msra.mxu0 0.0
    %676 = vmatprep.subr.mxu0 0.0
    %677 = vmatpush2.xpose.msra.mxu0 0.0
    %678 = vmatprep.subr.mxu0 0.0
    %679 = vmatpush2.xpose.msra.mxu0 0.0
    %680 = vmatprep.subr.mxu0 0.0
    %681 = vmatpush2.xpose.msra.mxu0 0.0
    %682 = vmatprep.subr.mxu0 0.0
    %683 = vmatpush2.xpose.msra.mxu0 0.0
    %684 = vmatprep.subr.mxu0 0.0
    %685 = vmatpush2.xpose.msra.mxu0 0.0
    %686 = vmatprep.subr.mxu0 0.0
    %687 = vmatpush2.xpose.msra.mxu0 0.0
    %688 = vmatprep.subr.mxu0 0.0
    %689 = vmatpush2.xpose.msra.mxu0 0.0
    %690 = vmatprep.mubr.f32.mxu0 0.0
    %691 = vmatmul.mubr.f32.gmra.mxu0 %v610
    %v692 = vpop.f32.mrf.mxu0
    %v693 = vadd.f32 %v197, %v692
    %v694 = vpop.f32.mrf.mxu0
    %695 = vmatprep.mubr.f32.mxu0 0.0
    %696 = vmatmul.mubr.f32.gmra.mxu0 %v612
    %v697 = vpop.f32.mrf.mxu0
    %v698 = vadd.f32 %v198, %v697
    %v699 = vpop.f32.mrf.mxu0
    %700 = vmatprep.mubr.f32.mxu0 0.0
    %701 = vmatmul.mubr.f32.gmra.mxu0 %v614
    %v702 = vpop.f32.mrf.mxu0
    %v703 = vadd.f32 %v199, %v702
    %v704 = vpop.f32.mrf.mxu0
    %705 = vmatprep.mubr.f32.mxu0 0.0
    %706 = vmatmul.mubr.f32.gmra.mxu0 %v616
    %v707 = vpop.f32.mrf.mxu0
    %v708 = vadd.f32 %v200, %v707
    %v709 = vpop.f32.mrf.mxu0
    %710 = vdwg.mxu0
    %v711 = vsel %vm156, %v693, -inf
    %712 = vmax.xlane.f32.xlu0 %v711
    %v713 = vpop.xlane.xlu0 %712
    %v714 = vsel %vm156, %v698, -inf
    %715 = vmax.xlane.f32.xlu0 %v714
    %v716 = vpop.xlane.xlu0 %715
    %v717 = vsel %vm156, %v703, -inf
    %718 = vmax.xlane.f32.xlu0 %v717
    %v719 = vpop.xlane.xlu0 %718
    %v720 = vsel %vm156, %v708, -inf
    %721 = vmax.xlane.f32.xlu0 %v720
    %v722 = vpop.xlane.xlu0 %721
    %v723 = vsub.f32 %v693, %v713
    %v724 = vsub.f32 %v698, %v716
    %v725 = vsub.f32 %v703, %v719
    %v726 = vsub.f32 %v708, %v722
    %v727 = vmul.f32 %v723, 1.442695
    %v728 = vpow.pop %v727
    %v729 = vmul.f32 %v724, 1.442695
    %v730 = vpow.pop %v729
    %v731 = vmul.f32 %v725, 1.442695
    %v732 = vpow.pop %v731
    %v733 = vmul.f32 %v726, 1.442695
    %v734 = vpow.pop %v733
    %v735 = vsel %vm156, %v728, 0.0
    %736 = vadd.xlane.f32.xlu0 %v735
    %v737 = vpop.xlane.xlu0 %736
    %v738 = vsel %vm156, %v730, 0.0
    %739 = vadd.xlane.f32.xlu0 %v738
    %v740 = vpop.xlane.xlu0 %739
    %v741 = vsel %vm156, %v732, 0.0
    %742 = vadd.xlane.f32.xlu0 %v741
    %v743 = vpop.xlane.xlu0 %742
    %v744 = vsel %vm156, %v734, 0.0
    %745 = vadd.xlane.f32.xlu0 %v744
    %v746 = vpop.xlane.xlu0 %745
    %v747 = vrcp.pop %v737
    %v748 = vrcp.pop %v740
    %v749 = vrcp.pop %v743
    %v750 = vrcp.pop %v746
    %v751 = vmul.f32 %v728, %v747
    %v752 = vmul.f32 %v730, %v748
    %v753 = vmul.f32 %v732, %v749
    %v754 = vmul.f32 %v734, %v750
    %755 = vrot.lane.b32.xlu0 %v285, 56
    %v756 = vpop.permute.xlu0 %755
    %757 = vrot.lane.b32.xlu0 %v290, 56
    %v758 = vpop.permute.xlu0 %757
    %759 = vrot.lane.b32.xlu0 %v295, 56
    %v760 = vpop.permute.xlu0 %759
    %761 = vrot.lane.b32.xlu0 %v300, 56
    %v762 = vpop.permute.xlu0 %761
    %v768 = vsel %vm156, %v751, 0
    %v771 = vsel %vm156, %v752, 0
    %v774 = vsel %vm156, %v753, 0
    %v777 = vsel %vm156, %v754, 0
    %779 = vmatprep.subr.mxu0 0.0
    %780 = vmatpush1.msra.mxu0 0.0
    %781 = vmatprep.subr.mxu0 0.0
    %782 = vmatpush1.msra.mxu0 0.0
    %783 = vmatprep.subr.mxu0 0.0
    %784 = vmatpush1.msra.mxu0 0.0
    %785 = vmatprep.subr.mxu0 0.0
    %786 = vmatpush1.msra.mxu0 0.0
    %787 = vmatprep.subr.mxu0 0.0
    %788 = vmatpush1.msra.mxu0 0.0
    %789 = vmatprep.subr.mxu0 0.0
    %790 = vmatpush1.msra.mxu0 0.0
    %791 = vmatprep.subr.mxu0 0.0
    %792 = vmatpush1.msra.mxu0 0.0
    %793 = vmatprep.subr.mxu0 0.0
    %794 = vmatpush1.msra.mxu0 0.0
    %795 = vmatprep.subr.mxu0 0.0
    %796 = vmatpush1.msra.mxu0 0.0
    %797 = vmatprep.subr.mxu0 0.0
    %798 = vmatpush1.msra.mxu0 0.0
    %799 = vmatprep.subr.mxu0 0.0
    %800 = vmatpush1.msra.mxu0 0.0
    %801 = vmatprep.subr.mxu0 0.0
    %802 = vmatpush1.msra.mxu0 0.0
    %803 = vmatprep.subr.mxu0 0.0
    %804 = vmatpush1.msra.mxu0 %v762
    %805 = vmatprep.subr.mxu0 0.0
    %806 = vmatpush1.msra.mxu0 %v760
    %807 = vmatprep.subr.mxu0 0.0
    %808 = vmatpush1.msra.mxu0 %v758
    %809 = vmatprep.subr.mxu0 0.0
    %810 = vmatpush1.msra.mxu0 %v756
    %811 = vmatprep.subr.mxu0 0.0
    %812 = vmatpush2.msra.mxu0 0.0
    %813 = vmatprep.subr.mxu0 0.0
    %814 = vmatpush2.msra.mxu0 0.0
    %815 = vmatprep.subr.mxu0 0.0
    %816 = vmatpush2.msra.mxu0 0.0
    %817 = vmatprep.subr.mxu0 0.0
    %818 = vmatpush2.msra.mxu0 0.0
    %819 = vmatprep.subr.mxu0 0.0
    %820 = vmatpush2.msra.mxu0 0.0
    %821 = vmatprep.subr.mxu0 0.0
    %822 = vmatpush2.msra.mxu0 0.0
    %823 = vmatprep.subr.mxu0 0.0
    %824 = vmatpush2.msra.mxu0 0.0
    %825 = vmatprep.subr.mxu0 0.0
    %826 = vmatpush2.msra.mxu0 0.0
    %827 = vmatprep.subr.mxu0 0.0
    %828 = vmatpush2.msra.mxu0 0.0
    %829 = vmatprep.subr.mxu0 0.0
    %830 = vmatpush2.msra.mxu0 0.0
    %831 = vmatprep.subr.mxu0 0.0
    %832 = vmatpush2.msra.mxu0 0.0
    %833 = vmatprep.subr.mxu0 0.0
    %834 = vmatpush2.msra.mxu0 0.0
    %835 = vmatprep.subr.mxu0 0.0
    %836 = vmatpush2.msra.mxu0 0.0
    %837 = vmatprep.subr.mxu0 0.0
    %838 = vmatpush2.msra.mxu0 0.0
    %839 = vmatprep.subr.mxu0 0.0
    %840 = vmatpush2.msra.mxu0 0.0
    %841 = vmatprep.subr.mxu0 0.0
    %842 = vmatpush2.msra.mxu0 0.0
    %843 = vmatprep.mubr.f32.mxu0 0.0
    %844 = vmatmul.mubr.f32.gmra.mxu0 %v768
    %v845 = vpop.f32.mrf.mxu0
    %v846 = vadd.f32 0.0, %v845
    %v847 = vpop.f32.mrf.mxu0
    %848 = vmatprep.mubr.f32.mxu0 0.0
    %849 = vmatmul.mubr.f32.gmra.mxu0 %v771
    %v850 = vpop.f32.mrf.mxu0
    %v851 = vadd.f32 0.0, %v850
    %v852 = vpop.f32.mrf.mxu0
    %853 = vmatprep.mubr.f32.mxu0 0.0
    %854 = vmatmul.mubr.f32.gmra.mxu0 %v774
    %v855 = vpop.f32.mrf.mxu0
    %v856 = vadd.f32 0.0, %v855
    %v857 = vpop.f32.mrf.mxu0
    %858 = vmatprep.mubr.f32.mxu0 0.0
    %859 = vmatmul.mubr.f32.gmra.mxu0 %v777
    %v860 = vpop.f32.mrf.mxu0
    %v861 = vadd.f32 0.0, %v860
    %v862 = vpop.f32.mrf.mxu0
    %863 = vdwg.mxu0
    %864 = vrot.lane.b32.xlu0 %v285, 112
    %v865 = vpop.permute.xlu0 %864
    %866 = vrot.lane.b32.xlu0 %v290, 112
    %v867 = vpop.permute.xlu0 %866
    %868 = vrot.lane.b32.xlu0 %v295, 112
    %v869 = vpop.permute.xlu0 %868
    %870 = vrot.lane.b32.xlu0 %v300, 112
    %v871 = vpop.permute.xlu0 %870
    %872 = vrot.lane.b32.xlu0 %v285, 80
    %v873 = vpop.permute.xlu0 %872
    %874 = vrot.lane.b32.xlu0 %v290, 80
    %v875 = vpop.permute.xlu0 %874
    %876 = vrot.lane.b32.xlu0 %v295, 80
    %v877 = vpop.permute.xlu0 %876
    %878 = vrot.lane.b32.xlu0 %v300, 80
    %v879 = vpop.permute.xlu0 %878
    %v880 = vsel %vm339, %v865, 0
    %v882 = vsel %vm339, %v867, 0
    %v884 = vsel %vm339, %v869, 0
    %v886 = vsel %vm339, %v871, 0
    %v888 = vsel %vm339, %v873, 0
    %v890 = vsel %vm339, %v875, 0
    %v892 = vsel %vm339, %v877, 0
    %v894 = vsel %vm339, %v879, 0
    %896 = vmatprep.subr.mxu0 0.0
    %897 = vmatpush1.xpose.msra.mxu0 0.0
    %898 = vmatprep.subr.mxu0 0.0
    %899 = vmatpush1.xpose.msra.mxu0 0.0
    %900 = vmatprep.subr.mxu0 0.0
    %901 = vmatpush1.xpose.msra.mxu0 0.0
    %902 = vmatprep.subr.mxu0 0.0
    %903 = vmatpush1.xpose.msra.mxu0 0.0
    %904 = vmatprep.subr.mxu0 0.0
    %905 = vmatpush1.xpose.msra.mxu0 0.0
    %906 = vmatprep.subr.mxu0 0.0
    %907 = vmatpush1.xpose.msra.mxu0 0.0
    %908 = vmatprep.subr.mxu0 0.0
    %909 = vmatpush1.xpose.msra.mxu0 0.0
    %910 = vmatprep.subr.mxu0 0.0
    %911 = vmatpush1.xpose.msra.mxu0 0.0
    %912 = vmatprep.subr.mxu0 0.0
    %913 = vmatpush1.xpose.msra.mxu0 0.0
    %914 = vmatprep.subr.mxu0 0.0
    %915 = vmatpush1.xpose.msra.mxu0 0.0
    %916 = vmatprep.subr.mxu0 0.0
    %917 = vmatpush1.xpose.msra.mxu0 0.0
    %918 = vmatprep.subr.mxu0 0.0
    %919 = vmatpush1.xpose.msra.mxu0 0.0
    %920 = vmatprep.subr.mxu0 0.0
    %921 = vmatpush1.xpose.msra.mxu0 %v894
    %922 = vmatprep.subr.mxu0 0.0
    %923 = vmatpush1.xpose.msra.mxu0 %v892
    %924 = vmatprep.subr.mxu0 0.0
    %925 = vmatpush1.xpose.msra.mxu0 %v890
    %926 = vmatprep.subr.mxu0 0.0
    %927 = vmatpush1.xpose.msra.mxu0 %v888
    %928 = vmatprep.subr.mxu0 0.0
    %929 = vmatpush2.xpose.msra.mxu0 0.0
    %930 = vmatprep.subr.mxu0 0.0
    %931 = vmatpush2.xpose.msra.mxu0 0.0
    %932 = vmatprep.subr.mxu0 0.0
    %933 = vmatpush2.xpose.msra.mxu0 0.0
    %934 = vmatprep.subr.mxu0 0.0
    %935 = vmatpush2.xpose.msra.mxu0 0.0
    %936 = vmatprep.subr.mxu0 0.0
    %937 = vmatpush2.xpose.msra.mxu0 0.0
    %938 = vmatprep.subr.mxu0 0.0
    %939 = vmatpush2.xpose.msra.mxu0 0.0
    %940 = vmatprep.subr.mxu0 0.0
    %941 = vmatpush2.xpose.msra.mxu0 0.0
    %942 = vmatprep.subr.mxu0 0.0
    %943 = vmatpush2.xpose.msra.mxu0 0.0
    %944 = vmatprep.subr.mxu0 0.0
    %945 = vmatpush2.xpose.msra.mxu0 0.0
    %946 = vmatprep.subr.mxu0 0.0
    %947 = vmatpush2.xpose.msra.mxu0 0.0
    %948 = vmatprep.subr.mxu0 0.0
    %949 = vmatpush2.xpose.msra.mxu0 0.0
    %950 = vmatprep.subr.mxu0 0.0
    %951 = vmatpush2.xpose.msra.mxu0 0.0
    %952 = vmatprep.subr.mxu0 0.0
    %953 = vmatpush2.xpose.msra.mxu0 0.0
    %954 = vmatprep.subr.mxu0 0.0
    %955 = vmatpush2.xpose.msra.mxu0 0.0
    %956 = vmatprep.subr.mxu0 0.0
    %957 = vmatpush2.xpose.msra.mxu0 0.0
    %958 = vmatprep.subr.mxu0 0.0
    %959 = vmatpush2.xpose.msra.mxu0 0.0
    %960 = vmatprep.mubr.f32.mxu0 0.0
    %961 = vmatmul.mubr.f32.gmra.mxu0 %v880
    %v962 = vpop.f32.mrf.mxu0
    %v963 = vadd.f32 %v197, %v962
    %v964 = vpop.f32.mrf.mxu0
    %965 = vmatprep.mubr.f32.mxu0 0.0
    %966 = vmatmul.mubr.f32.gmra.mxu0 %v882
    %v967 = vpop.f32.mrf.mxu0
    %v968 = vadd.f32 %v198, %v967
    %v969 = vpop.f32.mrf.mxu0
    %970 = vmatprep.mubr.f32.mxu0 0.0
    %971 = vmatmul.mubr.f32.gmra.mxu0 %v884
    %v972 = vpop.f32.mrf.mxu0
    %v973 = vadd.f32 %v199, %v972
    %v974 = vpop.f32.mrf.mxu0
    %975 = vmatprep.mubr.f32.mxu0 0.0
    %976 = vmatmul.mubr.f32.gmra.mxu0 %v886
    %v977 = vpop.f32.mrf.mxu0
    %v978 = vadd.f32 %v200, %v977
    %v979 = vpop.f32.mrf.mxu0
    %980 = vdwg.mxu0
    %v981 = vsel %vm156, %v963, -inf
    %982 = vmax.xlane.f32.xlu0 %v981
    %v983 = vpop.xlane.xlu0 %982
    %v984 = vsel %vm156, %v968, -inf
    %985 = vmax.xlane.f32.xlu0 %v984
    %v986 = vpop.xlane.xlu0 %985
    %v987 = vsel %vm156, %v973, -inf
    %988 = vmax.xlane.f32.xlu0 %v987
    %v989 = vpop.xlane.xlu0 %988
    %v990 = vsel %vm156, %v978, -inf
    %991 = vmax.xlane.f32.xlu0 %v990
    %v992 = vpop.xlane.xlu0 %991
    %v993 = vsub.f32 %v963, %v983
    %v994 = vsub.f32 %v968, %v986
    %v995 = vsub.f32 %v973, %v989
    %v996 = vsub.f32 %v978, %v992
    %v997 = vmul.f32 %v993, 1.442695
    %v998 = vpow.pop %v997
    %v999 = vmul.f32 %v994, 1.442695
    %v1000 = vpow.pop %v999
    %v1001 = vmul.f32 %v995, 1.442695
    %v1002 = vpow.pop %v1001
    %v1003 = vmul.f32 %v996, 1.442695
    %v1004 = vpow.pop %v1003
    %v1005 = vsel %vm156, %v998, 0.0
    %1006 = vadd.xlane.f32.xlu0 %v1005
    %v1007 = vpop.xlane.xlu0 %1006
    %v1008 = vsel %vm156, %v1000, 0.0
    %1009 = vadd.xlane.f32.xlu0 %v1008
    %v1010 = vpop.xlane.xlu0 %1009
    %v1011 = vsel %vm156, %v1002, 0.0
    %1012 = vadd.xlane.f32.xlu0 %v1011
    %v1013 = vpop.xlane.xlu0 %1012
    %v1014 = vsel %vm156, %v1004, 0.0
    %1015 = vadd.xlane.f32.xlu0 %v1014
    %v1016 = vpop.xlane.xlu0 %1015
    %v1017 = vrcp.pop %v1007
    %v1018 = vrcp.pop %v1010
    %v1019 = vrcp.pop %v1013
    %v1020 = vrcp.pop %v1016
    %v1021 = vmul.f32 %v998, %v1017
    %v1022 = vmul.f32 %v1000, %v1018
    %v1023 = vmul.f32 %v1002, %v1019
    %v1024 = vmul.f32 %v1004, %v1020
    %1025 = vrot.lane.b32.xlu0 %v285, 48
    %v1026 = vpop.permute.xlu0 %1025
    %1027 = vrot.lane.b32.xlu0 %v290, 48
    %v1028 = vpop.permute.xlu0 %1027
    %1029 = vrot.lane.b32.xlu0 %v295, 48
    %v1030 = vpop.permute.xlu0 %1029
    %1031 = vrot.lane.b32.xlu0 %v300, 48
    %v1032 = vpop.permute.xlu0 %1031
    %v1038 = vsel %vm156, %v1021, 0
    %v1041 = vsel %vm156, %v1022, 0
    %v1044 = vsel %vm156, %v1023, 0
    %v1047 = vsel %vm156, %v1024, 0
    %1049 = vmatprep.subr.mxu0 0.0
    %1050 = vmatpush1.msra.mxu0 0.0
    %1051 = vmatprep.subr.mxu0 0.0
    %1052 = vmatpush1.msra.mxu0 0.0
    %1053 = vmatprep.subr.mxu0 0.0
    %1054 = vmatpush1.msra.mxu0 0.0
    %1055 = vmatprep.subr.mxu0 0.0
    %1056 = vmatpush1.msra.mxu0 0.0
    %1057 = vmatprep.subr.mxu0 0.0
    %1058 = vmatpush1.msra.mxu0 0.0
    %1059 = vmatprep.subr.mxu0 0.0
    %1060 = vmatpush1.msra.mxu0 0.0
    %1061 = vmatprep.subr.mxu0 0.0
    %1062 = vmatpush1.msra.mxu0 0.0
    %1063 = vmatprep.subr.mxu0 0.0
    %1064 = vmatpush1.msra.mxu0 0.0
    %1065 = vmatprep.subr.mxu0 0.0
    %1066 = vmatpush1.msra.mxu0 0.0
    %1067 = vmatprep.subr.mxu0 0.0
    %1068 = vmatpush1.msra.mxu0 0.0
    %1069 = vmatprep.subr.mxu0 0.0
    %1070 = vmatpush1.msra.mxu0 0.0
    %1071 = vmatprep.subr.mxu0 0.0
    %1072 = vmatpush1.msra.mxu0 0.0
    %1073 = vmatprep.subr.mxu0 0.0
    %1074 = vmatpush1.msra.mxu0 %v1032
    %1075 = vmatprep.subr.mxu0 0.0
    %1076 = vmatpush1.msra.mxu0 %v1030
    %1077 = vmatprep.subr.mxu0 0.0
    %1078 = vmatpush1.msra.mxu0 %v1028
    %1079 = vmatprep.subr.mxu0 0.0
    %1080 = vmatpush1.msra.mxu0 %v1026
    %1081 = vmatprep.subr.mxu0 0.0
    %1082 = vmatpush2.msra.mxu0 0.0
    %1083 = vmatprep.subr.mxu0 0.0
    %1084 = vmatpush2.msra.mxu0 0.0
    %1085 = vmatprep.subr.mxu0 0.0
    %1086 = vmatpush2.msra.mxu0 0.0
    %1087 = vmatprep.subr.mxu0 0.0
    %1088 = vmatpush2.msra.mxu0 0.0
    %1089 = vmatprep.subr.mxu0 0.0
    %1090 = vmatpush2.msra.mxu0 0.0
    %1091 = vmatprep.subr.mxu0 0.0
    %1092 = vmatpush2.msra.mxu0 0.0
    %1093 = vmatprep.subr.mxu0 0.0
    %1094 = vmatpush2.msra.mxu0 0.0
    %1095 = vmatprep.subr.mxu0 0.0
    %1096 = vmatpush2.msra.mxu0 0.0
    %1097 = vmatprep.subr.mxu0 0.0
    %1098 = vmatpush2.msra.mxu0 0.0
    %1099 = vmatprep.subr.mxu0 0.0
    %1100 = vmatpush2.msra.mxu0 0.0
    %1101 = vmatprep.subr.mxu0 0.0
    %1102 = vmatpush2.msra.mxu0 0.0
    %1103 = vmatprep.subr.mxu0 0.0
    %1104 = vmatpush2.msra.mxu0 0.0
    %1105 = vmatprep.subr.mxu0 0.0
    %1106 = vmatpush2.msra.mxu0 0.0
    %1107 = vmatprep.subr.mxu0 0.0
    %1108 = vmatpush2.msra.mxu0 0.0
    %1109 = vmatprep.subr.mxu0 0.0
    %1110 = vmatpush2.msra.mxu0 0.0
    %1111 = vmatprep.subr.mxu0 0.0
    %1112 = vmatpush2.msra.mxu0 0.0
    %1113 = vmatprep.mubr.f32.mxu0 0.0
    %1114 = vmatmul.mubr.f32.gmra.mxu0 %v1038
    %v1115 = vpop.f32.mrf.mxu0
    %v1116 = vadd.f32 0.0, %v1115
    %v1117 = vpop.f32.mrf.mxu0
    %1118 = vmatprep.mubr.f32.mxu0 0.0
    %1119 = vmatmul.mubr.f32.gmra.mxu0 %v1041
    %v1120 = vpop.f32.mrf.mxu0
    %v1121 = vadd.f32 0.0, %v1120
    %v1122 = vpop.f32.mrf.mxu0
    %1123 = vmatprep.mubr.f32.mxu0 0.0
    %1124 = vmatmul.mubr.f32.gmra.mxu0 %v1044
    %v1125 = vpop.f32.mrf.mxu0
    %v1126 = vadd.f32 0.0, %v1125
    %v1127 = vpop.f32.mrf.mxu0
    %1128 = vmatprep.mubr.f32.mxu0 0.0
    %1129 = vmatmul.mubr.f32.gmra.mxu0 %v1047
    %v1130 = vpop.f32.mrf.mxu0
    %v1131 = vadd.f32 0.0, %v1130
    %v1132 = vpop.f32.mrf.mxu0
    %1133 = vdwg.mxu0
    %1134 = vrot.lane.b32.xlu0 %v285, 104
    %v1135 = vpop.permute.xlu0 %1134
    %1136 = vrot.lane.b32.xlu0 %v290, 104
    %v1137 = vpop.permute.xlu0 %1136
    %1138 = vrot.lane.b32.xlu0 %v295, 104
    %v1139 = vpop.permute.xlu0 %1138
    %1140 = vrot.lane.b32.xlu0 %v300, 104
    %v1141 = vpop.permute.xlu0 %1140
    %1142 = vrot.lane.b32.xlu0 %v285, 72
    %v1143 = vpop.permute.xlu0 %1142
    %1144 = vrot.lane.b32.xlu0 %v290, 72
    %v1145 = vpop.permute.xlu0 %1144
    %1146 = vrot.lane.b32.xlu0 %v295, 72
    %v1147 = vpop.permute.xlu0 %1146
    %1148 = vrot.lane.b32.xlu0 %v300, 72
    %v1149 = vpop.permute.xlu0 %1148
    %v1150 = vsel %vm339, %v1135, 0
    %v1152 = vsel %vm339, %v1137, 0
    %v1154 = vsel %vm339, %v1139, 0
    %v1156 = vsel %vm339, %v1141, 0
    %v1158 = vsel %vm339, %v1143, 0
    %v1160 = vsel %vm339, %v1145, 0
    %v1162 = vsel %vm339, %v1147, 0
    %v1164 = vsel %vm339, %v1149, 0
    %1166 = vmatprep.subr.mxu0 0.0
    %1167 = vmatpush1.xpose.msra.mxu0 0.0
    %1168 = vmatprep.subr.mxu0 0.0
    %1169 = vmatpush1.xpose.msra.mxu0 0.0
    %1170 = vmatprep.subr.mxu0 0.0
    %1171 = vmatpush1.xpose.msra.mxu0 0.0
    %1172 = vmatprep.subr.mxu0 0.0
    %1173 = vmatpush1.xpose.msra.mxu0 0.0
    %1174 = vmatprep.subr.mxu0 0.0
    %1175 = vmatpush1.xpose.msra.mxu0 0.0
    %1176 = vmatprep.subr.mxu0 0.0
    %1177 = vmatpush1.xpose.msra.mxu0 0.0
    %1178 = vmatprep.subr.mxu0 0.0
    %1179 = vmatpush1.xpose.msra.mxu0 0.0
    %1180 = vmatprep.subr.mxu0 0.0
    %1181 = vmatpush1.xpose.msra.mxu0 0.0
    %1182 = vmatprep.subr.mxu0 0.0
    %1183 = vmatpush1.xpose.msra.mxu0 0.0
    %1184 = vmatprep.subr.mxu0 0.0
    %1185 = vmatpush1.xpose.msra.mxu0 0.0
    %1186 = vmatprep.subr.mxu0 0.0
    %1187 = vmatpush1.xpose.msra.mxu0 0.0
    %1188 = vmatprep.subr.mxu0 0.0
    %1189 = vmatpush1.xpose.msra.mxu0 0.0
    %1190 = vmatprep.subr.mxu0 0.0
    %1191 = vmatpush1.xpose.msra.mxu0 %v1164
    %1192 = vmatprep.subr.mxu0 0.0
    %1193 = vmatpush1.xpose.msra.mxu0 %v1162
    %1194 = vmatprep.subr.mxu0 0.0
    %1195 = vmatpush1.xpose.msra.mxu0 %v1160
    %1196 = vmatprep.subr.mxu0 0.0
    %1197 = vmatpush1.xpose.msra.mxu0 %v1158
    %1198 = vmatprep.subr.mxu0 0.0
    %1199 = vmatpush2.xpose.msra.mxu0 0.0
    %1200 = vmatprep.subr.mxu0 0.0
    %1201 = vmatpush2.xpose.msra.mxu0 0.0
    %1202 = vmatprep.subr.mxu0 0.0
    %1203 = vmatpush2.xpose.msra.mxu0 0.0
    %1204 = vmatprep.subr.mxu0 0.0
    %1205 = vmatpush2.xpose.msra.mxu0 0.0
    %1206 = vmatprep.subr.mxu0 0.0
    %1207 = vmatpush2.xpose.msra.mxu0 0.0
    %1208 = vmatprep.subr.mxu0 0.0
    %1209 = vmatpush2.xpose.msra.mxu0 0.0
    %1210 = vmatprep.subr.mxu0 0.0
    %1211 = vmatpush2.xpose.msra.mxu0 0.0
    %1212 = vmatprep.subr.mxu0 0.0
    %1213 = vmatpush2.xpose.msra.mxu0 0.0
    %1214 = vmatprep.subr.mxu0 0.0
    %1215 = vmatpush2.xpose.msra.mxu0 0.0
    %1216 = vmatprep.subr.mxu0 0.0
    %1217 = vmatpush2.xpose.msra.mxu0 0.0
    %1218 = vmatprep.subr.mxu0 0.0
    %1219 = vmatpush2.xpose.msra.mxu0 0.0
    %1220 = vmatprep.subr.mxu0 0.0
    %1221 = vmatpush2.xpose.msra.mxu0 0.0
    %1222 = vmatprep.subr.mxu0 0.0
    %1223 = vmatpush2.xpose.msra.mxu0 0.0
    %1224 = vmatprep.subr.mxu0 0.0
    %1225 = vmatpush2.xpose.msra.mxu0 0.0
    %1226 = vmatprep.subr.mxu0 0.0
    %1227 = vmatpush2.xpose.msra.mxu0 0.0
    %1228 = vmatprep.subr.mxu0 0.0
    %1229 = vmatpush2.xpose.msra.mxu0 0.0
    %1230 = vmatprep.mubr.f32.mxu0 0.0
    %1231 = vmatmul.mubr.f32.gmra.mxu0 %v1150
    %v1232 = vpop.f32.mrf.mxu0
    %v1233 = vadd.f32 %v197, %v1232
    %v1234 = vpop.f32.mrf.mxu0
    %1235 = vmatprep.mubr.f32.mxu0 0.0
    %1236 = vmatmul.mubr.f32.gmra.mxu0 %v1152
    %v1237 = vpop.f32.mrf.mxu0
    %v1238 = vadd.f32 %v198, %v1237
    %v1239 = vpop.f32.mrf.mxu0
    %1240 = vmatprep.mubr.f32.mxu0 0.0
    %1241 = vmatmul.mubr.f32.gmra.mxu0 %v1154
    %v1242 = vpop.f32.mrf.mxu0
    %v1243 = vadd.f32 %v199, %v1242
    %v1244 = vpop.f32.mrf.mxu0
    %1245 = vmatprep.mubr.f32.mxu0 0.0
    %1246 = vmatmul.mubr.f32.gmra.mxu0 %v1156
    %v1247 = vpop.f32.mrf.mxu0
    %v1248 = vadd.f32 %v200, %v1247
    %v1249 = vpop.f32.mrf.mxu0
    %1250 = vdwg.mxu0
    %v1251 = vsel %vm156, %v1233, -inf
    %1252 = vmax.xlane.f32.xlu0 %v1251
    %v1253 = vpop.xlane.xlu0 %1252
    %v1254 = vsel %vm156, %v1238, -inf
    %1255 = vmax.xlane.f32.xlu0 %v1254
    %v1256 = vpop.xlane.xlu0 %1255
    %v1257 = vsel %vm156, %v1243, -inf
    %1258 = vmax.xlane.f32.xlu0 %v1257
    %v1259 = vpop.xlane.xlu0 %1258
    %v1260 = vsel %vm156, %v1248, -inf
    %1261 = vmax.xlane.f32.xlu0 %v1260
    %v1262 = vpop.xlane.xlu0 %1261
    %v1263 = vsub.f32 %v1233, %v1253
    %v1264 = vsub.f32 %v1238, %v1256
    %v1265 = vsub.f32 %v1243, %v1259
    %v1266 = vsub.f32 %v1248, %v1262
    %v1267 = vmul.f32 %v1263, 1.442695
    %v1268 = vpow.pop %v1267
    %v1269 = vmul.f32 %v1264, 1.442695
    %v1270 = vpow.pop %v1269
    %v1271 = vmul.f32 %v1265, 1.442695
    %v1272 = vpow.pop %v1271
    %v1273 = vmul.f32 %v1266, 1.442695
    %v1274 = vpow.pop %v1273
    %v1275 = vsel %vm156, %v1268, 0.0
    %1276 = vadd.xlane.f32.xlu0 %v1275
    %v1277 = vpop.xlane.xlu0 %1276
    %v1278 = vsel %vm156, %v1270, 0.0
    %1279 = vadd.xlane.f32.xlu0 %v1278
    %v1280 = vpop.xlane.xlu0 %1279
    %v1281 = vsel %vm156, %v1272, 0.0
    %1282 = vadd.xlane.f32.xlu0 %v1281
    %v1283 = vpop.xlane.xlu0 %1282
    %v1284 = vsel %vm156, %v1274, 0.0
    %1285 = vadd.xlane.f32.xlu0 %v1284
    %v1286 = vpop.xlane.xlu0 %1285
    %v1287 = vrcp.pop %v1277
    %v1288 = vrcp.pop %v1280
    %v1289 = vrcp.pop %v1283
    %v1290 = vrcp.pop %v1286
    %v1291 = vmul.f32 %v1268, %v1287
    %v1292 = vmul.f32 %v1270, %v1288
    %v1293 = vmul.f32 %v1272, %v1289
    %v1294 = vmul.f32 %v1274, %v1290
    %1295 = vrot.lane.b32.xlu0 %v285, 40
    %v1296 = vpop.permute.xlu0 %1295
    %1297 = vrot.lane.b32.xlu0 %v290, 40
    %v1298 = vpop.permute.xlu0 %1297
    %1299 = vrot.lane.b32.xlu0 %v295, 40
    %v1300 = vpop.permute.xlu0 %1299
    %1301 = vrot.lane.b32.xlu0 %v300, 40
    %v1302 = vpop.permute.xlu0 %1301
    %v1308 = vsel %vm156, %v1291, 0
    %v1311 = vsel %vm156, %v1292, 0
    %v1314 = vsel %vm156, %v1293, 0
    %v1317 = vsel %vm156, %v1294, 0
    %1319 = vmatprep.subr.mxu0 0.0
    %1320 = vmatpush1.msra.mxu0 0.0
    %1321 = vmatprep.subr.mxu0 0.0
    %1322 = vmatpush1.msra.mxu0 0.0
    %1323 = vmatprep.subr.mxu0 0.0
    %1324 = vmatpush1.msra.mxu0 0.0
    %1325 = vmatprep.subr.mxu0 0.0
    %1326 = vmatpush1.msra.mxu0 0.0
    %1327 = vmatprep.subr.mxu0 0.0
    %1328 = vmatpush1.msra.mxu0 0.0
    %1329 = vmatprep.subr.mxu0 0.0
    %1330 = vmatpush1.msra.mxu0 0.0
    %1331 = vmatprep.subr.mxu0 0.0
    %1332 = vmatpush1.msra.mxu0 0.0
    %1333 = vmatprep.subr.mxu0 0.0
    %1334 = vmatpush1.msra.mxu0 0.0
    %1335 = vmatprep.subr.mxu0 0.0
    %1336 = vmatpush1.msra.mxu0 0.0
    %1337 = vmatprep.subr.mxu0 0.0
    %1338 = vmatpush1.msra.mxu0 0.0
    %1339 = vmatprep.subr.mxu0 0.0
    %1340 = vmatpush1.msra.mxu0 0.0
    %1341 = vmatprep.subr.mxu0 0.0
    %1342 = vmatpush1.msra.mxu0 0.0
    %1343 = vmatprep.subr.mxu0 0.0
    %1344 = vmatpush1.msra.mxu0 %v1302
    %1345 = vmatprep.subr.mxu0 0.0
    %1346 = vmatpush1.msra.mxu0 %v1300
    %1347 = vmatprep.subr.mxu0 0.0
    %1348 = vmatpush1.msra.mxu0 %v1298
    %1349 = vmatprep.subr.mxu0 0.0
    %1350 = vmatpush1.msra.mxu0 %v1296
    %1351 = vmatprep.subr.mxu0 0.0
    %1352 = vmatpush2.msra.mxu0 0.0
    %1353 = vmatprep.subr.mxu0 0.0
    %1354 = vmatpush2.msra.mxu0 0.0
    %1355 = vmatprep.subr.mxu0 0.0
    %1356 = vmatpush2.msra.mxu0 0.0
    %1357 = vmatprep.subr.mxu0 0.0
    %1358 = vmatpush2.msra.mxu0 0.0
    %1359 = vmatprep.subr.mxu0 0.0
    %1360 = vmatpush2.msra.mxu0 0.0
    %1361 = vmatprep.subr.mxu0 0.0
    %1362 = vmatpush2.msra.mxu0 0.0
    %1363 = vmatprep.subr.mxu0 0.0
    %1364 = vmatpush2.msra.mxu0 0.0
    %1365 = vmatprep.subr.mxu0 0.0
    %1366 = vmatpush2.msra.mxu0 0.0
    %1367 = vmatprep.subr.mxu0 0.0
    %1368 = vmatpush2.msra.mxu0 0.0
    %1369 = vmatprep.subr.mxu0 0.0
    %1370 = vmatpush2.msra.mxu0 0.0
    %1371 = vmatprep.subr.mxu0 0.0
    %1372 = vmatpush2.msra.mxu0 0.0
    %1373 = vmatprep.subr.mxu0 0.0
    %1374 = vmatpush2.msra.mxu0 0.0
    %1375 = vmatprep.subr.mxu0 0.0
    %1376 = vmatpush2.msra.mxu0 0.0
    %1377 = vmatprep.subr.mxu0 0.0
    %1378 = vmatpush2.msra.mxu0 0.0
    %1379 = vmatprep.subr.mxu0 0.0
    %1380 = vmatpush2.msra.mxu0 0.0
    %1381 = vmatprep.subr.mxu0 0.0
    %1382 = vmatpush2.msra.mxu0 0.0
    %1383 = vmatprep.mubr.f32.mxu0 0.0
    %1384 = vmatmul.mubr.f32.gmra.mxu0 %v1308
    %v1385 = vpop.f32.mrf.mxu0
    %v1386 = vadd.f32 0.0, %v1385
    %v1387 = vpop.f32.mrf.mxu0
    %1388 = vmatprep.mubr.f32.mxu0 0.0
    %1389 = vmatmul.mubr.f32.gmra.mxu0 %v1311
    %v1390 = vpop.f32.mrf.mxu0
    %v1391 = vadd.f32 0.0, %v1390
    %v1392 = vpop.f32.mrf.mxu0
    %1393 = vmatprep.mubr.f32.mxu0 0.0
    %1394 = vmatmul.mubr.f32.gmra.mxu0 %v1314
    %v1395 = vpop.f32.mrf.mxu0
    %v1396 = vadd.f32 0.0, %v1395
    %v1397 = vpop.f32.mrf.mxu0
    %1398 = vmatprep.mubr.f32.mxu0 0.0
    %1399 = vmatmul.mubr.f32.gmra.mxu0 %v1317
    %v1400 = vpop.f32.mrf.mxu0
    %v1401 = vadd.f32 0.0, %v1400
    %v1402 = vpop.f32.mrf.mxu0
    %1403 = vdwg.mxu0
    %1408 = vrot.lane.b32.xlu0 %v846, 8
    %v1409 = vpop.permute.xlu0 %1408
    %1410 = vrot.lane.b32.xlu0 %v851, 8
    %v1411 = vpop.permute.xlu0 %1410
    %1412 = vrot.lane.b32.xlu0 %v856, 8
    %v1413 = vpop.permute.xlu0 %1412
    %1414 = vrot.lane.b32.xlu0 %v861, 8
    %v1415 = vpop.permute.xlu0 %1414
    %1424 = vrot.lane.b32.xlu0 %v1116, 16
    %v1425 = vpop.permute.xlu0 %1424
    %1426 = vrot.lane.b32.xlu0 %v1121, 16
    %v1427 = vpop.permute.xlu0 %1426
    %1428 = vrot.lane.b32.xlu0 %v1126, 16
    %v1429 = vpop.permute.xlu0 %1428
    %1430 = vrot.lane.b32.xlu0 %v1131, 16
    %v1431 = vpop.permute.xlu0 %1430
    %1440 = vrot.lane.b32.xlu0 %v1386, 24
    %v1441 = vpop.permute.xlu0 %1440
    %1442 = vrot.lane.b32.xlu0 %v1391, 24
    %v1443 = vpop.permute.xlu0 %1442
    %1444 = vrot.lane.b32.xlu0 %v1396, 24
    %v1445 = vpop.permute.xlu0 %1444
    %1446 = vrot.lane.b32.xlu0 %v1401, 24
    %v1447 = vpop.permute.xlu0 %1446
    %v1452 = vsel %vm339, %v576, %v1409
    %v1453 = vsel %vm339, %v581, %v1411
    %v1454 = vsel %vm339, %v586, %v1413
    %v1455 = vsel %vm339, %v591, %v1415
    %v1456 = vsel %vm30, %v1452, %v1425
    %v1457 = vsel %vm30, %v1453, %v1427
    %v1458 = vsel %vm30, %v1454, %v1429
    %v1459 = vsel %vm30, %v1455, %v1431
    %vm1460 = vcmask 195584
    %v1461 = vsel %vm1460, %v1456, %v1441
    %v1462 = vsel %vm1460, %v1457, %v1443
    %v1463 = vsel %vm1460, %v1458, %v1445
    %v1464 = vsel %vm1460, %v1459, %v1447
    %1469 = vrot.lane.b32.xlu0 %v320, 32
    %v1470 = vpop.permute.xlu0 %1469
    %1471 = vrot.lane.b32.xlu0 %v322, 32
    %v1472 = vpop.permute.xlu0 %1471
    %1473 = vrot.lane.b32.xlu0 %v324, 32
    %v1474 = vpop.permute.xlu0 %1473
    %1475 = vrot.lane.b32.xlu0 %v326, 32
    %v1476 = vpop.permute.xlu0 %1475
    %v1481 = vmul.f32 %v1461, %v1470
    %v1482 = vmul.f32 %v1462, %v1472
    %v1483 = vmul.f32 %v1463, %v1474
    %v1484 = vmul.f32 %v1464, %v1476
    %v1486 = vsel %vm156, %v1481, 0
    %v1489 = vsel %vm156, %v1482, 0
    %v1492 = vsel %vm156, %v1483, 0
    %v1495 = vsel %vm156, %v1484, 0
    %1497 = vmatprep.subr.mxu0 0.0
    %1498 = vmatpush1.msra.mxu0 0.0
    %1499 = vmatprep.subr.mxu0 0.0
    %1500 = vmatpush1.msra.mxu0 0.0
    %1501 = vmatprep.subr.mxu0 0.0
    %1502 = vmatpush1.msra.mxu0 0.0
    %1503 = vmatprep.subr.mxu0 0.0
    %1504 = vmatpush1.msra.mxu0 0.0
    %1505 = vmatprep.subr.mxu0 0.0
    %1506 = vmatpush1.msra.mxu0 0.0
    %1507 = vmatprep.subr.mxu0 0.0
    %1508 = vmatpush1.msra.mxu0 0.0
    %1509 = vmatprep.subr.mxu0 0.0
    %1510 = vmatpush1.msra.mxu0 0.0
    %1511 = vmatprep.subr.mxu0 0.0
    %1512 = vmatpush1.msra.mxu0 0.0
    %1513 = vmatprep.subr.mxu0 0.0
    %1514 = vmatpush1.msra.mxu0 0.0
    %1515 = vmatprep.subr.mxu0 0.0
    %1516 = vmatpush1.msra.mxu0 0.0
    %1517 = vmatprep.subr.mxu0 0.0
    %1518 = vmatpush1.msra.mxu0 0.0
    %1519 = vmatprep.subr.mxu0 0.0
    %1520 = vmatpush1.msra.mxu0 0.0
    %1521 = vmatprep.subr.mxu0 0.0
    %1522 = vmatpush1.msra.mxu0 %v208
    %1523 = vmatprep.subr.mxu0 0.0
    %1524 = vmatpush1.msra.mxu0 %v207
    %1525 = vmatprep.subr.mxu0 0.0
    %1526 = vmatpush1.msra.mxu0 %v206
    %1527 = vmatprep.subr.mxu0 0.0
    %1528 = vmatpush1.msra.mxu0 %v205
    %1529 = vmatprep.subr.mxu0 0.0
    %1530 = vmatpush2.msra.mxu0 0.0
    %1531 = vmatprep.subr.mxu0 0.0
    %1532 = vmatpush2.msra.mxu0 0.0
    %1533 = vmatprep.subr.mxu0 0.0
    %1534 = vmatpush2.msra.mxu0 0.0
    %1535 = vmatprep.subr.mxu0 0.0
    %1536 = vmatpush2.msra.mxu0 0.0
    %1537 = vmatprep.subr.mxu0 0.0
    %1538 = vmatpush2.msra.mxu0 0.0
    %1539 = vmatprep.subr.mxu0 0.0
    %1540 = vmatpush2.msra.mxu0 0.0
    %1541 = vmatprep.subr.mxu0 0.0
    %1542 = vmatpush2.msra.mxu0 0.0
    %1543 = vmatprep.subr.mxu0 0.0
    %1544 = vmatpush2.msra.mxu0 0.0
    %1545 = vmatprep.subr.mxu0 0.0
    %1546 = vmatpush2.msra.mxu0 0.0
    %1547 = vmatprep.subr.mxu0 0.0
    %1548 = vmatpush2.msra.mxu0 0.0
    %1549 = vmatprep.subr.mxu0 0.0
    %1550 = vmatpush2.msra.mxu0 0.0
    %1551 = vmatprep.subr.mxu0 0.0
    %1552 = vmatpush2.msra.mxu0 0.0
    %1553 = vmatprep.subr.mxu0 0.0
    %1554 = vmatpush2.msra.mxu0 0.0
    %1555 = vmatprep.subr.mxu0 0.0
    %1556 = vmatpush2.msra.mxu0 0.0
    %1557 = vmatprep.subr.mxu0 0.0
    %1558 = vmatpush2.msra.mxu0 0.0
    %1559 = vmatprep.subr.mxu0 0.0
    %1560 = vmatpush2.msra.mxu0 0.0
    %1561 = vmatprep.mubr.f32.mxu0 0.0
    %1562 = vmatmul.mubr.f32.gmra.mxu0 %v1486
    %v1563 = vpop.f32.mrf.mxu0
    %v1564 = vadd.f32 0.0, %v1563
    %v1565 = vpop.f32.mrf.mxu0
    %1566 = vmatprep.mubr.f32.mxu0 0.0
    %1567 = vmatmul.mubr.f32.gmra.mxu0 %v1489
    %v1568 = vpop.f32.mrf.mxu0
    %v1569 = vadd.f32 0.0, %v1568
    %v1570 = vpop.f32.mrf.mxu0
    %1571 = vmatprep.mubr.f32.mxu0 0.0
    %1572 = vmatmul.mubr.f32.gmra.mxu0 %v1492
    %v1573 = vpop.f32.mrf.mxu0
    %v1574 = vadd.f32 0.0, %v1573
    %v1575 = vpop.f32.mrf.mxu0
    %1576 = vmatprep.mubr.f32.mxu0 0.0
    %1577 = vmatmul.mubr.f32.gmra.mxu0 %v1495
    %v1578 = vpop.f32.mrf.mxu0
    %v1579 = vadd.f32 0.0, %v1578
    %v1580 = vpop.f32.mrf.mxu0
    %1581 = vdwg.mxu0
    %v1582 = vadd.f32 %v194, %v1564
    %v1583 = vadd.f32 %v196, %v1569
    %v1584 = vadd.f32 %v195, %v1574
    %v1585 = vadd.f32 %v196, %v1579
    %v1586 = vld [vmem:[#allocation2 + $0x181] ss:$0 sm:$0xff]
    %v1587 = vld [vmem:[#allocation2 + $0x182] ss:$0 sm:$0xff]
    %v1588 = vsel %vm156, %v1582, 0.0
    %1589 = vadd.xlane.f32.xlu0 %v1588
    %v1590 = vpop.xlane.xlu0 %1589
    %v1591 = vsel %vm156, %v1583, 0.0
    %1592 = vadd.xlane.f32.xlu0 %v1591
    %v1593 = vpop.xlane.xlu0 %1592
    %v1594 = vsel %vm156, %v1584, 0.0
    %1595 = vadd.xlane.f32.xlu0 %v1594
    %v1596 = vpop.xlane.xlu0 %1595
    %v1597 = vsel %vm156, %v1585, 0.0
    %1598 = vadd.xlane.f32.xlu0 %v1597
    %v1599 = vpop.xlane.xlu0 %1598
    %v1600 = vmul.f32 %v1590, %v163
    %v1601 = vmul.f32 %v1593, %v163
    %v1602 = vmul.f32 %v1596, %v163
    %v1603 = vmul.f32 %v1599, %v163
    %v1604 = vsub.f32 %v1582, %v1600
    %v1605 = vsub.f32 %v1583, %v1601
    %v1606 = vsub.f32 %v1584, %v1602
    %v1607 = vsub.f32 %v1585, %v1603
    %v1608 = vmul.f32 %v1604, %v1604
    %v1609 = vmul.f32 %v1605, %v1605
    %v1610 = vmul.f32 %v1606, %v1606
    %v1611 = vmul.f32 %v1607, %v1607
    %v1612 = vsel %vm156, %v1608, 0.0
    %1613 = vadd.xlane.f32.xlu0 %v1612
    %v1614 = vpop.xlane.xlu0 %1613
    %v1615 = vsel %vm156, %v1609, 0.0
    %1616 = vadd.xlane.f32.xlu0 %v1615
    %v1617 = vpop.xlane.xlu0 %1616
    %v1618 = vsel %vm156, %v1610, 0.0
    %1619 = vadd.xlane.f32.xlu0 %v1618
    %v1620 = vpop.xlane.xlu0 %1619
    %v1621 = vsel %vm156, %v1611, 0.0
    %1622 = vadd.xlane.f32.xlu0 %v1621
    %v1623 = vpop.xlane.xlu0 %1622
    %v1624 = vmul.f32 %v1614, %v163
    %v1625 = vmul.f32 %v1617, %v163
    %v1626 = vmul.f32 %v1620, %v163
    %v1627 = vmul.f32 %v1623, %v163
    %v1628 = vadd.f32 %v1624, 1e-05
    %v1629 = vadd.f32 %v1625, 1e-05
    %v1630 = vadd.f32 %v1626, 1e-05
    %v1631 = vadd.f32 %v1627, 1e-05
    %v1632 = vrsqrt.pop %v1628
    %v1633 = vrsqrt.pop %v1629
    %v1634 = vrsqrt.pop %v1630
    %v1635 = vrsqrt.pop %v1631
    %v1636 = vmul.f32 %v1604, %v1632
    %v1637 = vmul.f32 %v1605, %v1633
    %v1638 = vmul.f32 %v1606, %v1634
    %v1639 = vmul.f32 %v1607, %v1635
    %v1640 = vmul.f32 %v1636, %v1586
    %v1641 = vmul.f32 %v1637, %v1586
    %v1642 = vmul.f32 %v1638, %v1586
    %v1643 = vmul.f32 %v1639, %v1586
    %v1644 = vadd.f32 %v1640, %v1587
    %v1645 = vadd.f32 %v1641, %v1587
    %v1646 = vadd.f32 %v1642, %v1587
    %v1647 = vadd.f32 %v1643, %v1587
    %v1648 = vld [vmem:[#allocation2 + $0x40] sm:$0xff]
    %v1649 = vld [vmem:[#allocation2 + $0x48] sm:$0xff]
    %v1650 = vld [vmem:[#allocation2 + $0x50] sm:$0xff]
    %v1651 = vld [vmem:[#allocation2 + $0x58] sm:$0xff]
    %v1652 = vld [vmem:[#allocation2 + $0x60] sm:$0xff]
    %v1653 = vld [vmem:[#allocation2 + $0x68] sm:$0xff]
    %v1654 = vld [vmem:[#allocation2 + $0x70] sm:$0xff]
    %v1655 = vld [vmem:[#allocation2 + $0x78] sm:$0xff]
    %s1656 = scalar_lea.vmem [#allocation2], 384
    %v1657 = vld [vmem:[%s1656] ss:$8 sm:$0x3]
    %v1659 = vlaneseq
    %v1660 = vshrl.u32 %v1659, 7
    %v1661 = vsub.s32 0, %v1660
    %v1662 = vrot.slane %v1657, %v1661
    %v1663 = vlaneseq
    %v1664 = vshrl.u32 %v1663, 7
    %v1665 = vsub.s32 1, %v1664
    %v1666 = vrot.slane %v1657, %v1665
    %v1670 = vsel %vm156, %v1644, 0
    %v1673 = vsel %vm156, %v1645, 0
    %v1676 = vsel %vm156, %v1646, 0
    %v1679 = vsel %vm156, %v1647, 0
    %1681 = vmatprep.subr.mxu0 0.0
    %1682 = vmatpush1.msra.mxu0 0.0
    %1683 = vmatprep.subr.mxu0 0.0
    %1684 = vmatpush1.msra.mxu0 0.0
    %1685 = vmatprep.subr.mxu0 0.0
    %1686 = vmatpush1.msra.mxu0 0.0
    %1687 = vmatprep.subr.mxu0 0.0
    %1688 = vmatpush1.msra.mxu0 0.0
    %1689 = vmatprep.subr.mxu0 0.0
    %1690 = vmatpush1.msra.mxu0 0.0
    %1691 = vmatprep.subr.mxu0 0.0
    %1692 = vmatpush1.msra.mxu0 0.0
    %1693 = vmatprep.subr.mxu0 0.0
    %1694 = vmatpush1.msra.mxu0 0.0
    %1695 = vmatprep.subr.mxu0 0.0
    %1696 = vmatpush1.msra.mxu0 0.0
    %1697 = vmatprep.subr.mxu0 0.0
    %1698 = vmatpush1.msra.mxu0 0.0
    %1699 = vmatprep.subr.mxu0 0.0
    %1700 = vmatpush1.msra.mxu0 0.0
    %1701 = vmatprep.subr.mxu0 0.0
    %1702 = vmatpush1.msra.mxu0 0.0
    %1703 = vmatprep.subr.mxu0 0.0
    %1704 = vmatpush1.msra.mxu0 0.0
    %1705 = vmatprep.subr.mxu0 %v1655
    %1706 = vmatpush1.msra.mxu0 %v1654
    %1707 = vmatprep.subr.mxu0 %v1653
    %1708 = vmatpush1.msra.mxu0 %v1652
    %1709 = vmatprep.subr.mxu0 %v1651
    %1710 = vmatpush1.msra.mxu0 %v1650
    %1711 = vmatprep.subr.mxu0 %v1649
    %1712 = vmatpush1.msra.mxu0 %v1648
    %1713 = vmatprep.subr.mxu0 0.0
    %1714 = vmatpush2.msra.mxu0 0.0
    %1715 = vmatprep.subr.mxu0 0.0
    %1716 = vmatpush2.msra.mxu0 0.0
    %1717 = vmatprep.subr.mxu0 0.0
    %1718 = vmatpush2.msra.mxu0 0.0
    %1719 = vmatprep.subr.mxu0 0.0
    %1720 = vmatpush2.msra.mxu0 0.0
    %1721 = vmatprep.subr.mxu0 0.0
    %1722 = vmatpush2.msra.mxu0 0.0
    %1723 = vmatprep.subr.mxu0 0.0
    %1724 = vmatpush2.msra.mxu0 0.0
    %1725 = vmatprep.subr.mxu0 0.0
    %1726 = vmatpush2.msra.mxu0 0.0
    %1727 = vmatprep.subr.mxu0 0.0
    %1728 = vmatpush2.msra.mxu0 0.0
    %1729 = vmatprep.subr.mxu0 0.0
    %1730 = vmatpush2.msra.mxu0 0.0
    %1731 = vmatprep.subr.mxu0 0.0
    %1732 = vmatpush2.msra.mxu0 0.0
    %1733 = vmatprep.subr.mxu0 0.0
    %1734 = vmatpush2.msra.mxu0 0.0
    %1735 = vmatprep.subr.mxu0 0.0
    %1736 = vmatpush2.msra.mxu0 0.0
    %1737 = vmatprep.subr.mxu0 0.0
    %1738 = vmatpush2.msra.mxu0 0.0
    %1739 = vmatprep.subr.mxu0 0.0
    %1740 = vmatpush2.msra.mxu0 0.0
    %1741 = vmatprep.subr.mxu0 0.0
    %1742 = vmatpush2.msra.mxu0 0.0
    %1743 = vmatprep.subr.mxu0 0.0
    %1744 = vmatpush2.msra.mxu0 0.0
    %1745 = vmatprep.mubr.f32.mxu0 0.0
    %1746 = vmatmul.mubr.f32.gmra.mxu0 %v1670
    %v1747 = vpop.f32.mrf.mxu0
    %v1748 = vadd.f32 %v1662, %v1747
    %v1749 = vpop.f32.mrf.mxu0
    %v1750 = vadd.f32 %v1666, %v1749
    %1751 = vmatprep.mubr.f32.mxu0 0.0
    %1752 = vmatmul.mubr.f32.gmra.mxu0 %v1673
    %v1753 = vpop.f32.mrf.mxu0
    %v1754 = vadd.f32 %v1662, %v1753
    %v1755 = vpop.f32.mrf.mxu0
    %v1756 = vadd.f32 %v1666, %v1755
    %1757 = vmatprep.mubr.f32.mxu0 0.0
    %1758 = vmatmul.mubr.f32.gmra.mxu0 %v1676
    %v1759 = vpop.f32.mrf.mxu0
    %v1760 = vadd.f32 %v1662, %v1759
    %v1761 = vpop.f32.mrf.mxu0
    %v1762 = vadd.f32 %v1666, %v1761
    %1763 = vmatprep.mubr.f32.mxu0 0.0
    %1764 = vmatmul.mubr.f32.gmra.mxu0 %v1679
    %v1765 = vpop.f32.mrf.mxu0
    %v1766 = vadd.f32 %v1662, %v1765
    %v1767 = vpop.f32.mrf.mxu0
    %v1768 = vadd.f32 %v1666, %v1767
    %1769 = vdwg.mxu0
    %v1770 = vmul.f32 %v1750, 0.5
    %v1771 = vmul.f32 %v1756, 0.5
    %v1772 = vmul.f32 %v1762, 0.5
    %v1773 = vmul.f32 %v1768, 0.5
    %v1774 = vmul.f32 %v1750, 0.70710677
    %v1775 = vmul.f32 %v1756, 0.70710677
    %v1776 = vmul.f32 %v1762, 0.70710677
    %v1777 = vmul.f32 %v1768, 0.70710677
    %vm1778 = vcmp.ge.f32.partialorder %v1774, 0.0
    %vm1779 = vcmp.ge.f32.partialorder %v1775, 0.0
    %vm1780 = vcmp.ge.f32.partialorder %v1776, 0.0
    %vm1781 = vcmp.ge.f32.partialorder %v1777, 0.0
    %v1782 = vsel %vm1778, 1.0, -1.0
    %v1783 = vsel %vm1779, 1.0, -1.0
    %v1784 = vsel %vm1780, 1.0, -1.0
    %v1785 = vsel %vm1781, 1.0, -1.0
    %v1786 = vand.u32 2147483647, %v1774
    %v1787 = vand.u32 2147483647, %v1775
    %v1788 = vand.u32 2147483647, %v1776
    %v1789 = vand.u32 2147483647, %v1777
    %v1790 = vmul.f32 %v1786, 0.3275911
    %v1791 = vmul.f32 %v1787, 0.3275911
    %v1792 = vmul.f32 %v1788, 0.3275911
    %v1793 = vmul.f32 %v1789, 0.3275911
    %v1794 = vadd.f32 %v1790, 1.0
    %v1795 = vadd.f32 %v1791, 1.0
    %v1796 = vadd.f32 %v1792, 1.0
    %v1797 = vadd.f32 %v1793, 1.0
    %v1798 = vrcp.pop %v1794
    %v1799 = vmul.f32 1.0, %v1798
    %v1800 = vrcp.pop %v1795
    %v1801 = vmul.f32 1.0, %v1800
    %v1802 = vrcp.pop %v1796
    %v1803 = vmul.f32 1.0, %v1802
    %v1804 = vrcp.pop %v1797
    %v1805 = vmul.f32 1.0, %v1804
    %v1806 = vmul.f32 %v1799, 1.0614054
    %v1807 = vmul.f32 %v1801, 1.0614054
    %v1808 = vmul.f32 %v1803, 1.0614054
    %v1809 = vmul.f32 %v1805, 1.0614054
    %v1810 = vadd.f32 %v1806, -1.4531521
    %v1811 = vadd.f32 %v1807, -1.4531521
    %v1812 = vadd.f32 %v1808, -1.4531521
    %v1813 = vadd.f32 %v1809, -1.4531521
    %v1814 = vmul.f32 %v1810, %v1799
    %v1815 = vmul.f32 %v1811, %v1801
    %v1816 = vmul.f32 %v1812, %v1803
    %v1817 = vmul.f32 %v1813, %v1805
    %v1818 = vadd.f32 %v1814, 1.4214138
    %v1819 = vadd.f32 %v1815, 1.4214138
    %v1820 = vadd.f32 %v1816, 1.4214138
    %v1821 = vadd.f32 %v1817, 1.4214138
    %v1822 = vmul.f32 %v1818, %v1799
    %v1823 = vmul.f32 %v1819, %v1801
    %v1824 = vmul.f32 %v1820, %v1803
    %v1825 = vmul.f32 %v1821, %v1805
    %v1826 = vadd.f32 %v1822, -0.28449672
    %v1827 = vadd.f32 %v1823, -0.28449672
    %v1828 = vadd.f32 %v1824, -0.28449672
    %v1829 = vadd.f32 %v1825, -0.28449672
    %v1830 = vmul.f32 %v1826, %v1799
    %v1831 = vmul.f32 %v1827, %v1801
    %v1832 = vmul.f32 %v1828, %v1803
    %v1833 = vmul.f32 %v1829, %v1805
    %v1834 = vadd.f32 %v1830, 0.2548296
    %v1835 = vadd.f32 %v1831, 0.2548296
    %v1836 = vadd.f32 %v1832, 0.2548296
    %v1837 = vadd.f32 %v1833, 0.2548296
    %v1838 = vmul.f32 %v1834, %v1799
    %v1839 = vmul.f32 %v1835, %v1801
    %v1840 = vmul.f32 %v1836, %v1803
    %v1841 = vmul.f32 %v1837, %v1805
    %v1842 = vsub.f32 0.0, %v1786
    %v1843 = vsub.f32 0.0, %v1787
    %v1844 = vsub.f32 0.0, %v1788
    %v1845 = vsub.f32 0.0, %v1789
    %v1846 = vmul.f32 %v1842, %v1786
    %v1847 = vmul.f32 %v1843, %v1787
    %v1848 = vmul.f32 %v1844, %v1788
    %v1849 = vmul.f32 %v1845, %v1789
    %v1850 = vmul.f32 %v1846, 1.442695
    %v1851 = vpow.pop %v1850
    %v1852 = vmul.f32 %v1847, 1.442695
    %v1853 = vpow.pop %v1852
    %v1854 = vmul.f32 %v1848, 1.442695
    %v1855 = vpow.pop %v1854
    %v1856 = vmul.f32 %v1849, 1.442695
    %v1857 = vpow.pop %v1856
    %v1858 = vmul.f32 %v1838, %v1851
    %v1859 = vmul.f32 %v1839, %v1853
    %v1860 = vmul.f32 %v1840, %v1855
    %v1861 = vmul.f32 %v1841, %v1857
    %v1862 = vsub.f32 1.0, %v1858
    %v1863 = vsub.f32 1.0, %v1859
    %v1864 = vsub.f32 1.0, %v1860
    %v1865 = vsub.f32 1.0, %v1861
    %v1866 = vmul.f32 %v1782, %v1862
    %v1867 = vmul.f32 %v1783, %v1863
    %v1868 = vmul.f32 %v1784, %v1864
    %v1869 = vmul.f32 %v1785, %v1865
    %v1870 = vadd.f32 %v1866, 1.0
    %v1871 = vadd.f32 %v1867, 1.0
    %v1872 = vadd.f32 %v1868, 1.0
    %v1873 = vadd.f32 %v1869, 1.0
    %v1874 = vmul.f32 %v1770, %v1870
    %v1875 = vmul.f32 %v1771, %v1871
    %v1876 = vmul.f32 %v1772, %v1872
    %v1877 = vmul.f32 %v1773, %v1873
    %v1878 = vmul.f32 %v1748, %v1874
    %v1879 = vmul.f32 %v1754, %v1875
    %v1880 = vmul.f32 %v1760, %v1876
    %v1881 = vmul.f32 %v1766, %v1877
    %v1882 = vld [vmem:[#allocation2 + $0x80] sm:$0xff]
    %v1883 = vld [vmem:[#allocation2 + $0x90] sm:$0xff]
    %v1884 = vld [vmem:[#allocation2 + $0xa0] sm:$0xff]
    %v1885 = vld [vmem:[#allocation2 + $0xb0] sm:$0xff]
    %v1886 = vld [vmem:[#allocation2 + $0xc0] sm:$0xff]
    %v1887 = vld [vmem:[#allocation2 + $0xd0] sm:$0xff]
    %v1888 = vld [vmem:[#allocation2 + $0xe0] sm:$0xff]
    %v1889 = vld [vmem:[#allocation2 + $0xf0] sm:$0xff]
    %v1890 = vld [vmem:[#allocation2 + $0x100] sm:$0xff]
    %v1891 = vld [vmem:[#allocation2 + $0x110] sm:$0xff]
    %v1892 = vld [vmem:[#allocation2 + $0x120] sm:$0xff]
    %v1893 = vld [vmem:[#allocation2 + $0x130] sm:$0xff]
    %v1894 = vld [vmem:[#allocation2 + $0x140] sm:$0xff]
    %v1895 = vld [vmem:[#allocation2 + $0x150] sm:$0xff]
    %v1896 = vld [vmem:[#allocation2 + $0x160] sm:$0xff]
    %v1897 = vld [vmem:[#allocation2 + $0x170] sm:$0xff]
    %v1898 = vld [vmem:[#allocation2 + $0x185] ss:$0 sm:$0xff]
    %1899 = vmatprep.subr.mxu0 0.0
    %1900 = vmatpush1.msra.mxu0 %v1897
    %1901 = vmatprep.subr.mxu0 0.0
    %1902 = vmatpush1.msra.mxu0 %v1896
    %1903 = vmatprep.subr.mxu0 0.0
    %1904 = vmatpush1.msra.mxu0 %v1895
    %1905 = vmatprep.subr.mxu0 0.0
    %1906 = vmatpush1.msra.mxu0 %v1894
    %1907 = vmatprep.subr.mxu0 0.0
    %1908 = vmatpush1.msra.mxu0 %v1893
    %1909 = vmatprep.subr.mxu0 0.0
    %1910 = vmatpush1.msra.mxu0 %v1892
    %1911 = vmatprep.subr.mxu0 0.0
    %1912 = vmatpush1.msra.mxu0 %v1891
    %1913 = vmatprep.subr.mxu0 0.0
    %1914 = vmatpush1.msra.mxu0 %v1890
    %1915 = vmatprep.subr.mxu0 0.0
    %1916 = vmatpush1.msra.mxu0 %v1889
    %1917 = vmatprep.subr.mxu0 0.0
    %1918 = vmatpush1.msra.mxu0 %v1888
    %1919 = vmatprep.subr.mxu0 0.0
    %1920 = vmatpush1.msra.mxu0 %v1887
    %1921 = vmatprep.subr.mxu0 0.0
    %1922 = vmatpush1.msra.mxu0 %v1886
    %1923 = vmatprep.subr.mxu0 0.0
    %1924 = vmatpush1.msra.mxu0 %v1885
    %1925 = vmatprep.subr.mxu0 0.0
    %1926 = vmatpush1.msra.mxu0 %v1884
    %1927 = vmatprep.subr.mxu0 0.0
    %1928 = vmatpush1.msra.mxu0 %v1883
    %1929 = vmatprep.subr.mxu0 0.0
    %1930 = vmatpush1.msra.mxu0 %v1882
    %1931 = vmatprep.subr.mxu0 0.0
    %1932 = vmatpush2.msra.mxu0 0.0
    %1933 = vmatprep.subr.mxu0 0.0
    %1934 = vmatpush2.msra.mxu0 0.0
    %1935 = vmatprep.subr.mxu0 0.0
    %1936 = vmatpush2.msra.mxu0 0.0
    %1937 = vmatprep.subr.mxu0 0.0
    %1938 = vmatpush2.msra.mxu0 0.0
    %1939 = vmatprep.subr.mxu0 0.0
    %1940 = vmatpush2.msra.mxu0 0.0
    %1941 = vmatprep.subr.mxu0 0.0
    %1942 = vmatpush2.msra.mxu0 0.0
    %1943 = vmatprep.subr.mxu0 0.0
    %1944 = vmatpush2.msra.mxu0 0.0
    %1945 = vmatprep.subr.mxu0 0.0
    %1946 = vmatpush2.msra.mxu0 0.0
    %1947 = vmatprep.subr.mxu0 0.0
    %1948 = vmatpush2.msra.mxu0 0.0
    %1949 = vmatprep.subr.mxu0 0.0
    %1950 = vmatpush2.msra.mxu0 0.0
    %1951 = vmatprep.subr.mxu0 0.0
    %1952 = vmatpush2.msra.mxu0 0.0
    %1953 = vmatprep.subr.mxu0 0.0
    %1954 = vmatpush2.msra.mxu0 0.0
    %1955 = vmatprep.subr.mxu0 0.0
    %1956 = vmatpush2.msra.mxu0 0.0
    %1957 = vmatprep.subr.mxu0 0.0
    %1958 = vmatpush2.msra.mxu0 0.0
    %1959 = vmatprep.subr.mxu0 0.0
    %1960 = vmatpush2.msra.mxu0 0.0
    %1961 = vmatprep.subr.mxu0 0.0
    %1962 = vmatpush2.msra.mxu0 0.0
    %1963 = vmatprep.mubr.f32.mxu0 0.0
    %1964 = vmatmul.mubr.f32.gmra.mxu0 %v1878
    %v1965 = vpop.f32.mrf.mxu0
    %v1966 = vadd.f32 %v1898, %v1965
    %v1967 = vpop.f32.mrf.mxu0
    %1968 = vmatprep.mubr.f32.mxu0 0.0
    %1969 = vmatmul.mubr.f32.gmra.mxu0 %v1879
    %v1970 = vpop.f32.mrf.mxu0
    %v1971 = vadd.f32 %v1898, %v1970
    %v1972 = vpop.f32.mrf.mxu0
    %1973 = vmatprep.mubr.f32.mxu0 0.0
    %1974 = vmatmul.mubr.f32.gmra.mxu0 %v1880
    %v1975 = vpop.f32.mrf.mxu0
    %v1976 = vadd.f32 %v1898, %v1975
    %v1977 = vpop.f32.mrf.mxu0
    %1978 = vmatprep.mubr.f32.mxu0 0.0
    %1979 = vmatmul.mubr.f32.gmra.mxu0 %v1881
    %v1980 = vpop.f32.mrf.mxu0
    %v1981 = vadd.f32 %v1898, %v1980
    %v1982 = vpop.f32.mrf.mxu0
    %1983 = vdwg.mxu0
    %v1984 = vadd.f32 %v1644, %v1966
    %v1985 = vadd.f32 %v1645, %v1971
    %v1986 = vadd.f32 %v1646, %v1976
    %v1987 = vadd.f32 %v1647, %v1981
    %v1988 = vld [vmem:[#allocation2 + $0x183] ss:$0 sm:$0xff]
    %v1989 = vld [vmem:[#allocation2 + $0x184] ss:$0 sm:$0xff]
    %v1990 = vsel %vm156, %v1984, 0.0
    %1991 = vadd.xlane.f32.xlu0 %v1990
    %v1992 = vpop.xlane.xlu0 %1991
    %v1993 = vsel %vm156, %v1985, 0.0
    %1994 = vadd.xlane.f32.xlu0 %v1993
    %v1995 = vpop.xlane.xlu0 %1994
    %v1996 = vsel %vm156, %v1986, 0.0
    %1997 = vadd.xlane.f32.xlu0 %v1996
    %v1998 = vpop.xlane.xlu0 %1997
    %v1999 = vsel %vm156, %v1987, 0.0
    %2000 = vadd.xlane.f32.xlu0 %v1999
    %v2001 = vpop.xlane.xlu0 %2000
    %v2002 = vmul.f32 %v1992, %v163
    %v2003 = vmul.f32 %v1995, %v163
    %v2004 = vmul.f32 %v1998, %v163
    %v2005 = vmul.f32 %v2001, %v163
    %v2006 = vsub.f32 %v1984, %v2002
    %v2007 = vsub.f32 %v1985, %v2003
    %v2008 = vsub.f32 %v1986, %v2004
    %v2009 = vsub.f32 %v1987, %v2005
    %v2010 = vmul.f32 %v2006, %v2006
    %v2011 = vmul.f32 %v2007, %v2007
    %v2012 = vmul.f32 %v2008, %v2008
    %v2013 = vmul.f32 %v2009, %v2009
    %v2014 = vsel %vm156, %v2010, 0.0
    %2015 = vadd.xlane.f32.xlu0 %v2014
    %v2016 = vpop.xlane.xlu0 %2015
    %v2017 = vsel %vm156, %v2011, 0.0
    %2018 = vadd.xlane.f32.xlu0 %v2017
    %v2019 = vpop.xlane.xlu0 %2018
    %v2020 = vsel %vm156, %v2012, 0.0
    %2021 = vadd.xlane.f32.xlu0 %v2020
    %v2022 = vpop.xlane.xlu0 %2021
    %v2023 = vsel %vm156, %v2013, 0.0
    %2024 = vadd.xlane.f32.xlu0 %v2023
    %v2025 = vpop.xlane.xlu0 %2024
    %v2026 = vmul.f32 %v2016, %v163
    %v2027 = vmul.f32 %v2019, %v163
    %v2028 = vmul.f32 %v2022, %v163
    %v2029 = vmul.f32 %v2025, %v163
    %v2030 = vadd.f32 %v2026, 1e-05
    %v2031 = vadd.f32 %v2027, 1e-05
    %v2032 = vadd.f32 %v2028, 1e-05
    %v2033 = vadd.f32 %v2029, 1e-05
    %v2034 = vrsqrt.pop %v2030
    %v2035 = vrsqrt.pop %v2031
    %v2036 = vrsqrt.pop %v2032
    %v2037 = vrsqrt.pop %v2033
    %v2038 = vmul.f32 %v2006, %v2034
    %v2039 = vmul.f32 %v2007, %v2035
    %v2040 = vmul.f32 %v2008, %v2036
    %v2041 = vmul.f32 %v2009, %v2037
    %v2042 = vmul.f32 %v2038, %v1988
    %v2043 = vmul.f32 %v2039, %v1988
    %v2044 = vmul.f32 %v2040, %v1988
    %v2045 = vmul.f32 %v2041, %v1988
    %v2046 = vadd.f32 %v2042, %v1989
    %v2047 = vadd.f32 %v2043, %v1989
    %v2048 = vadd.f32 %v2044, %v1989
    %v2049 = vadd.f32 %v2045, %v1989
    %v2050 = vld [vmem:[#allocation2 + $0x190] sm:$0xff]
    %v2051 = vld [vmem:[#allocation2 + $0x1a0] sm:$0xff]
    %v2052 = vld [vmem:[#allocation2 + $0x1b0] sm:$0xff]
    %v2053 = vld [vmem:[#allocation2 + $0x1c0] sm:$0xff]
    %v2054 = vld [vmem:[#allocation2 + $0x198] sm:$0xff]
    %v2055 = vld [vmem:[#allocation2 + $0x1a8] sm:$0xff]
    %v2056 = vld [vmem:[#allocation2 + $0x1b8] sm:$0xff]
    %v2057 = vld [vmem:[#allocation2 + $0x1c8] sm:$0xff]
    %v2059 = vsel %vm156, %v2046, 0
    %v2062 = vsel %vm156, %v2047, 0
    %v2065 = vsel %vm156, %v2048, 0
    %v2068 = vsel %vm156, %v2049, 0
    %2070 = vmatprep.subr.mxu0 0.0
    %2071 = vmatpush1.msra.mxu0 0.0
    %2072 = vmatprep.subr.mxu0 0.0
    %2073 = vmatpush1.msra.mxu0 0.0
    %2074 = vmatprep.subr.mxu0 0.0
    %2075 = vmatpush1.msra.mxu0 0.0
    %2076 = vmatprep.subr.mxu0 0.0
    %2077 = vmatpush1.msra.mxu0 0.0
    %2078 = vmatprep.subr.mxu0 0.0
    %2079 = vmatpush1.msra.mxu0 0.0
    %2080 = vmatprep.subr.mxu0 0.0
    %2081 = vmatpush1.msra.mxu0 0.0
    %2082 = vmatprep.subr.mxu0 0.0
    %2083 = vmatpush1.msra.mxu0 0.0
    %2084 = vmatprep.subr.mxu0 0.0
    %2085 = vmatpush1.msra.mxu0 0.0
    %2086 = vmatprep.subr.mxu0 0.0
    %2087 = vmatpush1.msra.mxu0 0.0
    %2088 = vmatprep.subr.mxu0 0.0
    %2089 = vmatpush1.msra.mxu0 0.0
    %2090 = vmatprep.subr.mxu0 0.0
    %2091 = vmatpush1.msra.mxu0 0.0
    %2092 = vmatprep.subr.mxu0 0.0
    %2093 = vmatpush1.msra.mxu0 0.0
    %2094 = vmatprep.subr.mxu0 0.0
    %2095 = vmatpush1.msra.mxu0 %v2053
    %2096 = vmatprep.subr.mxu0 0.0
    %2097 = vmatpush1.msra.mxu0 %v2052
    %2098 = vmatprep.subr.mxu0 0.0
    %2099 = vmatpush1.msra.mxu0 %v2051
    %2100 = vmatprep.subr.mxu0 0.0
    %2101 = vmatpush1.msra.mxu0 %v2050
    %2102 = vmatprep.subr.mxu0 0.0
    %2103 = vmatpush2.msra.mxu0 0.0
    %2104 = vmatprep.subr.mxu0 0.0
    %2105 = vmatpush2.msra.mxu0 0.0
    %2106 = vmatprep.subr.mxu0 0.0
    %2107 = vmatpush2.msra.mxu0 0.0
    %2108 = vmatprep.subr.mxu0 0.0
    %2109 = vmatpush2.msra.mxu0 0.0
    %2110 = vmatprep.subr.mxu0 0.0
    %2111 = vmatpush2.msra.mxu0 0.0
    %2112 = vmatprep.subr.mxu0 0.0
    %2113 = vmatpush2.msra.mxu0 0.0
    %2114 = vmatprep.subr.mxu0 0.0
    %2115 = vmatpush2.msra.mxu0 0.0
    %2116 = vmatprep.subr.mxu0 0.0
    %2117 = vmatpush2.msra.mxu0 0.0
    %2118 = vmatprep.subr.mxu0 0.0
    %2119 = vmatpush2.msra.mxu0 0.0
    %2120 = vmatprep.subr.mxu0 0.0
    %2121 = vmatpush2.msra.mxu0 0.0
    %2122 = vmatprep.subr.mxu0 0.0
    %2123 = vmatpush2.msra.mxu0 0.0
    %2124 = vmatprep.subr.mxu0 0.0
    %2125 = vmatpush2.msra.mxu0 0.0
    %2126 = vmatprep.subr.mxu0 0.0
    %2127 = vmatpush2.msra.mxu0 0.0
    %2128 = vmatprep.subr.mxu0 0.0
    %2129 = vmatpush2.msra.mxu0 0.0
    %2130 = vmatprep.subr.mxu0 0.0
    %2131 = vmatpush2.msra.mxu0 0.0
    %2132 = vmatprep.subr.mxu0 0.0
    %2133 = vmatpush2.msra.mxu0 0.0
    %2134 = vmatprep.mubr.f32.mxu0 0.0
    %2135 = vmatmul.mubr.f32.gmra.mxu0 %v2059
    %v2136 = vpop.f32.mrf.mxu0
    %v2137 = vadd.f32 0.0, %v2136
    %v2138 = vpop.f32.mrf.mxu0
    %2139 = vmatprep.mubr.f32.mxu0 0.0
    %2140 = vmatmul.mubr.f32.gmra.mxu0 %v2062
    %v2141 = vpop.f32.mrf.mxu0
    %v2142 = vadd.f32 0.0, %v2141
    %v2143 = vpop.f32.mrf.mxu0
    %2144 = vmatprep.mubr.f32.mxu0 0.0
    %2145 = vmatmul.mubr.f32.gmra.mxu0 %v2065
    %v2146 = vpop.f32.mrf.mxu0
    %v2147 = vadd.f32 0.0, %v2146
    %v2148 = vpop.f32.mrf.mxu0
    %2149 = vmatprep.mubr.f32.mxu0 0.0
    %2150 = vmatmul.mubr.f32.gmra.mxu0 %v2068
    %v2151 = vpop.f32.mrf.mxu0
    %v2152 = vadd.f32 0.0, %v2151
    %v2153 = vpop.f32.mrf.mxu0
    %2154 = vdwg.mxu0
    %v2155 = vsub.f32 0.0, %v2137
    %v2156 = vsub.f32 0.0, %v2142
    %v2157 = vsub.f32 0.0, %v2147
    %v2158 = vsub.f32 0.0, %v2152
    %v2159 = vmul.f32 %v2155, 1.442695
    %v2160 = vpow.pop %v2159
    %v2161 = vmul.f32 %v2156, 1.442695
    %v2162 = vpow.pop %v2161
    %v2163 = vmul.f32 %v2157, 1.442695
    %v2164 = vpow.pop %v2163
    %v2165 = vmul.f32 %v2158, 1.442695
    %v2166 = vpow.pop %v2165
    %v2167 = vadd.f32 %v2160, 1.0
    %v2168 = vadd.f32 %v2162, 1.0
    %v2169 = vadd.f32 %v2164, 1.0
    %v2170 = vadd.f32 %v2166, 1.0
    %v2171 = vrcp.pop %v2167
    %v2172 = vmul.f32 1.0, %v2171
    %v2173 = vrcp.pop %v2168
    %v2174 = vmul.f32 1.0, %v2173
    %v2175 = vrcp.pop %v2169
    %v2176 = vmul.f32 1.0, %v2175
    %v2177 = vrcp.pop %v2170
    %v2178 = vmul.f32 1.0, %v2177
    %2183 = vrot.lane.b32.xlu0 %v2137, 96
    %v2184 = vpop.permute.xlu0 %2183
    %2185 = vrot.lane.b32.xlu0 %v2142, 96
    %v2186 = vpop.permute.xlu0 %2185
    %2187 = vrot.lane.b32.xlu0 %v2147, 96
    %v2188 = vpop.permute.xlu0 %2187
    %2189 = vrot.lane.b32.xlu0 %v2152, 96
    %v2190 = vpop.permute.xlu0 %2189
    %v2191 = vsel %vm339, %v2137, 0
    %v2193 = vsel %vm339, %v2142, 0
    %v2195 = vsel %vm339, %v2147, 0
    %v2197 = vsel %vm339, %v2152, 0
    %v2199 = vsel %vm339, %v2184, 0
    %v2201 = vsel %vm339, %v2186, 0
    %v2203 = vsel %vm339, %v2188, 0
    %v2205 = vsel %vm339, %v2190, 0
    %2207 = vmatprep.subr.mxu0 0.0
    %2208 = vmatpush1.xpose.msra.mxu0 0.0
    %2209 = vmatprep.subr.mxu0 0.0
    %2210 = vmatpush1.xpose.msra.mxu0 0.0
    %2211 = vmatprep.subr.mxu0 0.0
    %2212 = vmatpush1.xpose.msra.mxu0 0.0
    %2213 = vmatprep.subr.mxu0 0.0
    %2214 = vmatpush1.xpose.msra.mxu0 0.0
    %2215 = vmatprep.subr.mxu0 0.0
    %2216 = vmatpush1.xpose.msra.mxu0 0.0
    %2217 = vmatprep.subr.mxu0 0.0
    %2218 = vmatpush1.xpose.msra.mxu0 0.0
    %2219 = vmatprep.subr.mxu0 0.0
    %2220 = vmatpush1.xpose.msra.mxu0 0.0
    %2221 = vmatprep.subr.mxu0 0.0
    %2222 = vmatpush1.xpose.msra.mxu0 0.0
    %2223 = vmatprep.subr.mxu0 0.0
    %2224 = vmatpush1.xpose.msra.mxu0 0.0
    %2225 = vmatprep.subr.mxu0 0.0
    %2226 = vmatpush1.xpose.msra.mxu0 0.0
    %2227 = vmatprep.subr.mxu0 0.0
    %2228 = vmatpush1.xpose.msra.mxu0 0.0
    %2229 = vmatprep.subr.mxu0 0.0
    %2230 = vmatpush1.xpose.msra.mxu0 0.0
    %2231 = vmatprep.subr.mxu0 0.0
    %2232 = vmatpush1.xpose.msra.mxu0 %v2205
    %2233 = vmatprep.subr.mxu0 0.0
    %2234 = vmatpush1.xpose.msra.mxu0 %v2203
    %2235 = vmatprep.subr.mxu0 0.0
    %2236 = vmatpush1.xpose.msra.mxu0 %v2201
    %2237 = vmatprep.subr.mxu0 0.0
    %2238 = vmatpush1.xpose.msra.mxu0 %v2199
    %2239 = vmatprep.subr.mxu0 0.0
    %2240 = vmatpush2.xpose.msra.mxu0 0.0
    %2241 = vmatprep.subr.mxu0 0.0
    %2242 = vmatpush2.xpose.msra.mxu0 0.0
    %2243 = vmatprep.subr.mxu0 0.0
    %2244 = vmatpush2.xpose.msra.mxu0 0.0
    %2245 = vmatprep.subr.mxu0 0.0
    %2246 = vmatpush2.xpose.msra.mxu0 0.0
    %2247 = vmatprep.subr.mxu0 0.0
    %2248 = vmatpush2.xpose.msra.mxu0 0.0
    %2249 = vmatprep.subr.mxu0 0.0
    %2250 = vmatpush2.xpose.msra.mxu0 0.0
    %2251 = vmatprep.subr.mxu0 0.0
    %2252 = vmatpush2.xpose.msra.mxu0 0.0
    %2253 = vmatprep.subr.mxu0 0.0
    %2254 = vmatpush2.xpose.msra.mxu0 0.0
    %2255 = vmatprep.subr.mxu0 0.0
    %2256 = vmatpush2.xpose.msra.mxu0 0.0
    %2257 = vmatprep.subr.mxu0 0.0
    %2258 = vmatpush2.xpose.msra.mxu0 0.0
    %2259 = vmatprep.subr.mxu0 0.0
    %2260 = vmatpush2.xpose.msra.mxu0 0.0
    %2261 = vmatprep.subr.mxu0 0.0
    %2262 = vmatpush2.xpose.msra.mxu0 0.0
    %2263 = vmatprep.subr.mxu0 0.0
    %2264 = vmatpush2.xpose.msra.mxu0 0.0
    %2265 = vmatprep.subr.mxu0 0.0
    %2266 = vmatpush2.xpose.msra.mxu0 0.0
    %2267 = vmatprep.subr.mxu0 0.0
    %2268 = vmatpush2.xpose.msra.mxu0 0.0
    %2269 = vmatprep.subr.mxu0 0.0
    %2270 = vmatpush2.xpose.msra.mxu0 0.0
    %2271 = vmatprep.mubr.f32.mxu0 0.0
    %2272 = vmatmul.mubr.f32.gmra.mxu0 %v2191
    %v2273 = vpop.f32.mrf.mxu0
    %v2274 = vadd.f32 %v197, %v2273
    %v2275 = vpop.f32.mrf.mxu0
    %2276 = vmatprep.mubr.f32.mxu0 0.0
    %2277 = vmatmul.mubr.f32.gmra.mxu0 %v2193
    %v2278 = vpop.f32.mrf.mxu0
    %v2279 = vadd.f32 %v198, %v2278
    %v2280 = vpop.f32.mrf.mxu0
    %2281 = vmatprep.mubr.f32.mxu0 0.0
    %2282 = vmatmul.mubr.f32.gmra.mxu0 %v2195
    %v2283 = vpop.f32.mrf.mxu0
    %v2284 = vadd.f32 %v199, %v2283
    %v2285 = vpop.f32.mrf.mxu0
    %2286 = vmatprep.mubr.f32.mxu0 0.0
    %2287 = vmatmul.mubr.f32.gmra.mxu0 %v2197
    %v2288 = vpop.f32.mrf.mxu0
    %v2289 = vadd.f32 %v200, %v2288
    %v2290 = vpop.f32.mrf.mxu0
    %2291 = vdwg.mxu0
    %v2292 = vsel %vm156, %v2274, -inf
    %2293 = vmax.xlane.f32.xlu0 %v2292
    %v2294 = vpop.xlane.xlu0 %2293
    %v2295 = vsel %vm156, %v2279, -inf
    %2296 = vmax.xlane.f32.xlu0 %v2295
    %v2297 = vpop.xlane.xlu0 %2296
    %v2298 = vsel %vm156, %v2284, -inf
    %2299 = vmax.xlane.f32.xlu0 %v2298
    %v2300 = vpop.xlane.xlu0 %2299
    %v2301 = vsel %vm156, %v2289, -inf
    %2302 = vmax.xlane.f32.xlu0 %v2301
    %v2303 = vpop.xlane.xlu0 %2302
    %v2304 = vsub.f32 %v2274, %v2294
    %v2305 = vsub.f32 %v2279, %v2297
    %v2306 = vsub.f32 %v2284, %v2300
    %v2307 = vsub.f32 %v2289, %v2303
    %v2308 = vmul.f32 %v2304, 1.442695
    %v2309 = vpow.pop %v2308
    %v2310 = vmul.f32 %v2305, 1.442695
    %v2311 = vpow.pop %v2310
    %v2312 = vmul.f32 %v2306, 1.442695
    %v2313 = vpow.pop %v2312
    %v2314 = vmul.f32 %v2307, 1.442695
    %v2315 = vpow.pop %v2314
    %v2316 = vsel %vm156, %v2309, 0.0
    %2317 = vadd.xlane.f32.xlu0 %v2316
    %v2318 = vpop.xlane.xlu0 %2317
    %v2319 = vsel %vm156, %v2311, 0.0
    %2320 = vadd.xlane.f32.xlu0 %v2319
    %v2321 = vpop.xlane.xlu0 %2320
    %v2322 = vsel %vm156, %v2313, 0.0
    %2323 = vadd.xlane.f32.xlu0 %v2322
    %v2324 = vpop.xlane.xlu0 %2323
    %v2325 = vsel %vm156, %v2315, 0.0
    %2326 = vadd.xlane.f32.xlu0 %v2325
    %v2327 = vpop.xlane.xlu0 %2326
    %v2328 = vrcp.pop %v2318
    %v2329 = vrcp.pop %v2321
    %v2330 = vrcp.pop %v2324
    %v2331 = vrcp.pop %v2327
    %v2332 = vmul.f32 %v2309, %v2328
    %v2333 = vmul.f32 %v2311, %v2329
    %v2334 = vmul.f32 %v2313, %v2330
    %v2335 = vmul.f32 %v2315, %v2331
    %2336 = vrot.lane.b32.xlu0 %v2137, 64
    %v2337 = vpop.permute.xlu0 %2336
    %2338 = vrot.lane.b32.xlu0 %v2142, 64
    %v2339 = vpop.permute.xlu0 %2338
    %2340 = vrot.lane.b32.xlu0 %v2147, 64
    %v2341 = vpop.permute.xlu0 %2340
    %2342 = vrot.lane.b32.xlu0 %v2152, 64
    %v2343 = vpop.permute.xlu0 %2342
    %v2349 = vsel %vm156, %v2332, 0
    %v2352 = vsel %vm156, %v2333, 0
    %v2355 = vsel %vm156, %v2334, 0
    %v2358 = vsel %vm156, %v2335, 0
    %2360 = vmatprep.subr.mxu0 0.0
    %2361 = vmatpush1.msra.mxu0 0.0
    %2362 = vmatprep.subr.mxu0 0.0
    %2363 = vmatpush1.msra.mxu0 0.0
    %2364 = vmatprep.subr.mxu0 0.0
    %2365 = vmatpush1.msra.mxu0 0.0
    %2366 = vmatprep.subr.mxu0 0.0
    %2367 = vmatpush1.msra.mxu0 0.0
    %2368 = vmatprep.subr.mxu0 0.0
    %2369 = vmatpush1.msra.mxu0 0.0
    %2370 = vmatprep.subr.mxu0 0.0
    %2371 = vmatpush1.msra.mxu0 0.0
    %2372 = vmatprep.subr.mxu0 0.0
    %2373 = vmatpush1.msra.mxu0 0.0
    %2374 = vmatprep.subr.mxu0 0.0
    %2375 = vmatpush1.msra.mxu0 0.0
    %2376 = vmatprep.subr.mxu0 0.0
    %2377 = vmatpush1.msra.mxu0 0.0
    %2378 = vmatprep.subr.mxu0 0.0
    %2379 = vmatpush1.msra.mxu0 0.0
    %2380 = vmatprep.subr.mxu0 0.0
    %2381 = vmatpush1.msra.mxu0 0.0
    %2382 = vmatprep.subr.mxu0 0.0
    %2383 = vmatpush1.msra.mxu0 0.0
    %2384 = vmatprep.subr.mxu0 0.0
    %2385 = vmatpush1.msra.mxu0 %v2343
    %2386 = vmatprep.subr.mxu0 0.0
    %2387 = vmatpush1.msra.mxu0 %v2341
    %2388 = vmatprep.subr.mxu0 0.0
    %2389 = vmatpush1.msra.mxu0 %v2339
    %2390 = vmatprep.subr.mxu0 0.0
    %2391 = vmatpush1.msra.mxu0 %v2337
    %2392 = vmatprep.subr.mxu0 0.0
    %2393 = vmatpush2.msra.mxu0 0.0
    %2394 = vmatprep.subr.mxu0 0.0
    %2395 = vmatpush2.msra.mxu0 0.0
    %2396 = vmatprep.subr.mxu0 0.0
    %2397 = vmatpush2.msra.mxu0 0.0
    %2398 = vmatprep.subr.mxu0 0.0
    %2399 = vmatpush2.msra.mxu0 0.0
    %2400 = vmatprep.subr.mxu0 0.0
    %2401 = vmatpush2.msra.mxu0 0.0
    %2402 = vmatprep.subr.mxu0 0.0
    %2403 = vmatpush2.msra.mxu0 0.0
    %2404 = vmatprep.subr.mxu0 0.0
    %2405 = vmatpush2.msra.mxu0 0.0
    %2406 = vmatprep.subr.mxu0 0.0
    %2407 = vmatpush2.msra.mxu0 0.0
    %2408 = vmatprep.subr.mxu0 0.0
    %2409 = vmatpush2.msra.mxu0 0.0
    %2410 = vmatprep.subr.mxu0 0.0
    %2411 = vmatpush2.msra.mxu0 0.0
    %2412 = vmatprep.subr.mxu0 0.0
    %2413 = vmatpush2.msra.mxu0 0.0
    %2414 = vmatprep.subr.mxu0 0.0
    %2415 = vmatpush2.msra.mxu0 0.0
    %2416 = vmatprep.subr.mxu0 0.0
    %2417 = vmatpush2.msra.mxu0 0.0
    %2418 = vmatprep.subr.mxu0 0.0
    %2419 = vmatpush2.msra.mxu0 0.0
    %2420 = vmatprep.subr.mxu0 0.0
    %2421 = vmatpush2.msra.mxu0 0.0
    %2422 = vmatprep.subr.mxu0 0.0
    %2423 = vmatpush2.msra.mxu0 0.0
    %2424 = vmatprep.mubr.f32.mxu0 0.0
    %2425 = vmatmul.mubr.f32.gmra.mxu0 %v2349
    %v2426 = vpop.f32.mrf.mxu0
    %v2427 = vadd.f32 0.0, %v2426
    %v2428 = vpop.f32.mrf.mxu0
    %2429 = vmatprep.mubr.f32.mxu0 0.0
    %2430 = vmatmul.mubr.f32.gmra.mxu0 %v2352
    %v2431 = vpop.f32.mrf.mxu0
    %v2432 = vadd.f32 0.0, %v2431
    %v2433 = vpop.f32.mrf.mxu0
    %2434 = vmatprep.mubr.f32.mxu0 0.0
    %2435 = vmatmul.mubr.f32.gmra.mxu0 %v2355
    %v2436 = vpop.f32.mrf.mxu0
    %v2437 = vadd.f32 0.0, %v2436
    %v2438 = vpop.f32.mrf.mxu0
    %2439 = vmatprep.mubr.f32.mxu0 0.0
    %2440 = vmatmul.mubr.f32.gmra.mxu0 %v2358
    %v2441 = vpop.f32.mrf.mxu0
    %v2442 = vadd.f32 0.0, %v2441
    %v2443 = vpop.f32.mrf.mxu0
    %2444 = vdwg.mxu0
    %2445 = vrot.lane.b32.xlu0 %v2137, 120
    %v2446 = vpop.permute.xlu0 %2445
    %2447 = vrot.lane.b32.xlu0 %v2142, 120
    %v2448 = vpop.permute.xlu0 %2447
    %2449 = vrot.lane.b32.xlu0 %v2147, 120
    %v2450 = vpop.permute.xlu0 %2449
    %2451 = vrot.lane.b32.xlu0 %v2152, 120
    %v2452 = vpop.permute.xlu0 %2451
    %2453 = vrot.lane.b32.xlu0 %v2137, 88
    %v2454 = vpop.permute.xlu0 %2453
    %2455 = vrot.lane.b32.xlu0 %v2142, 88
    %v2456 = vpop.permute.xlu0 %2455
    %2457 = vrot.lane.b32.xlu0 %v2147, 88
    %v2458 = vpop.permute.xlu0 %2457
    %2459 = vrot.lane.b32.xlu0 %v2152, 88
    %v2460 = vpop.permute.xlu0 %2459
    %v2461 = vsel %vm339, %v2446, 0
    %v2463 = vsel %vm339, %v2448, 0
    %v2465 = vsel %vm339, %v2450, 0
    %v2467 = vsel %vm339, %v2452, 0
    %v2469 = vsel %vm339, %v2454, 0
    %v2471 = vsel %vm339, %v2456, 0
    %v2473 = vsel %vm339, %v2458, 0
    %v2475 = vsel %vm339, %v2460, 0
    %2477 = vmatprep.subr.mxu0 0.0
    %2478 = vmatpush1.xpose.msra.mxu0 0.0
    %2479 = vmatprep.subr.mxu0 0.0
    %2480 = vmatpush1.xpose.msra.mxu0 0.0
    %2481 = vmatprep.subr.mxu0 0.0
    %2482 = vmatpush1.xpose.msra.mxu0 0.0
    %2483 = vmatprep.subr.mxu0 0.0
    %2484 = vmatpush1.xpose.msra.mxu0 0.0
    %2485 = vmatprep.subr.mxu0 0.0
    %2486 = vmatpush1.xpose.msra.mxu0 0.0
    %2487 = vmatprep.subr.mxu0 0.0
    %2488 = vmatpush1.xpose.msra.mxu0 0.0
    %2489 = vmatprep.subr.mxu0 0.0
    %2490 = vmatpush1.xpose.msra.mxu0 0.0
    %2491 = vmatprep.subr.mxu0 0.0
    %2492 = vmatpush1.xpose.msra.mxu0 0.0
    %2493 = vmatprep.subr.mxu0 0.0
    %2494 = vmatpush1.xpose.msra.mxu0 0.0
    %2495 = vmatprep.subr.mxu0 0.0
    %2496 = vmatpush1.xpose.msra.mxu0 0.0
    %2497 = vmatprep.subr.mxu0 0.0
    %2498 = vmatpush1.xpose.msra.mxu0 0.0
    %2499 = vmatprep.subr.mxu0 0.0
    %2500 = vmatpush1.xpose.msra.mxu0 0.0
    %2501 = vmatprep.subr.mxu0 0.0
    %2502 = vmatpush1.xpose.msra.mxu0 %v2475
    %2503 = vmatprep.subr.mxu0 0.0
    %2504 = vmatpush1.xpose.msra.mxu0 %v2473
    %2505 = vmatprep.subr.mxu0 0.0
    %2506 = vmatpush1.xpose.msra.mxu0 %v2471
    %2507 = vmatprep.subr.mxu0 0.0
    %2508 = vmatpush1.xpose.msra.mxu0 %v2469
    %2509 = vmatprep.subr.mxu0 0.0
    %2510 = vmatpush2.xpose.msra.mxu0 0.0
    %2511 = vmatprep.subr.mxu0 0.0
    %2512 = vmatpush2.xpose.msra.mxu0 0.0
    %2513 = vmatprep.subr.mxu0 0.0
    %2514 = vmatpush2.xpose.msra.mxu0 0.0
    %2515 = vmatprep.subr.mxu0 0.0
    %2516 = vmatpush2.xpose.msra.mxu0 0.0
    %2517 = vmatprep.subr.mxu0 0.0
    %2518 = vmatpush2.xpose.msra.mxu0 0.0
    %2519 = vmatprep.subr.mxu0 0.0
    %2520 = vmatpush2.xpose.msra.mxu0 0.0
    %2521 = vmatprep.subr.mxu0 0.0
    %2522 = vmatpush2.xpose.msra.mxu0 0.0
    %2523 = vmatprep.subr.mxu0 0.0
    %2524 = vmatpush2.xpose.msra.mxu0 0.0
    %2525 = vmatprep.subr.mxu0 0.0
    %2526 = vmatpush2.xpose.msra.mxu0 0.0
    %2527 = vmatprep.subr.mxu0 0.0
    %2528 = vmatpush2.xpose.msra.mxu0 0.0
    %2529 = vmatprep.subr.mxu0 0.0
    %2530 = vmatpush2.xpose.msra.mxu0 0.0
    %2531 = vmatprep.subr.mxu0 0.0
    %2532 = vmatpush2.xpose.msra.mxu0 0.0
    %2533 = vmatprep.subr.mxu0 0.0
    %2534 = vmatpush2.xpose.msra.mxu0 0.0
    %2535 = vmatprep.subr.mxu0 0.0
    %2536 = vmatpush2.xpose.msra.mxu0 0.0
    %2537 = vmatprep.subr.mxu0 0.0
    %2538 = vmatpush2.xpose.msra.mxu0 0.0
    %2539 = vmatprep.subr.mxu0 0.0
    %2540 = vmatpush2.xpose.msra.mxu0 0.0
    %2541 = vmatprep.mubr.f32.mxu0 0.0
    %2542 = vmatmul.mubr.f32.gmra.mxu0 %v2461
    %v2543 = vpop.f32.mrf.mxu0
    %v2544 = vadd.f32 %v197, %v2543
    %v2545 = vpop.f32.mrf.mxu0
    %2546 = vmatprep.mubr.f32.mxu0 0.0
    %2547 = vmatmul.mubr.f32.gmra.mxu0 %v2463
    %v2548 = vpop.f32.mrf.mxu0
    %v2549 = vadd.f32 %v198, %v2548
    %v2550 = vpop.f32.mrf.mxu0
    %2551 = vmatprep.mubr.f32.mxu0 0.0
    %2552 = vmatmul.mubr.f32.gmra.mxu0 %v2465
    %v2553 = vpop.f32.mrf.mxu0
    %v2554 = vadd.f32 %v199, %v2553
    %v2555 = vpop.f32.mrf.mxu0
    %2556 = vmatprep.mubr.f32.mxu0 0.0
    %2557 = vmatmul.mubr.f32.gmra.mxu0 %v2467
    %v2558 = vpop.f32.mrf.mxu0
    %v2559 = vadd.f32 %v200, %v2558
    %v2560 = vpop.f32.mrf.mxu0
    %2561 = vdwg.mxu0
    %v2562 = vsel %vm156, %v2544, -inf
    %2563 = vmax.xlane.f32.xlu0 %v2562
    %v2564 = vpop.xlane.xlu0 %2563
    %v2565 = vsel %vm156, %v2549, -inf
    %2566 = vmax.xlane.f32.xlu0 %v2565
    %v2567 = vpop.xlane.xlu0 %2566
    %v2568 = vsel %vm156, %v2554, -inf
    %2569 = vmax.xlane.f32.xlu0 %v2568
    %v2570 = vpop.xlane.xlu0 %2569
    %v2571 = vsel %vm156, %v2559, -inf
    %2572 = vmax.xlane.f32.xlu0 %v2571
    %v2573 = vpop.xlane.xlu0 %2572
    %v2574 = vsub.f32 %v2544, %v2564
    %v2575 = vsub.f32 %v2549, %v2567
    %v2576 = vsub.f32 %v2554, %v2570
    %v2577 = vsub.f32 %v2559, %v2573
    %v2578 = vmul.f32 %v2574, 1.442695
    %v2579 = vpow.pop %v2578
    %v2580 = vmul.f32 %v2575, 1.442695
    %v2581 = vpow.pop %v2580
    %v2582 = vmul.f32 %v2576, 1.442695
    %v2583 = vpow.pop %v2582
    %v2584 = vmul.f32 %v2577, 1.442695
    %v2585 = vpow.pop %v2584
    %v2586 = vsel %vm156, %v2579, 0.0
    %2587 = vadd.xlane.f32.xlu0 %v2586
    %v2588 = vpop.xlane.xlu0 %2587
    %v2589 = vsel %vm156, %v2581, 0.0
    %2590 = vadd.xlane.f32.xlu0 %v2589
    %v2591 = vpop.xlane.xlu0 %2590
    %v2592 = vsel %vm156, %v2583, 0.0
    %2593 = vadd.xlane.f32.xlu0 %v2592
    %v2594 = vpop.xlane.xlu0 %2593
    %v2595 = vsel %vm156, %v2585, 0.0
    %2596 = vadd.xlane.f32.xlu0 %v2595
    %v2597 = vpop.xlane.xlu0 %2596
    %v2598 = vrcp.pop %v2588
    %v2599 = vrcp.pop %v2591
    %v2600 = vrcp.pop %v2594
    %v2601 = vrcp.pop %v2597
    %v2602 = vmul.f32 %v2579, %v2598
    %v2603 = vmul.f32 %v2581, %v2599
    %v2604 = vmul.f32 %v2583, %v2600
    %v2605 = vmul.f32 %v2585, %v2601
    %2606 = vrot.lane.b32.xlu0 %v2137, 56
    %v2607 = vpop.permute.xlu0 %2606
    %2608 = vrot.lane.b32.xlu0 %v2142, 56
    %v2609 = vpop.permute.xlu0 %2608
    %2610 = vrot.lane.b32.xlu0 %v2147, 56
    %v2611 = vpop.permute.xlu0 %2610
    %2612 = vrot.lane.b32.xlu0 %v2152, 56
    %v2613 = vpop.permute.xlu0 %2612
    %v2619 = vsel %vm156, %v2602, 0
    %v2622 = vsel %vm156, %v2603, 0
    %v2625 = vsel %vm156, %v2604, 0
    %v2628 = vsel %vm156, %v2605, 0
    %2630 = vmatprep.subr.mxu0 0.0
    %2631 = vmatpush1.msra.mxu0 0.0
    %2632 = vmatprep.subr.mxu0 0.0
    %2633 = vmatpush1.msra.mxu0 0.0
    %2634 = vmatprep.subr.mxu0 0.0
    %2635 = vmatpush1.msra.mxu0 0.0
    %2636 = vmatprep.subr.mxu0 0.0
    %2637 = vmatpush1.msra.mxu0 0.0
    %2638 = vmatprep.subr.mxu0 0.0
    %2639 = vmatpush1.msra.mxu0 0.0
    %2640 = vmatprep.subr.mxu0 0.0
    %2641 = vmatpush1.msra.mxu0 0.0
    %2642 = vmatprep.subr.mxu0 0.0
    %2643 = vmatpush1.msra.mxu0 0.0
    %2644 = vmatprep.subr.mxu0 0.0
    %2645 = vmatpush1.msra.mxu0 0.0
    %2646 = vmatprep.subr.mxu0 0.0
    %2647 = vmatpush1.msra.mxu0 0.0
    %2648 = vmatprep.subr.mxu0 0.0
    %2649 = vmatpush1.msra.mxu0 0.0
    %2650 = vmatprep.subr.mxu0 0.0
    %2651 = vmatpush1.msra.mxu0 0.0
    %2652 = vmatprep.subr.mxu0 0.0
    %2653 = vmatpush1.msra.mxu0 0.0
    %2654 = vmatprep.subr.mxu0 0.0
    %2655 = vmatpush1.msra.mxu0 %v2613
    %2656 = vmatprep.subr.mxu0 0.0
    %2657 = vmatpush1.msra.mxu0 %v2611
    %2658 = vmatprep.subr.mxu0 0.0
    %2659 = vmatpush1.msra.mxu0 %v2609
    %2660 = vmatprep.subr.mxu0 0.0
    %2661 = vmatpush1.msra.mxu0 %v2607
    %2662 = vmatprep.subr.mxu0 0.0
    %2663 = vmatpush2.msra.mxu0 0.0
    %2664 = vmatprep.subr.mxu0 0.0
    %2665 = vmatpush2.msra.mxu0 0.0
    %2666 = vmatprep.subr.mxu0 0.0
    %2667 = vmatpush2.msra.mxu0 0.0
    %2668 = vmatprep.subr.mxu0 0.0
    %2669 = vmatpush2.msra.mxu0 0.0
    %2670 = vmatprep.subr.mxu0 0.0
    %2671 = vmatpush2.msra.mxu0 0.0
    %2672 = vmatprep.subr.mxu0 0.0
    %2673 = vmatpush2.msra.mxu0 0.0
    %2674 = vmatprep.subr.mxu0 0.0
    %2675 = vmatpush2.msra.mxu0 0.0
    %2676 = vmatprep.subr.mxu0 0.0
    %2677 = vmatpush2.msra.mxu0 0.0
    %2678 = vmatprep.subr.mxu0 0.0
    %2679 = vmatpush2.msra.mxu0 0.0
    %2680 = vmatprep.subr.mxu0 0.0
    %2681 = vmatpush2.msra.mxu0 0.0
    %2682 = vmatprep.subr.mxu0 0.0
    %2683 = vmatpush2.msra.mxu0 0.0
    %2684 = vmatprep.subr.mxu0 0.0
    %2685 = vmatpush2.msra.mxu0 0.0
    %2686 = vmatprep.subr.mxu0 0.0
    %2687 = vmatpush2.msra.mxu0 0.0
    %2688 = vmatprep.subr.mxu0 0.0
    %2689 = vmatpush2.msra.mxu0 0.0
    %2690 = vmatprep.subr.mxu0 0.0
    %2691 = vmatpush2.msra.mxu0 0.0
    %2692 = vmatprep.subr.mxu0 0.0
    %2693 = vmatpush2.msra.mxu0 0.0
    %2694 = vmatprep.mubr.f32.mxu0 0.0
    %2695 = vmatmul.mubr.f32.gmra.mxu0 %v2619
    %v2696 = vpop.f32.mrf.mxu0
    %v2697 = vadd.f32 0.0, %v2696
    %v2698 = vpop.f32.mrf.mxu0
    %2699 = vmatprep.mubr.f32.mxu0 0.0
    %2700 = vmatmul.mubr.f32.gmra.mxu0 %v2622
    %v2701 = vpop.f32.mrf.mxu0
    %v2702 = vadd.f32 0.0, %v2701
    %v2703 = vpop.f32.mrf.mxu0
    %2704 = vmatprep.mubr.f32.mxu0 0.0
    %2705 = vmatmul.mubr.f32.gmra.mxu0 %v2625
    %v2706 = vpop.f32.mrf.mxu0
    %v2707 = vadd.f32 0.0, %v2706
    %v2708 = vpop.f32.mrf.mxu0
    %2709 = vmatprep.mubr.f32.mxu0 0.0
    %2710 = vmatmul.mubr.f32.gmra.mxu0 %v2628
    %v2711 = vpop.f32.mrf.mxu0
    %v2712 = vadd.f32 0.0, %v2711
    %v2713 = vpop.f32.mrf.mxu0
    %2714 = vdwg.mxu0
    %2715 = vrot.lane.b32.xlu0 %v2137, 112
    %v2716 = vpop.permute.xlu0 %2715
    %2717 = vrot.lane.b32.xlu0 %v2142, 112
    %v2718 = vpop.permute.xlu0 %2717
    %2719 = vrot.lane.b32.xlu0 %v2147, 112
    %v2720 = vpop.permute.xlu0 %2719
    %2721 = vrot.lane.b32.xlu0 %v2152, 112
    %v2722 = vpop.permute.xlu0 %2721
    %2723 = vrot.lane.b32.xlu0 %v2137, 80
    %v2724 = vpop.permute.xlu0 %2723
    %2725 = vrot.lane.b32.xlu0 %v2142, 80
    %v2726 = vpop.permute.xlu0 %2725
    %2727 = vrot.lane.b32.xlu0 %v2147, 80
    %v2728 = vpop.permute.xlu0 %2727
    %2729 = vrot.lane.b32.xlu0 %v2152, 80
    %v2730 = vpop.permute.xlu0 %2729
    %v2731 = vsel %vm339, %v2716, 0
    %v2733 = vsel %vm339, %v2718, 0
    %v2735 = vsel %vm339, %v2720, 0
    %v2737 = vsel %vm339, %v2722, 0
    %v2739 = vsel %vm339, %v2724, 0
    %v2741 = vsel %vm339, %v2726, 0
    %v2743 = vsel %vm339, %v2728, 0
    %v2745 = vsel %vm339, %v2730, 0
    %2747 = vmatprep.subr.mxu0 0.0
    %2748 = vmatpush1.xpose.msra.mxu0 0.0
    %2749 = vmatprep.subr.mxu0 0.0
    %2750 = vmatpush1.xpose.msra.mxu0 0.0
    %2751 = vmatprep.subr.mxu0 0.0
    %2752 = vmatpush1.xpose.msra.mxu0 0.0
    %2753 = vmatprep.subr.mxu0 0.0
    %2754 = vmatpush1.xpose.msra.mxu0 0.0
    %2755 = vmatprep.subr.mxu0 0.0
    %2756 = vmatpush1.xpose.msra.mxu0 0.0
    %2757 = vmatprep.subr.mxu0 0.0
    %2758 = vmatpush1.xpose.msra.mxu0 0.0
    %2759 = vmatprep.subr.mxu0 0.0
    %2760 = vmatpush1.xpose.msra.mxu0 0.0
    %2761 = vmatprep.subr.mxu0 0.0
    %2762 = vmatpush1.xpose.msra.mxu0 0.0
    %2763 = vmatprep.subr.mxu0 0.0
    %2764 = vmatpush1.xpose.msra.mxu0 0.0
    %2765 = vmatprep.subr.mxu0 0.0
    %2766 = vmatpush1.xpose.msra.mxu0 0.0
    %2767 = vmatprep.subr.mxu0 0.0
    %2768 = vmatpush1.xpose.msra.mxu0 0.0
    %2769 = vmatprep.subr.mxu0 0.0
    %2770 = vmatpush1.xpose.msra.mxu0 0.0
    %2771 = vmatprep.subr.mxu0 0.0
    %2772 = vmatpush1.xpose.msra.mxu0 %v2745
    %2773 = vmatprep.subr.mxu0 0.0
    %2774 = vmatpush1.xpose.msra.mxu0 %v2743
    %2775 = vmatprep.subr.mxu0 0.0
    %2776 = vmatpush1.xpose.msra.mxu0 %v2741
    %2777 = vmatprep.subr.mxu0 0.0
    %2778 = vmatpush1.xpose.msra.mxu0 %v2739
    %2779 = vmatprep.subr.mxu0 0.0
    %2780 = vmatpush2.xpose.msra.mxu0 0.0
    %2781 = vmatprep.subr.mxu0 0.0
    %2782 = vmatpush2.xpose.msra.mxu0 0.0
    %2783 = vmatprep.subr.mxu0 0.0
    %2784 = vmatpush2.xpose.msra.mxu0 0.0
    %2785 = vmatprep.subr.mxu0 0.0
    %2786 = vmatpush2.xpose.msra.mxu0 0.0
    %2787 = vmatprep.subr.mxu0 0.0
    %2788 = vmatpush2.xpose.msra.mxu0 0.0
    %2789 = vmatprep.subr.mxu0 0.0
    %2790 = vmatpush2.xpose.msra.mxu0 0.0
    %2791 = vmatprep.subr.mxu0 0.0
    %2792 = vmatpush2.xpose.msra.mxu0 0.0
    %2793 = vmatprep.subr.mxu0 0.0
    %2794 = vmatpush2.xpose.msra.mxu0 0.0
    %2795 = vmatprep.subr.mxu0 0.0
    %2796 = vmatpush2.xpose.msra.mxu0 0.0
    %2797 = vmatprep.subr.mxu0 0.0
    %2798 = vmatpush2.xpose.msra.mxu0 0.0
    %2799 = vmatprep.subr.mxu0 0.0
    %2800 = vmatpush2.xpose.msra.mxu0 0.0
    %2801 = vmatprep.subr.mxu0 0.0
    %2802 = vmatpush2.xpose.msra.mxu0 0.0
    %2803 = vmatprep.subr.mxu0 0.0
    %2804 = vmatpush2.xpose.msra.mxu0 0.0
    %2805 = vmatprep.subr.mxu0 0.0
    %2806 = vmatpush2.xpose.msra.mxu0 0.0
    %2807 = vmatprep.subr.mxu0 0.0
    %2808 = vmatpush2.xpose.msra.mxu0 0.0
    %2809 = vmatprep.subr.mxu0 0.0
    %2810 = vmatpush2.xpose.msra.mxu0 0.0
    %2811 = vmatprep.mubr.f32.mxu0 0.0
    %2812 = vmatmul.mubr.f32.gmra.mxu0 %v2731
    %v2813 = vpop.f32.mrf.mxu0
    %v2814 = vadd.f32 %v197, %v2813
    %v2815 = vpop.f32.mrf.mxu0
    %2816 = vmatprep.mubr.f32.mxu0 0.0
    %2817 = vmatmul.mubr.f32.gmra.mxu0 %v2733
    %v2818 = vpop.f32.mrf.mxu0
    %v2819 = vadd.f32 %v198, %v2818
    %v2820 = vpop.f32.mrf.mxu0
    %2821 = vmatprep.mubr.f32.mxu0 0.0
    %2822 = vmatmul.mubr.f32.gmra.mxu0 %v2735
    %v2823 = vpop.f32.mrf.mxu0
    %v2824 = vadd.f32 %v199, %v2823
    %v2825 = vpop.f32.mrf.mxu0
    %2826 = vmatprep.mubr.f32.mxu0 0.0
    %2827 = vmatmul.mubr.f32.gmra.mxu0 %v2737
    %v2828 = vpop.f32.mrf.mxu0
    %v2829 = vadd.f32 %v200, %v2828
    %v2830 = vpop.f32.mrf.mxu0
    %2831 = vdwg.mxu0
    %v2832 = vsel %vm156, %v2814, -inf
    %2833 = vmax.xlane.f32.xlu0 %v2832
    %v2834 = vpop.xlane.xlu0 %2833
    %v2835 = vsel %vm156, %v2819, -inf
    %2836 = vmax.xlane.f32.xlu0 %v2835
    %v2837 = vpop.xlane.xlu0 %2836
    %v2838 = vsel %vm156, %v2824, -inf
    %2839 = vmax.xlane.f32.xlu0 %v2838
    %v2840 = vpop.xlane.xlu0 %2839
    %v2841 = vsel %vm156, %v2829, -inf
    %2842 = vmax.xlane.f32.xlu0 %v2841
    %v2843 = vpop.xlane.xlu0 %2842
    %v2844 = vsub.f32 %v2814, %v2834
    %v2845 = vsub.f32 %v2819, %v2837
    %v2846 = vsub.f32 %v2824, %v2840
    %v2847 = vsub.f32 %v2829, %v2843
    %v2848 = vmul.f32 %v2844, 1.442695
    %v2849 = vpow.pop %v2848
    %v2850 = vmul.f32 %v2845, 1.442695
    %v2851 = vpow.pop %v2850
    %v2852 = vmul.f32 %v2846, 1.442695
    %v2853 = vpow.pop %v2852
    %v2854 = vmul.f32 %v2847, 1.442695
    %v2855 = vpow.pop %v2854
    %v2856 = vsel %vm156, %v2849, 0.0
    %2857 = vadd.xlane.f32.xlu0 %v2856
    %v2858 = vpop.xlane.xlu0 %2857
    %v2859 = vsel %vm156, %v2851, 0.0
    %2860 = vadd.xlane.f32.xlu0 %v2859
    %v2861 = vpop.xlane.xlu0 %2860
    %v2862 = vsel %vm156, %v2853, 0.0
    %2863 = vadd.xlane.f32.xlu0 %v2862
    %v2864 = vpop.xlane.xlu0 %2863
    %v2865 = vsel %vm156, %v2855, 0.0
    %2866 = vadd.xlane.f32.xlu0 %v2865
    %v2867 = vpop.xlane.xlu0 %2866
    %v2868 = vrcp.pop %v2858
    %v2869 = vrcp.pop %v2861
    %v2870 = vrcp.pop %v2864
    %v2871 = vrcp.pop %v2867
    %v2872 = vmul.f32 %v2849, %v2868
    %v2873 = vmul.f32 %v2851, %v2869
    %v2874 = vmul.f32 %v2853, %v2870
    %v2875 = vmul.f32 %v2855, %v2871
    %2876 = vrot.lane.b32.xlu0 %v2137, 48
    %v2877 = vpop.permute.xlu0 %2876
    %2878 = vrot.lane.b32.xlu0 %v2142, 48
    %v2879 = vpop.permute.xlu0 %2878
    %2880 = vrot.lane.b32.xlu0 %v2147, 48
    %v2881 = vpop.permute.xlu0 %2880
    %2882 = vrot.lane.b32.xlu0 %v2152, 48
    %v2883 = vpop.permute.xlu0 %2882
    %v2889 = vsel %vm156, %v2872, 0
    %v2892 = vsel %vm156, %v2873, 0
    %v2895 = vsel %vm156, %v2874, 0
    %v2898 = vsel %vm156, %v2875, 0
    %2900 = vmatprep.subr.mxu0 0.0
    %2901 = vmatpush1.msra.mxu0 0.0
    %2902 = vmatprep.subr.mxu0 0.0
    %2903 = vmatpush1.msra.mxu0 0.0
    %2904 = vmatprep.subr.mxu0 0.0
    %2905 = vmatpush1.msra.mxu0 0.0
    %2906 = vmatprep.subr.mxu0 0.0
    %2907 = vmatpush1.msra.mxu0 0.0
    %2908 = vmatprep.subr.mxu0 0.0
    %2909 = vmatpush1.msra.mxu0 0.0
    %2910 = vmatprep.subr.mxu0 0.0
    %2911 = vmatpush1.msra.mxu0 0.0
    %2912 = vmatprep.subr.mxu0 0.0
    %2913 = vmatpush1.msra.mxu0 0.0
    %2914 = vmatprep.subr.mxu0 0.0
    %2915 = vmatpush1.msra.mxu0 0.0
    %2916 = vmatprep.subr.mxu0 0.0
    %2917 = vmatpush1.msra.mxu0 0.0
    %2918 = vmatprep.subr.mxu0 0.0
    %2919 = vmatpush1.msra.mxu0 0.0
    %2920 = vmatprep.subr.mxu0 0.0
    %2921 = vmatpush1.msra.mxu0 0.0
    %2922 = vmatprep.subr.mxu0 0.0
    %2923 = vmatpush1.msra.mxu0 0.0
    %2924 = vmatprep.subr.mxu0 0.0
    %2925 = vmatpush1.msra.mxu0 %v2883
    %2926 = vmatprep.subr.mxu0 0.0
    %2927 = vmatpush1.msra.mxu0 %v2881
    %2928 = vmatprep.subr.mxu0 0.0
    %2929 = vmatpush1.msra.mxu0 %v2879
    %2930 = vmatprep.subr.mxu0 0.0
    %2931 = vmatpush1.msra.mxu0 %v2877
    %2932 = vmatprep.subr.mxu0 0.0
    %2933 = vmatpush2.msra.mxu0 0.0
    %2934 = vmatprep.subr.mxu0 0.0
    %2935 = vmatpush2.msra.mxu0 0.0
    %2936 = vmatprep.subr.mxu0 0.0
    %2937 = vmatpush2.msra.mxu0 0.0
    %2938 = vmatprep.subr.mxu0 0.0
    %2939 = vmatpush2.msra.mxu0 0.0
    %2940 = vmatprep.subr.mxu0 0.0
    %2941 = vmatpush2.msra.mxu0 0.0
    %2942 = vmatprep.subr.mxu0 0.0
    %2943 = vmatpush2.msra.mxu0 0.0
    %2944 = vmatprep.subr.mxu0 0.0
    %2945 = vmatpush2.msra.mxu0 0.0
    %2946 = vmatprep.subr.mxu0 0.0
    %2947 = vmatpush2.msra.mxu0 0.0
    %2948 = vmatprep.subr.mxu0 0.0
    %2949 = vmatpush2.msra.mxu0 0.0
    %2950 = vmatprep.subr.mxu0 0.0
    %2951 = vmatpush2.msra.mxu0 0.0
    %2952 = vmatprep.subr.mxu0 0.0
    %2953 = vmatpush2.msra.mxu0 0.0
    %2954 = vmatprep.subr.mxu0 0.0
    %2955 = vmatpush2.msra.mxu0 0.0
    %2956 = vmatprep.subr.mxu0 0.0
    %2957 = vmatpush2.msra.mxu0 0.0
    %2958 = vmatprep.subr.mxu0 0.0
    %2959 = vmatpush2.msra.mxu0 0.0
    %2960 = vmatprep.subr.mxu0 0.0
    %2961 = vmatpush2.msra.mxu0 0.0
    %2962 = vmatprep.subr.mxu0 0.0
    %2963 = vmatpush2.msra.mxu0 0.0
    %2964 = vmatprep.mubr.f32.mxu0 0.0
    %2965 = vmatmul.mubr.f32.gmra.mxu0 %v2889
    %v2966 = vpop.f32.mrf.mxu0
    %v2967 = vadd.f32 0.0, %v2966
    %v2968 = vpop.f32.mrf.mxu0
    %2969 = vmatprep.mubr.f32.mxu0 0.0
    %2970 = vmatmul.mubr.f32.gmra.mxu0 %v2892
    %v2971 = vpop.f32.mrf.mxu0
    %v2972 = vadd.f32 0.0, %v2971
    %v2973 = vpop.f32.mrf.mxu0
    %2974 = vmatprep.mubr.f32.mxu0 0.0
    %2975 = vmatmul.mubr.f32.gmra.mxu0 %v2895
    %v2976 = vpop.f32.mrf.mxu0
    %v2977 = vadd.f32 0.0, %v2976
    %v2978 = vpop.f32.mrf.mxu0
    %2979 = vmatprep.mubr.f32.mxu0 0.0
    %2980 = vmatmul.mubr.f32.gmra.mxu0 %v2898
    %v2981 = vpop.f32.mrf.mxu0
    %v2982 = vadd.f32 0.0, %v2981
    %v2983 = vpop.f32.mrf.mxu0
    %2984 = vdwg.mxu0
    %2985 = vrot.lane.b32.xlu0 %v2137, 104
    %v2986 = vpop.permute.xlu0 %2985
    %2987 = vrot.lane.b32.xlu0 %v2142, 104
    %v2988 = vpop.permute.xlu0 %2987
    %2989 = vrot.lane.b32.xlu0 %v2147, 104
    %v2990 = vpop.permute.xlu0 %2989
    %2991 = vrot.lane.b32.xlu0 %v2152, 104
    %v2992 = vpop.permute.xlu0 %2991
    %2993 = vrot.lane.b32.xlu0 %v2137, 72
    %v2994 = vpop.permute.xlu0 %2993
    %2995 = vrot.lane.b32.xlu0 %v2142, 72
    %v2996 = vpop.permute.xlu0 %2995
    %2997 = vrot.lane.b32.xlu0 %v2147, 72
    %v2998 = vpop.permute.xlu0 %2997
    %2999 = vrot.lane.b32.xlu0 %v2152, 72
    %v3000 = vpop.permute.xlu0 %2999
    %v3001 = vsel %vm339, %v2986, 0
    %v3003 = vsel %vm339, %v2988, 0
    %v3005 = vsel %vm339, %v2990, 0
    %v3007 = vsel %vm339, %v2992, 0
    %v3009 = vsel %vm339, %v2994, 0
    %v3011 = vsel %vm339, %v2996, 0
    %v3013 = vsel %vm339, %v2998, 0
    %v3015 = vsel %vm339, %v3000, 0
    %3017 = vmatprep.subr.mxu0 0.0
    %3018 = vmatpush1.xpose.msra.mxu0 0.0
    %3019 = vmatprep.subr.mxu0 0.0
    %3020 = vmatpush1.xpose.msra.mxu0 0.0
    %3021 = vmatprep.subr.mxu0 0.0
    %3022 = vmatpush1.xpose.msra.mxu0 0.0
    %3023 = vmatprep.subr.mxu0 0.0
    %3024 = vmatpush1.xpose.msra.mxu0 0.0
    %3025 = vmatprep.subr.mxu0 0.0
    %3026 = vmatpush1.xpose.msra.mxu0 0.0
    %3027 = vmatprep.subr.mxu0 0.0
    %3028 = vmatpush1.xpose.msra.mxu0 0.0
    %3029 = vmatprep.subr.mxu0 0.0
    %3030 = vmatpush1.xpose.msra.mxu0 0.0
    %3031 = vmatprep.subr.mxu0 0.0
    %3032 = vmatpush1.xpose.msra.mxu0 0.0
    %3033 = vmatprep.subr.mxu0 0.0
    %3034 = vmatpush1.xpose.msra.mxu0 0.0
    %3035 = vmatprep.subr.mxu0 0.0
    %3036 = vmatpush1.xpose.msra.mxu0 0.0
    %3037 = vmatprep.subr.mxu0 0.0
    %3038 = vmatpush1.xpose.msra.mxu0 0.0
    %3039 = vmatprep.subr.mxu0 0.0
    %3040 = vmatpush1.xpose.msra.mxu0 0.0
    %3041 = vmatprep.subr.mxu0 0.0
    %3042 = vmatpush1.xpose.msra.mxu0 %v3015
    %3043 = vmatprep.subr.mxu0 0.0
    %3044 = vmatpush1.xpose.msra.mxu0 %v3013
    %3045 = vmatprep.subr.mxu0 0.0
    %3046 = vmatpush1.xpose.msra.mxu0 %v3011
    %3047 = vmatprep.subr.mxu0 0.0
    %3048 = vmatpush1.xpose.msra.mxu0 %v3009
    %3049 = vmatprep.subr.mxu0 0.0
    %3050 = vmatpush2.xpose.msra.mxu0 0.0
    %3051 = vmatprep.subr.mxu0 0.0
    %3052 = vmatpush2.xpose.msra.mxu0 0.0
    %3053 = vmatprep.subr.mxu0 0.0
    %3054 = vmatpush2.xpose.msra.mxu0 0.0
    %3055 = vmatprep.subr.mxu0 0.0
    %3056 = vmatpush2.xpose.msra.mxu0 0.0
    %3057 = vmatprep.subr.mxu0 0.0
    %3058 = vmatpush2.xpose.msra.mxu0 0.0
    %3059 = vmatprep.subr.mxu0 0.0
    %3060 = vmatpush2.xpose.msra.mxu0 0.0
    %3061 = vmatprep.subr.mxu0 0.0
    %3062 = vmatpush2.xpose.msra.mxu0 0.0
    %3063 = vmatprep.subr.mxu0 0.0
    %3064 = vmatpush2.xpose.msra.mxu0 0.0
    %3065 = vmatprep.subr.mxu0 0.0
    %3066 = vmatpush2.xpose.msra.mxu0 0.0
    %3067 = vmatprep.subr.mxu0 0.0
    %3068 = vmatpush2.xpose.msra.mxu0 0.0
    %3069 = vmatprep.subr.mxu0 0.0
    %3070 = vmatpush2.xpose.msra.mxu0 0.0
    %3071 = vmatprep.subr.mxu0 0.0
    %3072 = vmatpush2.xpose.msra.mxu0 0.0
    %3073 = vmatprep.subr.mxu0 0.0
    %3074 = vmatpush2.xpose.msra.mxu0 0.0
    %3075 = vmatprep.subr.mxu0 0.0
    %3076 = vmatpush2.xpose.msra.mxu0 0.0
    %3077 = vmatprep.subr.mxu0 0.0
    %3078 = vmatpush2.xpose.msra.mxu0 0.0
    %3079 = vmatprep.subr.mxu0 0.0
    %3080 = vmatpush2.xpose.msra.mxu0 0.0
    %3081 = vmatprep.mubr.f32.mxu0 0.0
    %3082 = vmatmul.mubr.f32.gmra.mxu0 %v3001
    %v3083 = vpop.f32.mrf.mxu0
    %v3084 = vadd.f32 %v197, %v3083
    %v3085 = vpop.f32.mrf.mxu0
    %3086 = vmatprep.mubr.f32.mxu0 0.0
    %3087 = vmatmul.mubr.f32.gmra.mxu0 %v3003
    %v3088 = vpop.f32.mrf.mxu0
    %v3089 = vadd.f32 %v198, %v3088
    %v3090 = vpop.f32.mrf.mxu0
    %3091 = vmatprep.mubr.f32.mxu0 0.0
    %3092 = vmatmul.mubr.f32.gmra.mxu0 %v3005
    %v3093 = vpop.f32.mrf.mxu0
    %v3094 = vadd.f32 %v199, %v3093
    %v3095 = vpop.f32.mrf.mxu0
    %3096 = vmatprep.mubr.f32.mxu0 0.0
    %3097 = vmatmul.mubr.f32.gmra.mxu0 %v3007
    %v3098 = vpop.f32.mrf.mxu0
    %v3099 = vadd.f32 %v200, %v3098
    %v3100 = vpop.f32.mrf.mxu0
    %3101 = vdwg.mxu0
    %v3102 = vsel %vm156, %v3084, -inf
    %3103 = vmax.xlane.f32.xlu0 %v3102
    %v3104 = vpop.xlane.xlu0 %3103
    %v3105 = vsel %vm156, %v3089, -inf
    %3106 = vmax.xlane.f32.xlu0 %v3105
    %v3107 = vpop.xlane.xlu0 %3106
    %v3108 = vsel %vm156, %v3094, -inf
    %3109 = vmax.xlane.f32.xlu0 %v3108
    %v3110 = vpop.xlane.xlu0 %3109
    %v3111 = vsel %vm156, %v3099, -inf
    %3112 = vmax.xlane.f32.xlu0 %v3111
    %v3113 = vpop.xlane.xlu0 %3112
    %v3114 = vsub.f32 %v3084, %v3104
    %v3115 = vsub.f32 %v3089, %v3107
    %v3116 = vsub.f32 %v3094, %v3110
    %v3117 = vsub.f32 %v3099, %v3113
    %v3118 = vmul.f32 %v3114, 1.442695
    %v3119 = vpow.pop %v3118
    %v3120 = vmul.f32 %v3115, 1.442695
    %v3121 = vpow.pop %v3120
    %v3122 = vmul.f32 %v3116, 1.442695
    %v3123 = vpow.pop %v3122
    %v3124 = vmul.f32 %v3117, 1.442695
    %v3125 = vpow.pop %v3124
    %v3126 = vsel %vm156, %v3119, 0.0
    %3127 = vadd.xlane.f32.xlu0 %v3126
    %v3128 = vpop.xlane.xlu0 %3127
    %v3129 = vsel %vm156, %v3121, 0.0
    %3130 = vadd.xlane.f32.xlu0 %v3129
    %v3131 = vpop.xlane.xlu0 %3130
    %v3132 = vsel %vm156, %v3123, 0.0
    %3133 = vadd.xlane.f32.xlu0 %v3132
    %v3134 = vpop.xlane.xlu0 %3133
    %v3135 = vsel %vm156, %v3125, 0.0
    %3136 = vadd.xlane.f32.xlu0 %v3135
    %v3137 = vpop.xlane.xlu0 %3136
    %v3138 = vrcp.pop %v3128
    %v3139 = vrcp.pop %v3131
    %v3140 = vrcp.pop %v3134
    %v3141 = vrcp.pop %v3137
    %v3142 = vmul.f32 %v3119, %v3138
    %v3143 = vmul.f32 %v3121, %v3139
    %v3144 = vmul.f32 %v3123, %v3140
    %v3145 = vmul.f32 %v3125, %v3141
    %3146 = vrot.lane.b32.xlu0 %v2137, 40
    %v3147 = vpop.permute.xlu0 %3146
    %3148 = vrot.lane.b32.xlu0 %v2142, 40
    %v3149 = vpop.permute.xlu0 %3148
    %3150 = vrot.lane.b32.xlu0 %v2147, 40
    %v3151 = vpop.permute.xlu0 %3150
    %3152 = vrot.lane.b32.xlu0 %v2152, 40
    %v3153 = vpop.permute.xlu0 %3152
    %v3159 = vsel %vm156, %v3142, 0
    %v3162 = vsel %vm156, %v3143, 0
    %v3165 = vsel %vm156, %v3144, 0
    %v3168 = vsel %vm156, %v3145, 0
    %3170 = vmatprep.subr.mxu0 0.0
    %3171 = vmatpush1.msra.mxu0 0.0
    %3172 = vmatprep.subr.mxu0 0.0
    %3173 = vmatpush1.msra.mxu0 0.0
    %3174 = vmatprep.subr.mxu0 0.0
    %3175 = vmatpush1.msra.mxu0 0.0
    %3176 = vmatprep.subr.mxu0 0.0
    %3177 = vmatpush1.msra.mxu0 0.0
    %3178 = vmatprep.subr.mxu0 0.0
    %3179 = vmatpush1.msra.mxu0 0.0
    %3180 = vmatprep.subr.mxu0 0.0
    %3181 = vmatpush1.msra.mxu0 0.0
    %3182 = vmatprep.subr.mxu0 0.0
    %3183 = vmatpush1.msra.mxu0 0.0
    %3184 = vmatprep.subr.mxu0 0.0
    %3185 = vmatpush1.msra.mxu0 0.0
    %3186 = vmatprep.subr.mxu0 0.0
    %3187 = vmatpush1.msra.mxu0 0.0
    %3188 = vmatprep.subr.mxu0 0.0
    %3189 = vmatpush1.msra.mxu0 0.0
    %3190 = vmatprep.subr.mxu0 0.0
    %3191 = vmatpush1.msra.mxu0 0.0
    %3192 = vmatprep.subr.mxu0 0.0
    %3193 = vmatpush1.msra.mxu0 0.0
    %3194 = vmatprep.subr.mxu0 0.0
    %3195 = vmatpush1.msra.mxu0 %v3153
    %3196 = vmatprep.subr.mxu0 0.0
    %3197 = vmatpush1.msra.mxu0 %v3151
    %3198 = vmatprep.subr.mxu0 0.0
    %3199 = vmatpush1.msra.mxu0 %v3149
    %3200 = vmatprep.subr.mxu0 0.0
    %3201 = vmatpush1.msra.mxu0 %v3147
    %3202 = vmatprep.subr.mxu0 0.0
    %3203 = vmatpush2.msra.mxu0 0.0
    %3204 = vmatprep.subr.mxu0 0.0
    %3205 = vmatpush2.msra.mxu0 0.0
    %3206 = vmatprep.subr.mxu0 0.0
    %3207 = vmatpush2.msra.mxu0 0.0
    %3208 = vmatprep.subr.mxu0 0.0
    %3209 = vmatpush2.msra.mxu0 0.0
    %3210 = vmatprep.subr.mxu0 0.0
    %3211 = vmatpush2.msra.mxu0 0.0
    %3212 = vmatprep.subr.mxu0 0.0
    %3213 = vmatpush2.msra.mxu0 0.0
    %3214 = vmatprep.subr.mxu0 0.0
    %3215 = vmatpush2.msra.mxu0 0.0
    %3216 = vmatprep.subr.mxu0 0.0
    %3217 = vmatpush2.msra.mxu0 0.0
    %3218 = vmatprep.subr.mxu0 0.0
    %3219 = vmatpush2.msra.mxu0 0.0
    %3220 = vmatprep.subr.mxu0 0.0
    %3221 = vmatpush2.msra.mxu0 0.0
    %3222 = vmatprep.subr.mxu0 0.0
    %3223 = vmatpush2.msra.mxu0 0.0
    %3224 = vmatprep.subr.mxu0 0.0
    %3225 = vmatpush2.msra.mxu0 0.0
    %3226 = vmatprep.subr.mxu0 0.0
    %3227 = vmatpush2.msra.mxu0 0.0
    %3228 = vmatprep.subr.mxu0 0.0
    %3229 = vmatpush2.msra.mxu0 0.0
    %3230 = vmatprep.subr.mxu0 0.0
    %3231 = vmatpush2.msra.mxu0 0.0
    %3232 = vmatprep.subr.mxu0 0.0
    %3233 = vmatpush2.msra.mxu0 0.0
    %3234 = vmatprep.mubr.f32.mxu0 0.0
    %3235 = vmatmul.mubr.f32.gmra.mxu0 %v3159
    %v3236 = vpop.f32.mrf.mxu0
    %v3237 = vadd.f32 0.0, %v3236
    %v3238 = vpop.f32.mrf.mxu0
    %3239 = vmatprep.mubr.f32.mxu0 0.0
    %3240 = vmatmul.mubr.f32.gmra.mxu0 %v3162
    %v3241 = vpop.f32.mrf.mxu0
    %v3242 = vadd.f32 0.0, %v3241
    %v3243 = vpop.f32.mrf.mxu0
    %3244 = vmatprep.mubr.f32.mxu0 0.0
    %3245 = vmatmul.mubr.f32.gmra.mxu0 %v3165
    %v3246 = vpop.f32.mrf.mxu0
    %v3247 = vadd.f32 0.0, %v3246
    %v3248 = vpop.f32.mrf.mxu0
    %3249 = vmatprep.mubr.f32.mxu0 0.0
    %3250 = vmatmul.mubr.f32.gmra.mxu0 %v3168
    %v3251 = vpop.f32.mrf.mxu0
    %v3252 = vadd.f32 0.0, %v3251
    %v3253 = vpop.f32.mrf.mxu0
    %3254 = vdwg.mxu0
    %3259 = vrot.lane.b32.xlu0 %v2697, 8
    %v3260 = vpop.permute.xlu0 %3259
    %3261 = vrot.lane.b32.xlu0 %v2702, 8
    %v3262 = vpop.permute.xlu0 %3261
    %3263 = vrot.lane.b32.xlu0 %v2707, 8
    %v3264 = vpop.permute.xlu0 %3263
    %3265 = vrot.lane.b32.xlu0 %v2712, 8
    %v3266 = vpop.permute.xlu0 %3265
    %3275 = vrot.lane.b32.xlu0 %v2967, 16
    %v3276 = vpop.permute.xlu0 %3275
    %3277 = vrot.lane.b32.xlu0 %v2972, 16
    %v3278 = vpop.permute.xlu0 %3277
    %3279 = vrot.lane.b32.xlu0 %v2977, 16
    %v3280 = vpop.permute.xlu0 %3279
    %3281 = vrot.lane.b32.xlu0 %v2982, 16
    %v3282 = vpop.permute.xlu0 %3281
    %3291 = vrot.lane.b32.xlu0 %v3237, 24
    %v3292 = vpop.permute.xlu0 %3291
    %3293 = vrot.lane.b32.xlu0 %v3242, 24
    %v3294 = vpop.permute.xlu0 %3293
    %3295 = vrot.lane.b32.xlu0 %v3247, 24
    %v3296 = vpop.permute.xlu0 %3295
    %3297 = vrot.lane.b32.xlu0 %v3252, 24
    %v3298 = vpop.permute.xlu0 %3297
    %v3303 = vsel %vm339, %v2427, %v3260
    %v3304 = vsel %vm339, %v2432, %v3262
    %v3305 = vsel %vm339, %v2437, %v3264
    %v3306 = vsel %vm339, %v2442, %v3266
    %v3307 = vsel %vm30, %v3303, %v3276
    %v3308 = vsel %vm30, %v3304, %v3278
    %v3309 = vsel %vm30, %v3305, %v3280
    %v3310 = vsel %vm30, %v3306, %v3282
    %v3311 = vsel %vm1460, %v3307, %v3292
    %v3312 = vsel %vm1460, %v3308, %v3294
    %v3313 = vsel %vm1460, %v3309, %v3296
    %v3314 = vsel %vm1460, %v3310, %v3298
    %3319 = vrot.lane.b32.xlu0 %v2172, 32
    %v3320 = vpop.permute.xlu0 %3319
    %3321 = vrot.lane.b32.xlu0 %v2174, 32
    %v3322 = vpop.permute.xlu0 %3321
    %3323 = vrot.lane.b32.xlu0 %v2176, 32
    %v3324 = vpop.permute.xlu0 %3323
    %3325 = vrot.lane.b32.xlu0 %v2178, 32
    %v3326 = vpop.permute.xlu0 %3325
    %v3331 = vmul.f32 %v3311, %v3320
    %v3332 = vmul.f32 %v3312, %v3322
    %v3333 = vmul.f32 %v3313, %v3324
    %v3334 = vmul.f32 %v3314, %v3326
    %v3336 = vsel %vm156, %v3331, 0
    %v3339 = vsel %vm156, %v3332, 0
    %v3342 = vsel %vm156, %v3333, 0
    %v3345 = vsel %vm156, %v3334, 0
    %3347 = vmatprep.subr.mxu0 0.0
    %3348 = vmatpush1.msra.mxu0 0.0
    %3349 = vmatprep.subr.mxu0 0.0
    %3350 = vmatpush1.msra.mxu0 0.0
    %3351 = vmatprep.subr.mxu0 0.0
    %3352 = vmatpush1.msra.mxu0 0.0
    %3353 = vmatprep.subr.mxu0 0.0
    %3354 = vmatpush1.msra.mxu0 0.0
    %3355 = vmatprep.subr.mxu0 0.0
    %3356 = vmatpush1.msra.mxu0 0.0
    %3357 = vmatprep.subr.mxu0 0.0
    %3358 = vmatpush1.msra.mxu0 0.0
    %3359 = vmatprep.subr.mxu0 0.0
    %3360 = vmatpush1.msra.mxu0 0.0
    %3361 = vmatprep.subr.mxu0 0.0
    %3362 = vmatpush1.msra.mxu0 0.0
    %3363 = vmatprep.subr.mxu0 0.0
    %3364 = vmatpush1.msra.mxu0 0.0
    %3365 = vmatprep.subr.mxu0 0.0
    %3366 = vmatpush1.msra.mxu0 0.0
    %3367 = vmatprep.subr.mxu0 0.0
    %3368 = vmatpush1.msra.mxu0 0.0
    %3369 = vmatprep.subr.mxu0 0.0
    %3370 = vmatpush1.msra.mxu0 0.0
    %3371 = vmatprep.subr.mxu0 0.0
    %3372 = vmatpush1.msra.mxu0 %v2057
    %3373 = vmatprep.subr.mxu0 0.0
    %3374 = vmatpush1.msra.mxu0 %v2056
    %3375 = vmatprep.subr.mxu0 0.0
    %3376 = vmatpush1.msra.mxu0 %v2055
    %3377 = vmatprep.subr.mxu0 0.0
    %3378 = vmatpush1.msra.mxu0 %v2054
    %3379 = vmatprep.subr.mxu0 0.0
    %3380 = vmatpush2.msra.mxu0 0.0
    %3381 = vmatprep.subr.mxu0 0.0
    %3382 = vmatpush2.msra.mxu0 0.0
    %3383 = vmatprep.subr.mxu0 0.0
    %3384 = vmatpush2.msra.mxu0 0.0
    %3385 = vmatprep.subr.mxu0 0.0
    %3386 = vmatpush2.msra.mxu0 0.0
    %3387 = vmatprep.subr.mxu0 0.0
    %3388 = vmatpush2.msra.mxu0 0.0
    %3389 = vmatprep.subr.mxu0 0.0
    %3390 = vmatpush2.msra.mxu0 0.0
    %3391 = vmatprep.subr.mxu0 0.0
    %3392 = vmatpush2.msra.mxu0 0.0
    %3393 = vmatprep.subr.mxu0 0.0
    %3394 = vmatpush2.msra.mxu0 0.0
    %3395 = vmatprep.subr.mxu0 0.0
    %3396 = vmatpush2.msra.mxu0 0.0
    %3397 = vmatprep.subr.mxu0 0.0
    %3398 = vmatpush2.msra.mxu0 0.0
    %3399 = vmatprep.subr.mxu0 0.0
    %3400 = vmatpush2.msra.mxu0 0.0
    %3401 = vmatprep.subr.mxu0 0.0
    %3402 = vmatpush2.msra.mxu0 0.0
    %3403 = vmatprep.subr.mxu0 0.0
    %3404 = vmatpush2.msra.mxu0 0.0
    %3405 = vmatprep.subr.mxu0 0.0
    %3406 = vmatpush2.msra.mxu0 0.0
    %3407 = vmatprep.subr.mxu0 0.0
    %3408 = vmatpush2.msra.mxu0 0.0
    %3409 = vmatprep.subr.mxu0 0.0
    %3410 = vmatpush2.msra.mxu0 0.0
    %3411 = vmatprep.mubr.f32.mxu0 0.0
    %3412 = vmatmul.mubr.f32.gmra.mxu0 %v3336
    %v3413 = vpop.f32.mrf.mxu0
    %v3414 = vadd.f32 0.0, %v3413
    %v3415 = vpop.f32.mrf.mxu0
    %3416 = vmatprep.mubr.f32.mxu0 0.0
    %3417 = vmatmul.mubr.f32.gmra.mxu0 %v3339
    %v3418 = vpop.f32.mrf.mxu0
    %v3419 = vadd.f32 0.0, %v3418
    %v3420 = vpop.f32.mrf.mxu0
    %3421 = vmatprep.mubr.f32.mxu0 0.0
    %3422 = vmatmul.mubr.f32.gmra.mxu0 %v3342
    %v3423 = vpop.f32.mrf.mxu0
    %v3424 = vadd.f32 0.0, %v3423
    %v3425 = vpop.f32.mrf.mxu0
    %3426 = vmatprep.mubr.f32.mxu0 0.0
    %3427 = vmatmul.mubr.f32.gmra.mxu0 %v3345
    %v3428 = vpop.f32.mrf.mxu0
    %v3429 = vadd.f32 0.0, %v3428
    %v3430 = vpop.f32.mrf.mxu0
    %3431 = vdwg.mxu0
    %v3432 = vadd.f32 %v2046, %v3414
    %v3433 = vadd.f32 %v2047, %v3419
    %v3434 = vadd.f32 %v2048, %v3424
    %v3435 = vadd.f32 %v2049, %v3429
    %v3436 = vld [vmem:[#allocation2 + $0x311] ss:$0 sm:$0xff]
    %v3437 = vld [vmem:[#allocation2 + $0x312] ss:$0 sm:$0xff]
    %v3438 = vsel %vm156, %v3432, 0.0
    %3439 = vadd.xlane.f32.xlu0 %v3438
    %v3440 = vpop.xlane.xlu0 %3439
    %v3441 = vsel %vm156, %v3433, 0.0
    %3442 = vadd.xlane.f32.xlu0 %v3441
    %v3443 = vpop.xlane.xlu0 %3442
    %v3444 = vsel %vm156, %v3434, 0.0
    %3445 = vadd.xlane.f32.xlu0 %v3444
    %v3446 = vpop.xlane.xlu0 %3445
    %v3447 = vsel %vm156, %v3435, 0.0
    %3448 = vadd.xlane.f32.xlu0 %v3447
    %v3449 = vpop.xlane.xlu0 %3448
    %v3450 = vmul.f32 %v3440, %v163
    %v3451 = vmul.f32 %v3443, %v163
    %v3452 = vmul.f32 %v3446, %v163
    %v3453 = vmul.f32 %v3449, %v163
    %v3454 = vsub.f32 %v3432, %v3450
    %v3455 = vsub.f32 %v3433, %v3451
    %v3456 = vsub.f32 %v3434, %v3452
    %v3457 = vsub.f32 %v3435, %v3453
    %v3458 = vmul.f32 %v3454, %v3454
    %v3459 = vmul.f32 %v3455, %v3455
    %v3460 = vmul.f32 %v3456, %v3456
    %v3461 = vmul.f32 %v3457, %v3457
    %v3462 = vsel %vm156, %v3458, 0.0
    %3463 = vadd.xlane.f32.xlu0 %v3462
    %v3464 = vpop.xlane.xlu0 %3463
    %v3465 = vsel %vm156, %v3459, 0.0
    %3466 = vadd.xlane.f32.xlu0 %v3465
    %v3467 = vpop.xlane.xlu0 %3466
    %v3468 = vsel %vm156, %v3460, 0.0
    %3469 = vadd.xlane.f32.xlu0 %v3468
    %v3470 = vpop.xlane.xlu0 %3469
    %v3471 = vsel %vm156, %v3461, 0.0
    %3472 = vadd.xlane.f32.xlu0 %v3471
    %v3473 = vpop.xlane.xlu0 %3472
    %v3474 = vmul.f32 %v3464, %v163
    %v3475 = vmul.f32 %v3467, %v163
    %v3476 = vmul.f32 %v3470, %v163
    %v3477 = vmul.f32 %v3473, %v163
    %v3478 = vadd.f32 %v3474, 1e-05
    %v3479 = vadd.f32 %v3475, 1e-05
    %v3480 = vadd.f32 %v3476, 1e-05
    %v3481 = vadd.f32 %v3477, 1e-05
    %v3482 = vrsqrt.pop %v3478
    %v3483 = vrsqrt.pop %v3479
    %v3484 = vrsqrt.pop %v3480
    %v3485 = vrsqrt.pop %v3481
    %v3486 = vmul.f32 %v3454, %v3482
    %v3487 = vmul.f32 %v3455, %v3483
    %v3488 = vmul.f32 %v3456, %v3484
    %v3489 = vmul.f32 %v3457, %v3485
    %v3490 = vmul.f32 %v3486, %v3436
    %v3491 = vmul.f32 %v3487, %v3436
    %v3492 = vmul.f32 %v3488, %v3436
    %v3493 = vmul.f32 %v3489, %v3436
    %v3494 = vadd.f32 %v3490, %v3437
    %v3495 = vadd.f32 %v3491, %v3437
    %v3496 = vadd.f32 %v3492, %v3437
    %v3497 = vadd.f32 %v3493, %v3437
    %v3498 = vld [vmem:[#allocation2 + $0x1d0] sm:$0xff]
    %v3499 = vld [vmem:[#allocation2 + $0x1d8] sm:$0xff]
    %v3500 = vld [vmem:[#allocation2 + $0x1e0] sm:$0xff]
    %v3501 = vld [vmem:[#allocation2 + $0x1e8] sm:$0xff]
    %v3502 = vld [vmem:[#allocation2 + $0x1f0] sm:$0xff]
    %v3503 = vld [vmem:[#allocation2 + $0x1f8] sm:$0xff]
    %v3504 = vld [vmem:[#allocation2 + $0x200] sm:$0xff]
    %v3505 = vld [vmem:[#allocation2 + $0x208] sm:$0xff]
    %s3506 = scalar_lea.vmem [#allocation2], 784
    %v3507 = vld [vmem:[%s3506] ss:$8 sm:$0x3]
    %v3509 = vlaneseq
    %v3510 = vshrl.u32 %v3509, 7
    %v3511 = vsub.s32 0, %v3510
    %v3512 = vrot.slane %v3507, %v3511
    %v3513 = vlaneseq
    %v3514 = vshrl.u32 %v3513, 7
    %v3515 = vsub.s32 1, %v3514
    %v3516 = vrot.slane %v3507, %v3515
    %v3520 = vsel %vm156, %v3494, 0
    %v3523 = vsel %vm156, %v3495, 0
    %v3526 = vsel %vm156, %v3496, 0
    %v3529 = vsel %vm156, %v3497, 0
    %3531 = vmatprep.subr.mxu0 0.0
    %3532 = vmatpush1.msra.mxu0 0.0
    %3533 = vmatprep.subr.mxu0 0.0
    %3534 = vmatpush1.msra.mxu0 0.0
    %3535 = vmatprep.subr.mxu0 0.0
    %3536 = vmatpush1.msra.mxu0 0.0
    %3537 = vmatprep.subr.mxu0 0.0
    %3538 = vmatpush1.msra.mxu0 0.0
    %3539 = vmatprep.subr.mxu0 0.0
    %3540 = vmatpush1.msra.mxu0 0.0
    %3541 = vmatprep.subr.mxu0 0.0
    %3542 = vmatpush1.msra.mxu0 0.0
    %3543 = vmatprep.subr.mxu0 0.0
    %3544 = vmatpush1.msra.mxu0 0.0
    %3545 = vmatprep.subr.mxu0 0.0
    %3546 = vmatpush1.msra.mxu0 0.0
    %3547 = vmatprep.subr.mxu0 0.0
    %3548 = vmatpush1.msra.mxu0 0.0
    %3549 = vmatprep.subr.mxu0 0.0
    %3550 = vmatpush1.msra.mxu0 0.0
    %3551 = vmatprep.subr.mxu0 0.0
    %3552 = vmatpush1.msra.mxu0 0.0
    %3553 = vmatprep.subr.mxu0 0.0
    %3554 = vmatpush1.msra.mxu0 0.0
    %3555 = vmatprep.subr.mxu0 %v3505
    %3556 = vmatpush1.msra.mxu0 %v3504
    %3557 = vmatprep.subr.mxu0 %v3503
    %3558 = vmatpush1.msra.mxu0 %v3502
    %3559 = vmatprep.subr.mxu0 %v3501
    %3560 = vmatpush1.msra.mxu0 %v3500
    %3561 = vmatprep.subr.mxu0 %v3499
    %3562 = vmatpush1.msra.mxu0 %v3498
    %3563 = vmatprep.subr.mxu0 0.0
    %3564 = vmatpush2.msra.mxu0 0.0
    %3565 = vmatprep.subr.mxu0 0.0
    %3566 = vmatpush2.msra.mxu0 0.0
    %3567 = vmatprep.subr.mxu0 0.0
    %3568 = vmatpush2.msra.mxu0 0.0
    %3569 = vmatprep.subr.mxu0 0.0
    %3570 = vmatpush2.msra.mxu0 0.0
    %3571 = vmatprep.subr.mxu0 0.0
    %3572 = vmatpush2.msra.mxu0 0.0
    %3573 = vmatprep.subr.mxu0 0.0
    %3574 = vmatpush2.msra.mxu0 0.0
    %3575 = vmatprep.subr.mxu0 0.0
    %3576 = vmatpush2.msra.mxu0 0.0
    %3577 = vmatprep.subr.mxu0 0.0
    %3578 = vmatpush2.msra.mxu0 0.0
    %3579 = vmatprep.subr.mxu0 0.0
    %3580 = vmatpush2.msra.mxu0 0.0
    %3581 = vmatprep.subr.mxu0 0.0
    %3582 = vmatpush2.msra.mxu0 0.0
    %3583 = vmatprep.subr.mxu0 0.0
    %3584 = vmatpush2.msra.mxu0 0.0
    %3585 = vmatprep.subr.mxu0 0.0
    %3586 = vmatpush2.msra.mxu0 0.0
    %3587 = vmatprep.subr.mxu0 0.0
    %3588 = vmatpush2.msra.mxu0 0.0
    %3589 = vmatprep.subr.mxu0 0.0
    %3590 = vmatpush2.msra.mxu0 0.0
    %3591 = vmatprep.subr.mxu0 0.0
    %3592 = vmatpush2.msra.mxu0 0.0
    %3593 = vmatprep.subr.mxu0 0.0
    %3594 = vmatpush2.msra.mxu0 0.0
    %3595 = vmatprep.mubr.f32.mxu0 0.0
    %3596 = vmatmul.mubr.f32.gmra.mxu0 %v3520
    %v3597 = vpop.f32.mrf.mxu0
    %v3598 = vadd.f32 %v3512, %v3597
    %v3599 = vpop.f32.mrf.mxu0
    %v3600 = vadd.f32 %v3516, %v3599
    %3601 = vmatprep.mubr.f32.mxu0 0.0
    %3602 = vmatmul.mubr.f32.gmra.mxu0 %v3523
    %v3603 = vpop.f32.mrf.mxu0
    %v3604 = vadd.f32 %v3512, %v3603
    %v3605 = vpop.f32.mrf.mxu0
    %v3606 = vadd.f32 %v3516, %v3605
    %3607 = vmatprep.mubr.f32.mxu0 0.0
    %3608 = vmatmul.mubr.f32.gmra.mxu0 %v3526
    %v3609 = vpop.f32.mrf.mxu0
    %v3610 = vadd.f32 %v3512, %v3609
    %v3611 = vpop.f32.mrf.mxu0
    %v3612 = vadd.f32 %v3516, %v3611
    %3613 = vmatprep.mubr.f32.mxu0 0.0
    %3614 = vmatmul.mubr.f32.gmra.mxu0 %v3529
    %v3615 = vpop.f32.mrf.mxu0
    %v3616 = vadd.f32 %v3512, %v3615
    %v3617 = vpop.f32.mrf.mxu0
    %v3618 = vadd.f32 %v3516, %v3617
    %3619 = vdwg.mxu0
    %v3620 = vmul.f32 %v3600, 0.5
    %v3621 = vmul.f32 %v3606, 0.5
    %v3622 = vmul.f32 %v3612, 0.5
    %v3623 = vmul.f32 %v3618, 0.5
    %v3624 = vmul.f32 %v3600, 0.70710677
    %v3625 = vmul.f32 %v3606, 0.70710677
    %v3626 = vmul.f32 %v3612, 0.70710677
    %v3627 = vmul.f32 %v3618, 0.70710677
    %vm3628 = vcmp.ge.f32.partialorder %v3624, 0.0
    %vm3629 = vcmp.ge.f32.partialorder %v3625, 0.0
    %vm3630 = vcmp.ge.f32.partialorder %v3626, 0.0
    %vm3631 = vcmp.ge.f32.partialorder %v3627, 0.0
    %v3632 = vsel %vm3628, 1.0, -1.0
    %v3633 = vsel %vm3629, 1.0, -1.0
    %v3634 = vsel %vm3630, 1.0, -1.0
    %v3635 = vsel %vm3631, 1.0, -1.0
    %v3636 = vand.u32 2147483647, %v3624
    %v3637 = vand.u32 2147483647, %v3625
    %v3638 = vand.u32 2147483647, %v3626
    %v3639 = vand.u32 2147483647, %v3627
    %v3640 = vmul.f32 %v3636, 0.3275911
    %v3641 = vmul.f32 %v3637, 0.3275911
    %v3642 = vmul.f32 %v3638, 0.3275911
    %v3643 = vmul.f32 %v3639, 0.3275911
    %v3644 = vadd.f32 %v3640, 1.0
    %v3645 = vadd.f32 %v3641, 1.0
    %v3646 = vadd.f32 %v3642, 1.0
    %v3647 = vadd.f32 %v3643, 1.0
    %v3648 = vrcp.pop %v3644
    %v3649 = vmul.f32 1.0, %v3648
    %v3650 = vrcp.pop %v3645
    %v3651 = vmul.f32 1.0, %v3650
    %v3652 = vrcp.pop %v3646
    %v3653 = vmul.f32 1.0, %v3652
    %v3654 = vrcp.pop %v3647
    %v3655 = vmul.f32 1.0, %v3654
    %v3656 = vmul.f32 %v3649, 1.0614054
    %v3657 = vmul.f32 %v3651, 1.0614054
    %v3658 = vmul.f32 %v3653, 1.0614054
    %v3659 = vmul.f32 %v3655, 1.0614054
    %v3660 = vadd.f32 %v3656, -1.4531521
    %v3661 = vadd.f32 %v3657, -1.4531521
    %v3662 = vadd.f32 %v3658, -1.4531521
    %v3663 = vadd.f32 %v3659, -1.4531521
    %v3664 = vmul.f32 %v3660, %v3649
    %v3665 = vmul.f32 %v3661, %v3651
    %v3666 = vmul.f32 %v3662, %v3653
    %v3667 = vmul.f32 %v3663, %v3655
    %v3668 = vadd.f32 %v3664, 1.4214138
    %v3669 = vadd.f32 %v3665, 1.4214138
    %v3670 = vadd.f32 %v3666, 1.4214138
    %v3671 = vadd.f32 %v3667, 1.4214138
    %v3672 = vmul.f32 %v3668, %v3649
    %v3673 = vmul.f32 %v3669, %v3651
    %v3674 = vmul.f32 %v3670, %v3653
    %v3675 = vmul.f32 %v3671, %v3655
    %v3676 = vadd.f32 %v3672, -0.28449672
    %v3677 = vadd.f32 %v3673, -0.28449672
    %v3678 = vadd.f32 %v3674, -0.28449672
    %v3679 = vadd.f32 %v3675, -0.28449672
    %v3680 = vmul.f32 %v3676, %v3649
    %v3681 = vmul.f32 %v3677, %v3651
    %v3682 = vmul.f32 %v3678, %v3653
    %v3683 = vmul.f32 %v3679, %v3655
    %v3684 = vadd.f32 %v3680, 0.2548296
    %v3685 = vadd.f32 %v3681, 0.2548296
    %v3686 = vadd.f32 %v3682, 0.2548296
    %v3687 = vadd.f32 %v3683, 0.2548296
    %v3688 = vmul.f32 %v3684, %v3649
    %v3689 = vmul.f32 %v3685, %v3651
    %v3690 = vmul.f32 %v3686, %v3653
    %v3691 = vmul.f32 %v3687, %v3655
    %v3692 = vsub.f32 0.0, %v3636
    %v3693 = vsub.f32 0.0, %v3637
    %v3694 = vsub.f32 0.0, %v3638
    %v3695 = vsub.f32 0.0, %v3639
    %v3696 = vmul.f32 %v3692, %v3636
    %v3697 = vmul.f32 %v3693, %v3637
    %v3698 = vmul.f32 %v3694, %v3638
    %v3699 = vmul.f32 %v3695, %v3639
    %v3700 = vmul.f32 %v3696, 1.442695
    %v3701 = vpow.pop %v3700
    %v3702 = vmul.f32 %v3697, 1.442695
    %v3703 = vpow.pop %v3702
    %v3704 = vmul.f32 %v3698, 1.442695
    %v3705 = vpow.pop %v3704
    %v3706 = vmul.f32 %v3699, 1.442695
    %v3707 = vpow.pop %v3706
    %v3708 = vmul.f32 %v3688, %v3701
    %v3709 = vmul.f32 %v3689, %v3703
    %v3710 = vmul.f32 %v3690, %v3705
    %v3711 = vmul.f32 %v3691, %v3707
    %v3712 = vsub.f32 1.0, %v3708
    %v3713 = vsub.f32 1.0, %v3709
    %v3714 = vsub.f32 1.0, %v3710
    %v3715 = vsub.f32 1.0, %v3711
    %v3716 = vmul.f32 %v3632, %v3712
    %v3717 = vmul.f32 %v3633, %v3713
    %v3718 = vmul.f32 %v3634, %v3714
    %v3719 = vmul.f32 %v3635, %v3715
    %v3720 = vadd.f32 %v3716, 1.0
    %v3721 = vadd.f32 %v3717, 1.0
    %v3722 = vadd.f32 %v3718, 1.0
    %v3723 = vadd.f32 %v3719, 1.0
    %v3724 = vmul.f32 %v3620, %v3720
    %v3725 = vmul.f32 %v3621, %v3721
    %v3726 = vmul.f32 %v3622, %v3722
    %v3727 = vmul.f32 %v3623, %v3723
    %v3728 = vmul.f32 %v3598, %v3724
    %v3729 = vmul.f32 %v3604, %v3725
    %v3730 = vmul.f32 %v3610, %v3726
    %v3731 = vmul.f32 %v3616, %v3727
    %v3732 = vld [vmem:[#allocation2 + $0x210] sm:$0xff]
    %v3733 = vld [vmem:[#allocation2 + $0x220] sm:$0xff]
    %v3734 = vld [vmem:[#allocation2 + $0x230] sm:$0xff]
    %v3735 = vld [vmem:[#allocation2 + $0x240] sm:$0xff]
    %v3736 = vld [vmem:[#allocation2 + $0x250] sm:$0xff]
    %v3737 = vld [vmem:[#allocation2 + $0x260] sm:$0xff]
    %v3738 = vld [vmem:[#allocation2 + $0x270] sm:$0xff]
    %v3739 = vld [vmem:[#allocation2 + $0x280] sm:$0xff]
    %v3740 = vld [vmem:[#allocation2 + $0x290] sm:$0xff]
    %v3741 = vld [vmem:[#allocation2 + $0x2a0] sm:$0xff]
    %v3742 = vld [vmem:[#allocation2 + $0x2b0] sm:$0xff]
    %v3743 = vld [vmem:[#allocation2 + $0x2c0] sm:$0xff]
    %v3744 = vld [vmem:[#allocation2 + $0x2d0] sm:$0xff]
    %v3745 = vld [vmem:[#allocation2 + $0x2e0] sm:$0xff]
    %v3746 = vld [vmem:[#allocation2 + $0x2f0] sm:$0xff]
    %v3747 = vld [vmem:[#allocation2 + $0x300] sm:$0xff]
    %v3748 = vld [vmem:[#allocation2 + $0x315] ss:$0 sm:$0xff]
    %3749 = vmatprep.subr.mxu0 0.0
    %3750 = vmatpush1.msra.mxu0 %v3747
    %3751 = vmatprep.subr.mxu0 0.0
    %3752 = vmatpush1.msra.mxu0 %v3746
    %3753 = vmatprep.subr.mxu0 0.0
    %3754 = vmatpush1.msra.mxu0 %v3745
    %3755 = vmatprep.subr.mxu0 0.0
    %3756 = vmatpush1.msra.mxu0 %v3744
    %3757 = vmatprep.subr.mxu0 0.0
    %3758 = vmatpush1.msra.mxu0 %v3743
    %3759 = vmatprep.subr.mxu0 0.0
    %3760 = vmatpush1.msra.mxu0 %v3742
    %3761 = vmatprep.subr.mxu0 0.0
    %3762 = vmatpush1.msra.mxu0 %v3741
    %3763 = vmatprep.subr.mxu0 0.0
    %3764 = vmatpush1.msra.mxu0 %v3740
    %3765 = vmatprep.subr.mxu0 0.0
    %3766 = vmatpush1.msra.mxu0 %v3739
    %3767 = vmatprep.subr.mxu0 0.0
    %3768 = vmatpush1.msra.mxu0 %v3738
    %3769 = vmatprep.subr.mxu0 0.0
    %3770 = vmatpush1.msra.mxu0 %v3737
    %3771 = vmatprep.subr.mxu0 0.0
    %3772 = vmatpush1.msra.mxu0 %v3736
    %3773 = vmatprep.subr.mxu0 0.0
    %3774 = vmatpush1.msra.mxu0 %v3735
    %3775 = vmatprep.subr.mxu0 0.0
    %3776 = vmatpush1.msra.mxu0 %v3734
    %3777 = vmatprep.subr.mxu0 0.0
    %3778 = vmatpush1.msra.mxu0 %v3733
    %3779 = vmatprep.subr.mxu0 0.0
    %3780 = vmatpush1.msra.mxu0 %v3732
    %3781 = vmatprep.subr.mxu0 0.0
    %3782 = vmatpush2.msra.mxu0 0.0
    %3783 = vmatprep.subr.mxu0 0.0
    %3784 = vmatpush2.msra.mxu0 0.0
    %3785 = vmatprep.subr.mxu0 0.0
    %3786 = vmatpush2.msra.mxu0 0.0
    %3787 = vmatprep.subr.mxu0 0.0
    %3788 = vmatpush2.msra.mxu0 0.0
    %3789 = vmatprep.subr.mxu0 0.0
    %3790 = vmatpush2.msra.mxu0 0.0
    %3791 = vmatprep.subr.mxu0 0.0
    %3792 = vmatpush2.msra.mxu0 0.0
    %3793 = vmatprep.subr.mxu0 0.0
    %3794 = vmatpush2.msra.mxu0 0.0
    %3795 = vmatprep.subr.mxu0 0.0
    %3796 = vmatpush2.msra.mxu0 0.0
    %3797 = vmatprep.subr.mxu0 0.0
    %3798 = vmatpush2.msra.mxu0 0.0
    %3799 = vmatprep.subr.mxu0 0.0
    %3800 = vmatpush2.msra.mxu0 0.0
    %3801 = vmatprep.subr.mxu0 0.0
    %3802 = vmatpush2.msra.mxu0 0.0
    %3803 = vmatprep.subr.mxu0 0.0
    %3804 = vmatpush2.msra.mxu0 0.0
    %3805 = vmatprep.subr.mxu0 0.0
    %3806 = vmatpush2.msra.mxu0 0.0
    %3807 = vmatprep.subr.mxu0 0.0
    %3808 = vmatpush2.msra.mxu0 0.0
    %3809 = vmatprep.subr.mxu0 0.0
    %3810 = vmatpush2.msra.mxu0 0.0
    %3811 = vmatprep.subr.mxu0 0.0
    %3812 = vmatpush2.msra.mxu0 0.0
    %3813 = vmatprep.mubr.f32.mxu0 0.0
    %3814 = vmatmul.mubr.f32.gmra.mxu0 %v3728
    %v3815 = vpop.f32.mrf.mxu0
    %v3816 = vadd.f32 %v3748, %v3815
    %v3817 = vpop.f32.mrf.mxu0
    %3818 = vmatprep.mubr.f32.mxu0 0.0
    %3819 = vmatmul.mubr.f32.gmra.mxu0 %v3729
    %v3820 = vpop.f32.mrf.mxu0
    %v3821 = vpop.f32.mrf.mxu0
    %3822 = vmatprep.mubr.f32.mxu0 0.0
    %3823 = vmatmul.mubr.f32.gmra.mxu0 %v3730
    %v3824 = vpop.f32.mrf.mxu0
    %v3825 = vadd.f32 %v3748, %v3824
    %v3826 = vpop.f32.mrf.mxu0
    %3827 = vmatprep.mubr.f32.mxu0 0.0
    %3828 = vmatmul.mubr.f32.gmra.mxu0 %v3731
    %v3829 = vpop.f32.mrf.mxu0
    %v3830 = vpop.f32.mrf.mxu0
    %3831 = vdwg.mxu0
    %v3832 = vadd.f32 %v3494, %v3816
    %v3833 = vadd.f32 %v3496, %v3825
    %v3834 = vld [vmem:[#allocation2 + $0x313] ss:$0 sm:$0xff]
    %v3835 = vld [vmem:[#allocation2 + $0x314] ss:$0 sm:$0xff]
    %v3836 = vsel %vm156, %v3832, 0.0
    %3837 = vadd.xlane.f32.xlu0 %v3836
    %v3838 = vpop.xlane.xlu0 %3837
    %v3839 = vsel %vm156, %v3833, 0.0
    %3840 = vadd.xlane.f32.xlu0 %v3839
    %v3841 = vpop.xlane.xlu0 %3840
    %v3842 = vmul.f32 %v3838, %v163
    %v3843 = vmul.f32 %v3841, %v163
    %v3844 = vsub.f32 %v3832, %v3842
    %v3845 = vsub.f32 %v3833, %v3843
    %v3846 = vmul.f32 %v3844, %v3844
    %v3847 = vmul.f32 %v3845, %v3845
    %v3848 = vsel %vm156, %v3846, 0.0
    %3849 = vadd.xlane.f32.xlu0 %v3848
    %v3850 = vpop.xlane.xlu0 %3849
    %v3851 = vsel %vm156, %v3847, 0.0
    %3852 = vadd.xlane.f32.xlu0 %v3851
    %v3853 = vpop.xlane.xlu0 %3852
    %v3854 = vmul.f32 %v3850, %v163
    %v3855 = vmul.f32 %v3853, %v163
    %v3856 = vadd.f32 %v3854, 1e-05
    %v3857 = vadd.f32 %v3855, 1e-05
    %v3858 = vrsqrt.pop %v3856
    %v3859 = vrsqrt.pop %v3857
    %v3860 = vmul.f32 %v3844, %v3858
    %v3861 = vmul.f32 %v3845, %v3859
    %v3862 = vmul.f32 %v3860, %v3834
    %v3863 = vmul.f32 %v3861, %v3834
    %v3864 = vadd.f32 %v3862, %v3835
    %v3865 = vadd.f32 %v3863, %v3835
    %v3866 = vld [vmem:[%s1 + $0x78] sm:$0xff]
    %v3867 = vld [vmem:[%s1 + $0x80] sm:$0xff]
    %v3868 = vmul.f32 %v3864, %v3866
    %v3869 = vmul.f32 %v3865, %v3867
    %v3870 = vld [vmem:[%s1 + $0x88] sm:$0xff]
    %v3871 = vld [vmem:[%s1 + $0x90] sm:$0xff]
    %v3872 = vadd.f32 %v3868, %v3870
    %v3873 = vadd.f32 %v3869, %v3871
    %v3874 = vrsqrt.pop %v50
    %v3875 = vmul.f32 %v50, %v3874
    %vm3876 = vcmp.eq.f32.partialorder %v50, inf
    %v3877 = vsel %vm3876, %v50, %v3875
    %vm3878 = vcmp.eq.f32.partialorder %v50, 0.0
    %v3879 = vand.u32 %v50, 2147483648
    %v3880 = vsel %vm3878, %v3879, %v3877
    %v3881 = vrsqrt.pop %v51
    %v3882 = vmul.f32 %v51, %v3881
    %vm3883 = vcmp.eq.f32.partialorder %v51, inf
    %v3884 = vsel %vm3883, %v51, %v3882
    %vm3885 = vcmp.eq.f32.partialorder %v51, 0.0
    %v3886 = vand.u32 %v51, 2147483648
    %v3887 = vsel %vm3885, %v3886, %v3884
    %v3888 = vmul.f32 %v3872, %v3880
    %v3889 = vmul.f32 %v3873, %v3887
    %v3890 = vadd.f32 %v3888, %v38
    %v3891 = vadd.f32 %v3889, %v39
    %v3892 = vld [vmem:[%s1 + $0x38] sm:$0xff]
    %v3893 = vld [vmem:[%s1 + $0x40] sm:$0xff]
    %v3894 = vld [vmem:[%s1 + $0x48] sm:$0xff]
    %v3895 = vld [vmem:[%s1 + $0x50] sm:$0xff]
    %v3896 = vld [vmem:[%s1 + $0x9b] sm:$0x1]
    %v3897 = vlaneseq
    %v3898 = vshrl.u32 %v3897, 7
    %v3899 = vsub.s32 0, %v3898
    %v3900 = vrot.slane %v3896, %v3899
    %v3902 = vsel %vm156, %v3890, 0
    %v3905 = vsel %vm156, %v3891, 0
    %3907 = vmatprep.subr.mxu0 0.0
    %3908 = vmatpush1.msra.mxu0 0.0
    %3909 = vmatprep.subr.mxu0 0.0
    %3910 = vmatpush1.msra.mxu0 0.0
    %3911 = vmatprep.subr.mxu0 0.0
    %3912 = vmatpush1.msra.mxu0 0.0
    %3913 = vmatprep.subr.mxu0 0.0
    %3914 = vmatpush1.msra.mxu0 0.0
    %3915 = vmatprep.subr.mxu0 0.0
    %3916 = vmatpush1.msra.mxu0 0.0
    %3917 = vmatprep.subr.mxu0 0.0
    %3918 = vmatpush1.msra.mxu0 0.0
    %3919 = vmatprep.subr.mxu0 0.0
    %3920 = vmatpush1.msra.mxu0 0.0
    %3921 = vmatprep.subr.mxu0 0.0
    %3922 = vmatpush1.msra.mxu0 0.0
    %3923 = vmatprep.subr.mxu0 0.0
    %3924 = vmatpush1.msra.mxu0 0.0
    %3925 = vmatprep.subr.mxu0 0.0
    %3926 = vmatpush1.msra.mxu0 0.0
    %3927 = vmatprep.subr.mxu0 0.0
    %3928 = vmatpush1.msra.mxu0 0.0
    %3929 = vmatprep.subr.mxu0 0.0
    %3930 = vmatpush1.msra.mxu0 0.0
    %3931 = vmatprep.subr.mxu0 0.0
    %3932 = vmatpush1.msra.mxu0 %v3895
    %3933 = vmatprep.subr.mxu0 0.0
    %3934 = vmatpush1.msra.mxu0 %v3894
    %3935 = vmatprep.subr.mxu0 0.0
    %3936 = vmatpush1.msra.mxu0 %v3893
    %3937 = vmatprep.subr.mxu0 0.0
    %3938 = vmatpush1.msra.mxu0 %v3892
    %3939 = vmatprep.subr.mxu0 0.0
    %3940 = vmatpush2.msra.mxu0 0.0
    %3941 = vmatprep.subr.mxu0 0.0
    %3942 = vmatpush2.msra.mxu0 0.0
    %3943 = vmatprep.subr.mxu0 0.0
    %3944 = vmatpush2.msra.mxu0 0.0
    %3945 = vmatprep.subr.mxu0 0.0
    %3946 = vmatpush2.msra.mxu0 0.0
    %3947 = vmatprep.subr.mxu0 0.0
    %3948 = vmatpush2.msra.mxu0 0.0
    %3949 = vmatprep.subr.mxu0 0.0
    %3950 = vmatpush2.msra.mxu0 0.0
    %3951 = vmatprep.subr.mxu0 0.0
    %3952 = vmatpush2.msra.mxu0 0.0
    %3953 = vmatprep.subr.mxu0 0.0
    %3954 = vmatpush2.msra.mxu0 0.0
    %3955 = vmatprep.subr.mxu0 0.0
    %3956 = vmatpush2.msra.mxu0 0.0
    %3957 = vmatprep.subr.mxu0 0.0
    %3958 = vmatpush2.msra.mxu0 0.0
    %3959 = vmatprep.subr.mxu0 0.0
    %3960 = vmatpush2.msra.mxu0 0.0
    %3961 = vmatprep.subr.mxu0 0.0
    %3962 = vmatpush2.msra.mxu0 0.0
    %3963 = vmatprep.subr.mxu0 0.0
    %3964 = vmatpush2.msra.mxu0 0.0
    %3965 = vmatprep.subr.mxu0 0.0
    %3966 = vmatpush2.msra.mxu0 0.0
    %3967 = vmatprep.subr.mxu0 0.0
    %3968 = vmatpush2.msra.mxu0 0.0
    %3969 = vmatprep.subr.mxu0 0.0
    %3970 = vmatpush2.msra.mxu0 0.0
    %3971 = vmatprep.mubr.f32.mxu0 0.0
    %3972 = vmatmul.mubr.f32.gmra.mxu0 %v3902
    %v3973 = vpop.f32.mrf.mxu0
    %v3974 = vadd.f32 %v3900, %v3973
    %v3975 = vpop.f32.mrf.mxu0
    %3976 = vmatprep.mubr.f32.mxu0 0.0
    %3977 = vmatmul.mubr.f32.gmra.mxu0 %v3905
    %v3978 = vpop.f32.mrf.mxu0
    %v3979 = vadd.f32 %v3900, %v3978
    %v3980 = vpop.f32.mrf.mxu0
    %3981 = vdwg.mxu0
    %3982 = vst.msk [vmem:[%s3] sm:$0xff] %vm339, %v3974
    %3983 = vst.msk [vmem:[%s3 + $0x8] sm:$0xff] %vm339, %v3979
    // Predicated region
    $region18: #{model_forward.1} parent=1 // pred_check
      _
    $region19: #{model_forward.1} parent=1 // pred_check_branch
      %3985 = sbr.rel (0) target = $region21
    $region20: #{model_forward.1} parent=1 // pred_region
      _
    $region21: #{model_forward.1} parent=1 // pred_fallthru
      _
    // Predicated region
    $region22: #{model_forward.1} parent=1 // pred_check
      _
    $region23: #{model_forward.1} parent=1 // pred_check_branch
      %3987 = sbr.rel (0) target = $region25
    $region24: #{model_forward.1} parent=1 // pred_region
      _
    $region25: #{model_forward.1} parent=1 // pred_fallthru
      _
    %3988 = vsyncpa [#allocation3], 1

</llo_original>
